<compile_context>
chip_gen: v5e
topology: v5e:2x2
jax: 0.10.0
libtpu: 0.0.40
codegen_flags: <defaults>
</compile_context>

<pallas_src>
import functools

import jax
import jax.numpy as jnp
from jax.experimental import pallas as pl
from jax.experimental.pallas import tpu as pltpu


def _round_up(x, m):
    return ((x + m - 1) // m) * m


# Safe on every generation: below v7x's 64 MiB physical VMEM, well above the
# 16 / 32 MiB default scoped limits on v5e / v6e+.
_VMEM_LIMIT_BYTES = 56 * 1024 * 1024


# ---------------------------------------------------------------------------
# Streamed propagation kernels:  out = A_hat @ V + b  over grid (row i, red k).
# A_hat tiles stream from HBM; V is fully VMEM-resident and sliced in-kernel.
# ---------------------------------------------------------------------------
def _propagate_relu_bf16_kernel(a_ref, v_ref, b_ref, out_ref, acc_ref, *, tk):
    """f32 acc scratch; finalize: out = relu(acc + b) emitted in bf16."""
    k = pl.program_id(1)

    @pl.when(k == 0)
    def _():
        acc_ref[...] = jnp.zeros_like(acc_ref)

    start = pl.multiple_of(k * tk, tk)
    acc_ref[...] += jnp.dot(a_ref[...], v_ref[pl.ds(start, tk), :],
                            preferred_element_type=jnp.float32)

    @pl.when(k == pl.num_programs(1) - 1)
    def _():
        out_ref[...] = jnp.maximum(acc_ref[...] + b_ref[...],
                                   0.0).astype(out_ref.dtype)


def _propagate_f32_kernel(a_ref, v_ref, b_ref, out_ref, *, tk):
    """No scratch: out block index is constant across k, so it stays resident;
    init it with the bias and accumulate the matmul directly into it."""
    k = pl.program_id(1)

    @pl.when(k == 0)
    def _():
        out_ref[...] = jnp.zeros_like(out_ref) + b_ref[...]

    start = pl.multiple_of(k * tk, tk)
    out_ref[...] += jnp.dot(a_ref[...], v_ref[pl.ds(start, tk), :],
                            preferred_element_type=jnp.float32)


def _propagate(a_bf16, v_bf16, bias_f32, *, apply_relu, tm, tk):
    """out = A_hat @ V + b (ReLU optional). Inputs already padded/lane-dense."""
    n_pad = a_bf16.shape[0]
    c_pad = v_bf16.shape[1]
    grid = (n_pad // tm, n_pad // tk)

    out_dtype = jnp.bfloat16 if apply_relu else jnp.float32
    out_bytes = 2 if apply_relu else 4
    flops = 2 * n_pad * n_pad * c_pad
    bytes_accessed = (a_bf16.size * 2          # A_hat streamed exactly once
                      + v_bf16.size * 2        # V loaded once (VMEM-resident)
                      + n_pad * c_pad * out_bytes
                      + bias_f32.size * 4)

    if apply_relu:
        kernel = functools.partial(_propagate_relu_bf16_kernel, tk=tk)
        scratch = [pltpu.VMEM((tm, c_pad), jnp.float32)]
    else:
        kernel = functools.partial(_propagate_f32_kernel, tk=tk)
        scratch = []

    return pl.pallas_call(
        kernel,
        out_shape=jax.ShapeDtypeStruct((n_pad, c_pad), out_dtype),
        grid_spec=pltpu.PrefetchScalarGridSpec(
            num_scalar_prefetch=0,
            grid=grid,
            in_specs=[
                # A_hat: large tiles streamed from HBM (2 MiB bf16 per tile).
                pl.BlockSpec((tm, tk), lambda i, k: (i, k)),
                # V: whole matrix, constant index map -> VMEM-resident.
                pl.BlockSpec((n_pad, c_pad), lambda i, k: (0, 0)),
                # bias
                pl.BlockSpec((1, c_pad), lambda i, k: (0, 0)),
            ],
            out_specs=pl.BlockSpec((tm, c_pad), lambda i, k: (i, 0)),
            scratch_shapes=scratch,
        ),
        compiler_params=pltpu.CompilerParams(
            dimension_semantics=("parallel", "arbitrary"),
            vmem_limit_bytes=_VMEM_LIMIT_BYTES),
        cost_estimate=pl.CostEstimate(flops=int(flops), transcendentals=0,
                                      bytes_accessed=int(bytes_accessed)),
    )(a_bf16, v_bf16, bias_f32)


# ---------------------------------------------------------------------------
# Fused kernel: A_hat VMEM-resident, both GCN layers in one pallas_call.
# grid = (layer in {0,1}, row tile i); both axes "arbitrary" (layer-1 row tiles
# depend on all layer-0 row tiles through the h1w2 scratch).
# ---------------------------------------------------------------------------
def _fused_gcn_kernel(a_ref, xw1_ref, b1_ref, w2_ref, b2_ref, out_ref,
                      h1w2_ref, *, tm):
    layer = pl.program_id(0)
    i = pl.program_id(1)
    row0 = pl.multiple_of(i * tm, tm)
    a_rows = a_ref[pl.ds(row0, tm), :]          # VMEM->VMEM slice of resident A

    @pl.when(layer == 0)
    def _():
        # H1 row tile = relu(A[i] @ XW1 + b1); immediately fold in the tiny W2
        # matmul so only H1@W2 (bf16) needs to persist across the layer switch.
        h1 = jnp.maximum(
            jnp.dot(a_rows, xw1_ref[...], preferred_element_type=jnp.float32)
            + b1_ref[...], 0.0).astype(jnp.bfloat16)
        h1w2_ref[pl.ds(row0, tm), :] = jnp.dot(
            h1, w2_ref[...],
            preferred_element_type=jnp.float32).astype(h1w2_ref.dtype)

    @pl.when(layer == 1)
    def _():
        out_ref[...] = (
            jnp.dot(a_rows, h1w2_ref[...], preferred_element_type=jnp.float32)
            + b2_ref[...]).astype(out_ref.dtype)


def _fused_forward(a_bf16, xw1_bf16, b1_f32, w2_bf16, b2_f32, *, tm):
    n_pad = a_bf16.shape[0]
    h_pad = xw1_bf16.shape[1]
    l_pad = w2_bf16.shape[1]
    grid = (2, n_pad // tm)

    flops = 2 * (n_pad * n_pad * h_pad + n_pad * h_pad * l_pad
                 + n_pad * n_pad * l_pad)
    bytes_accessed = (a_bf16.size * 2           # A_hat read from HBM once total
                      + xw1_bf16.size * 2
                      + n_pad * l_pad * 4
                      + w2_bf16.size * 2
                      + (b1_f32.size + b2_f32.size) * 4)

    kernel = functools.partial(_fused_gcn_kernel, tm=tm)
    return pl.pallas_call(
        kernel,
        out_shape=jax.ShapeDtypeStruct((n_pad, l_pad), jnp.float32),
        grid_spec=pltpu.PrefetchScalarGridSpec(
            num_scalar_prefetch=0,
            grid=grid,
            in_specs=[
                # Constant index maps -> every operand DMA'd exactly once.
                pl.BlockSpec((n_pad, n_pad), lambda l, i: (0, 0)),   # A_hat
                pl.BlockSpec((n_pad, h_pad), lambda l, i: (0, 0)),   # X @ W1
                pl.BlockSpec((1, h_pad), lambda l, i: (0, 0)),       # b1
                pl.BlockSpec((h_pad, l_pad), lambda l, i: (0, 0)),   # W2
                pl.BlockSpec((1, l_pad), lambda l, i: (0, 0)),       # b2
            ],
            out_specs=pl.BlockSpec((tm, l_pad), lambda l, i: (i, 0)),
            scratch_shapes=[pltpu.VMEM((n_pad, l_pad), jnp.bfloat16)],  # H1@W2
        ),
        compiler_params=pltpu.CompilerParams(
            dimension_semantics=("arbitrary", "arbitrary"),
            vmem_limit_bytes=_VMEM_LIMIT_BYTES),
        cost_estimate=pl.CostEstimate(flops=int(flops), transcendentals=0,
                                      bytes_accessed=int(bytes_accessed)),
    )(a_bf16, xw1_bf16, b1_f32, w2_bf16, b2_f32)


# ---------------------------------------------------------------------------
# Full ProteinEncoder forward (eval mode).
# ---------------------------------------------------------------------------
def protein_encoder_forward(a_hat, x, w1, b1, w2, b2, *,
                            small_graph_threshold=512,
                            fused_max_nodes=3072):
    n = x.shape[0]
    hidden = w1.shape[1]
    latent = w2.shape[1]

    # Tiny graphs: Pallas dispatch + grid-step overhead dominates; let XLA fuse
    # the dense matmuls directly (full f32).
    if n <= small_graph_threshold:
        h1 = jnp.maximum(a_hat @ (x @ w1) + b1.reshape(1, -1), 0.0)
        # Dropout(p=0.1) is identity in eval mode.
        return a_hat @ (h1 @ w2) + b2.reshape(1, -1)

    h_pad = _round_up(hidden, 128)
    l_pad = _round_up(latent, 128)

    use_fused = n <= fused_max_nodes
    if use_fused:
        tm = 512                                  # A_hat fits VMEM -> resident
        n_pad = _round_up(n, tm)
    else:
        tm, tk = 512, 2048                        # 2 MiB bf16 A tiles; grid[0]>=2
        n_pad = _round_up(n, tk)

    # Pad directly in bf16 (avoid an f32 (n_pad, n_pad) detour).  Padded A
    # rows/cols are zero: padded columns of A_hat kill the relu(b1) garbage in
    # padded rows of H1/H1W2, and padded output rows are sliced off below.
    a_bf = jnp.pad(a_hat.astype(jnp.bfloat16),
                   ((0, n_pad - n), (0, n_pad - n)))
    w1_p = jnp.pad(w1, ((0, 0), (0, h_pad - hidden)))
    b1_p = jnp.pad(b1.reshape(1, -1), ((0, 0), (0, h_pad - hidden)))
    w2_p = jnp.pad(w2, ((0, h_pad - hidden), (0, l_pad - latent)))
    b2_p = jnp.pad(b2.reshape(1, -1), ((0, 0), (0, l_pad - latent)))

    # Tiny K=4 feature matmul stays in plain JAX (degenerate for the MXU grid).
    xw1_bf = jnp.pad((x @ w1_p).astype(jnp.bfloat16), ((0, n_pad - n), (0, 0)))

    if use_fused:
        out = _fused_forward(a_bf, xw1_bf, b1_p, w2_p.astype(jnp.bfloat16),
                             b2_p, tm=tm)
    else:
        # Layer 1: streamed A_hat pass, H1 emitted directly in bf16.
        h1_bf = _propagate(a_bf, xw1_bf, b1_p, apply_relu=True, tm=tm, tk=tk)
        # Dropout(p=0.1): identity in eval mode.
        # TODO(synk): training-mode dropout needs pltpu.prng_seed + stateful_bernoulli.
        h1w2_bf = jnp.dot(h1_bf, w2_p.astype(jnp.bfloat16),
                          preferred_element_type=jnp.float32
                          ).astype(jnp.bfloat16)
        # Layer 2: second streamed A_hat pass, f32 output accumulated in-place.
        out = _propagate(a_bf, h1w2_bf, b2_p, apply_relu=False, tm=tm, tk=tk)

    return out[:n, :latent]


# ---------------------------------------------------------------------------
# Glue: edge_index -> dense symmetric-normalized adjacency with self-loops.
# ---------------------------------------------------------------------------
def build_normalized_adjacency(edge_index, num_nodes):
    src = edge_index[0]
    dst = edge_index[1]
    adj = jnp.zeros((num_nodes, num_nodes), jnp.float32)
    adj = adj.at[dst, src].set(1.0)                       # message src -> dst
    adj = jnp.maximum(adj, jnp.eye(num_nodes, dtype=jnp.float32))
    deg = adj.sum(axis=1)
    d_inv_sqrt = jnp.where(deg > 0, 1.0 / jnp.sqrt(deg), 0.0)
    return d_inv_sqrt[:, None] * adj * d_inv_sqrt[None, :]


def reference_forward_f32(a_hat, x, w1, b1, w2, b2):
    h1 = jnp.maximum(a_hat @ (x @ w1) + b1, 0.0)
    return a_hat @ (h1 @ w2) + b2


def _make_graph(key, num_nodes, num_extra_edges):
    """Ring graph + random extra edges, both directions."""
    ring_src = jnp.arange(num_nodes, dtype=jnp.int32)
    ring_dst = (ring_src + 1) % num_nodes
    extra = jax.random.randint(key, (2, num_extra_edges), 0, num_nodes, jnp.int32)
    src = jnp.concatenate([ring_src, ring_dst, extra[0], extra[1]])
    dst = jnp.concatenate([ring_dst, ring_src, extra[1], extra[0]])
    return jnp.stack([src, dst], axis=0)


if __name__ == "__main__":
    in_channels, hidden_channels, latent_dim = 4, 32, 16

    key = jax.random.PRNGKey(0)
    k_w1, k_b1, k_w2, k_b2, k_c1, k_c2, k_c3 = jax.random.split(key, 7)

    # Parameters (GCNConv weight [C_in, C_out], bias [1, C_out]).
    w1 = jax.random.normal(k_w1, (in_channels, hidden_channels), jnp.float32) * 0.1
    b1 = jax.random.normal(k_b1, (1, hidden_channels), jnp.float32) * 0.1
    w2 = jax.random.normal(k_w2, (hidden_channels, latent_dim), jnp.float32) * 0.1
    b2 = jax.random.normal(k_b2, (1, latent_dim), jnp.float32) * 0.1

    def run_case(case_key, num_nodes, num_extra, tol, **kwargs):
        kx, ke = jax.random.split(case_key, 2)
        x = jax.random.normal(kx, (num_nodes, in_channels), jnp.float32)
        edge_index = _make_graph(ke, num_nodes, num_extra)
        a_hat = build_normalized_adjacency(edge_index, num_nodes)
        out = protein_encoder_forward(a_hat, x, w1, b1, w2, b2, **kwargs)
        out = jax.block_until_ready(out)
        assert out.shape == (num_nodes, latent_dim)
        ref = reference_forward_f32(a_hat, x, w1, b1, w2, b2)
        assert jnp.allclose(out, ref, atol=tol, rtol=tol), \
            f"mismatch vs f32 reference (n={num_nodes})"

    # 1) Small example at module-scale shapes (N=8, C_in=4, H=32, Z=16):
    #    tiny-graph bail-out (pure XLA dense matmuls).
    run_case(k_c1, 8, 4, tol=1e-4)

    # 2) Fused single-kernel Pallas path (A_hat VMEM-resident, both layers in
    #    one pallas_call): exercised by disabling the tiny-graph bail-out.
    run_case(k_c2, 200, 64, tol=2e-2, small_graph_threshold=0)

    # 3) Streamed two-pass Pallas path (large-graph tiling, tm=512 / tk=2048,
    #    resident V, bf16 H1): exercised by disabling bail-out + fused path.
    run_case(k_c3, 600, 256, tol=2e-2, small_graph_threshold=0,
             fused_max_nodes=0)

    print("KERNEL_OK")
</pallas_src>

<mosaic_0001>
module attributes {stable_mosaic.version = 11 : i64} {
  func.func @_fused_gcn_kernel(%arg0: i32, %arg1: i32, %arg2: memref<512x512xbf16, #tpu.memory_space<vmem>>, %arg3: memref<512x128xbf16, #tpu.memory_space<vmem>>, %arg4: memref<1x128xf32, #tpu.memory_space<vmem>>, %arg5: memref<128x128xbf16, #tpu.memory_space<vmem>>, %arg6: memref<1x128xf32, #tpu.memory_space<vmem>>, %arg7: memref<512x128xf32, #tpu.memory_space<vmem>>, %arg8: memref<512x128xbf16, #tpu.memory_space<vmem>>) attributes {dimension_semantics = [#tpu.dimension_semantics<arbitrary>, #tpu.dimension_semantics<arbitrary>], iteration_bounds = array<i64: 2, 1>, scalar_prefetch = 0 : i64, scratch_operands = 1 : i64, tpu.core_type = #tpu.core_type<tc>, window_params = [{pipeline_mode = #tpu.pipeline_mode<synchronous>, transform_indices = @transform_0, window_bounds = array<i64: 512, 512>}, {pipeline_mode = #tpu.pipeline_mode<synchronous>, transform_indices = @transform_1, window_bounds = array<i64: 512, 128>}, {pipeline_mode = #tpu.pipeline_mode<synchronous>, transform_indices = @transform_2, window_bounds = array<i64: 1, 128>}, {pipeline_mode = #tpu.pipeline_mode<synchronous>, transform_indices = @transform_3, window_bounds = array<i64: 128, 128>}, {pipeline_mode = #tpu.pipeline_mode<synchronous>, transform_indices = @transform_4, window_bounds = array<i64: 1, 128>}, {transform_indices = @transform_5, window_bounds = array<i64: 512, 128>}]} {
    %c512_i32 = arith.constant 512 : i32
    %0 = arith.muli %arg1, %c512_i32 : i32
    %1 = tpu.assume_multiple %0, 512 : i32
    %2 = arith.index_cast %1 : i32 to index
    %c0 = arith.constant 0 : index
    %3 = vector.load %arg2[%2, %c0] : memref<512x512xbf16, #tpu.memory_space<vmem>>, vector<512x512xbf16>
    %c0_i32 = arith.constant 0 : i32
    %4 = arith.cmpi eq, %arg0, %c0_i32 : i32
    %5 = arith.extui %4 : i1 to i32
    %c0_i32_0 = arith.constant 0 : i32
    %6 = arith.cmpi ne, %5, %c0_i32_0 : i32
    scf.if %6 {
      %c0_2 = arith.constant 0 : index
      %c0_3 = arith.constant 0 : index
      %10 = vector.load %arg3[%c0_2, %c0_3] : memref<512x128xbf16, #tpu.memory_space<vmem>>, vector<512x128xbf16>
      %cst = arith.constant dense<0.000000e+00> : vector<512x128xf32>
      %11 = tpu.matmul %3, %10, %cst {dimension_numbers = #tpu.dot_dimension_numbers<[1], [0], [0], [1], [0, 0, 1, 1], [], []>} : vector<512x512xbf16>, vector<512x128xbf16>, vector<512x128xf32> -> vector<512x128xf32>
      %c0_4 = arith.constant 0 : index
      %c0_5 = arith.constant 0 : index
      %12 = vector.load %arg4[%c0_4, %c0_5] : memref<1x128xf32, #tpu.memory_space<vmem>>, vector<1x128xf32>
      %13 = vector.broadcast %12 : vector<1x128xf32> to vector<512x128xf32>
      %14 = arith.addf %11, %13 : vector<512x128xf32>
      %cst_6 = arith.constant 0.000000e+00 : f32
      %15 = vector.broadcast %cst_6 : f32 to vector<512x128xf32>
      %16 = arith.maximumf %14, %15 : vector<512x128xf32>
      %17 = arith.truncf %16 : vector<512x128xf32> to vector<512x128xbf16>
      %c0_7 = arith.constant 0 : index
      %c0_8 = arith.constant 0 : index
      %18 = vector.load %arg5[%c0_7, %c0_8] : memref<128x128xbf16, #tpu.memory_space<vmem>>, vector<128x128xbf16>
      %cst_9 = arith.constant dense<0.000000e+00> : vector<512x128xf32>
      %19 = tpu.matmul %17, %18, %cst_9 {dimension_numbers = #tpu.dot_dimension_numbers<[1], [0], [0], [1], [0, 0, 1, 1], [], []>} : vector<512x128xbf16>, vector<128x128xbf16>, vector<512x128xf32> -> vector<512x128xf32>
      %20 = arith.truncf %19 : vector<512x128xf32> to vector<512x128xbf16>
      %21 = arith.index_cast %1 : i32 to index
      %c0_10 = arith.constant 0 : index
      %22 = vector.load %arg8[%21, %c0_10] : memref<512x128xbf16, #tpu.memory_space<vmem>>, vector<512x128xbf16>
      tpu.vector_store %arg8[%21, %c0_10], %20 {strides = array<i32>} : memref<512x128xbf16, #tpu.memory_space<vmem>>, vector<512x128xbf16>,
    } else {
    }
    %c1_i32 = arith.constant 1 : i32
    %7 = arith.cmpi eq, %arg0, %c1_i32 : i32
    %8 = arith.extui %7 : i1 to i32
    %c0_i32_1 = arith.constant 0 : i32
    %9 = arith.cmpi ne, %8, %c0_i32_1 : i32
    scf.if %9 {
      %c0_2 = arith.constant 0 : index
      %c0_3 = arith.constant 0 : index
      %10 = vector.load %arg8[%c0_2, %c0_3] : memref<512x128xbf16, #tpu.memory_space<vmem>>, vector<512x128xbf16>
      %cst = arith.constant dense<0.000000e+00> : vector<512x128xf32>
      %11 = tpu.matmul %3, %10, %cst {dimension_numbers = #tpu.dot_dimension_numbers<[1], [0], [0], [1], [0, 0, 1, 1], [], []>} : vector<512x512xbf16>, vector<512x128xbf16>, vector<512x128xf32> -> vector<512x128xf32>
      %c0_4 = arith.constant 0 : index
      %c0_5 = arith.constant 0 : index
      %12 = vector.load %arg6[%c0_4, %c0_5] : memref<1x128xf32, #tpu.memory_space<vmem>>, vector<1x128xf32>
      %13 = vector.broadcast %12 : vector<1x128xf32> to vector<512x128xf32>
      %14 = arith.addf %11, %13 : vector<512x128xf32>
      %c0_6 = arith.constant 0 : index
      %c0_7 = arith.constant 0 : index
      %15 = vector.load %arg7[%c0_6, %c0_7] : memref<512x128xf32, #tpu.memory_space<vmem>>, vector<512x128xf32>
      tpu.vector_store %arg7[%c0_6, %c0_7], %14 {strides = array<i32>} : memref<512x128xf32, #tpu.memory_space<vmem>>, vector<512x128xf32>,
    } else {
    }
    return
  }
  func.func @transform_0(%arg0: i32, %arg1: i32) -> (i32, i32) {
    %c0_i32 = arith.constant 0 : i32
    %c0_i32_0 = arith.constant 0 : i32
    %c0_i32_1 = arith.constant 0 : i32
    return %c0_i32, %c0_i32_0 : i32, i32
  }
  func.func @transform_1(%arg0: i32, %arg1: i32) -> (i32, i32) {
    %c0_i32 = arith.constant 0 : i32
    %c0_i32_0 = arith.constant 0 : i32
    %c0_i32_1 = arith.constant 0 : i32
    return %c0_i32, %c0_i32_0 : i32, i32
  }
  func.func @transform_2(%arg0: i32, %arg1: i32) -> (i32, i32) {
    %c0_i32 = arith.constant 0 : i32
    %c0_i32_0 = arith.constant 0 : i32
    %c0_i32_1 = arith.constant 0 : i32
    return %c0_i32, %c0_i32_0 : i32, i32
  }
  func.func @transform_3(%arg0: i32, %arg1: i32) -> (i32, i32) {
    %c0_i32 = arith.constant 0 : i32
    %c0_i32_0 = arith.constant 0 : i32
    %c0_i32_1 = arith.constant 0 : i32
    return %c0_i32, %c0_i32_0 : i32, i32
  }
  func.func @transform_4(%arg0: i32, %arg1: i32) -> (i32, i32) {
    %c0_i32 = arith.constant 0 : i32
    %c0_i32_0 = arith.constant 0 : i32
    %c0_i32_1 = arith.constant 0 : i32
    return %c0_i32, %c0_i32_0 : i32, i32
  }
  func.func @transform_5(%arg0: i32, %arg1: i32) -> (i32, i32) {
    %c0_i32 = arith.constant 0 : i32
    %c0_i32_0 = arith.constant 0 : i32
    return %arg1, %c0_i32 : i32, i32
  }
}

</mosaic_0001>

<llo_original>
// kernel: tpu_custom_call.1
$region0: #{tpu_custom_call.1}
  #allocation0 [shape = 'u32[]', space=smem, size = 0x4, offset = 0x4, fixed_abs, tag = 'smem constant byte address 0x4 - core index']
  #allocation1 [shape = 'u32[72,128]{1,0:T(1,128)}', space=vmem, size = 0x9000, scoped, tag = 'internal scratch']
  #allocation2 [shape = 'bf16[512,128]{1,0:T(8,128)(2,1)}', space=vmem, size = 0x20000, scoped, tag = 'scratch operand']
  %s0 = inlined_call_operand.hbm [shape: bf16[512,512], index: 0, kind: input, shape index: {}]
  %s1 = inlined_call_operand.hbm [shape: bf16[512,128], index: 1, kind: input, shape index: {}]
  %s2 = inlined_call_operand.vmem [shape: f32[1,128], index: 2, kind: input, shape index: {}]
  %s3 = inlined_call_operand.hbm [shape: bf16[128,128], index: 3, kind: input, shape index: {}]
  %s4 = inlined_call_operand.vmem [shape: f32[1,128], index: 4, kind: input, shape index: {}]
  %s5 = inlined_call_operand.hbm [shape: f32[512,128], index: 5, kind: output, shape index: {}]
  %s6 = sld [smem:[#allocation0]]
  $region73: #{tpu_custom_call.1} parent=0
    _
  %s8 = ssub.s32 1, %s6
  %s9 = scalar_select 0, %s8, %s6
  $region1: #{tpu_custom_call.1} parent=0
    #allocation3 [shape = 'u8[524288]{0}', space=vmem, size = 0x80000, scoped, tag = 'input window, operand 0, single buffered']
    #allocation4 [shape = 's32[2]{0}', space=sflag, size = 0x8, scoped, tag = 'scoped memory for tpu_custom_call.1']
    #allocation5 [shape = 's32[2]{0}', space=sflag, size = 0x8, scoped, tag = 'scoped memory for tpu_custom_call.1']
    #allocation6 [shape = 'u8[131072]{0}', space=vmem, size = 0x20000, scoped, tag = 'input window, operand 1, single buffered']
    #allocation7 [shape = 's32[1]{0}', space=sflag, size = 0x4, scoped, tag = 'scoped memory for tpu_custom_call.1']
    #allocation8 [shape = 'u8[32768]{0}', space=vmem, size = 0x8000, scoped, tag = 'input window, operand 3, single buffered']
    #allocation9 [shape = 'u8[262144]{0}', space=vmem, size = 0x40000, scoped, tag = 'output window, operand 0, single buffered']
    %10 = vsyncpa [#allocation4], 0
    %11 = vsyncpa [#allocation7], 0
    %12 = vsyncpa [#allocation5], 0
    loop: start=0, step=1, limit=4
    $region2: #{tpu_custom_call.1} parent=1 // loop_pre_header
      _
    $region3: #{tpu_custom_call.1} parent=1 // loop_header
      %s14 = sphi 0, %s18
      %p15 = scmp.ge.s32.totalorder %s14, 4
      %s21 = sphi 0, %s33
      %s22 = sphi 0, %s29
      %s23 = sphi 0, %s21
      %s24 = sphi 0, %s22
      %s25 = sphi 0, %s23
      %s26 = sphi 0, %s24
      %s34 = sphi 0, %s34
      %s36 = sphi 0, %s34
      %s37 = sphi 0, %s36
      %s51 = sphi 0, %s37
      %s55 = sphi 0, %s55
      %s57 = sphi 0, %s55
      %s58 = sphi 0, %s57
      %s72 = sphi 0, %s58
      %s76 = sphi 0, %s76
      %s78 = sphi 0, %s76
      %s79 = sphi 0, %s78
      %s93 = sphi 0, %s79
      %s97 = sphi 0, %s97
      %s99 = sphi 0, %s97
      %s100 = sphi 0, %s99
      %s114 = sphi 0, %s100
      %s118 = sphi 0, %s118
      %s120 = sphi 0, %s118
      %s121 = sphi 0, %s120
      %s135 = sphi 0, %s121
      %s141 = sphi 0, %s143
      %s144 = sphi 0, %s141
      %s145 = sphi 0, %s144
      %s161 = sphi 0, %s145
    $region4: #{tpu_custom_call.1} parent=1 // loop_header_branch
      %17 = sbr.rel (%p15) target = $region8
    $region5: #{tpu_custom_call.1} parent=1 // loop_body
      %s19 = ssub.s32 %s14, 1
      %s20 = ssub.s32 %s14, 2
      %s27 = sadd.s32 1, %s22
      %p28 = scmp.ge.s32.totalorder %s27, 1
      %s29 = scalar_select %p28, 0, %s27
      %s30 = sadd.s32 1, %s21
      %s31 = scalar_select %p28, %s30, %s21
      %p32 = scmp.ge.s32.totalorder %s31, 2
      %s33 = scalar_select %p32, 0, %s31
      %s35 = sadd.s32 %s34, 1
      %p38 = scmp.eq.s32.totalorder %s14, 1
      %p39 = scmp.ne.s32.totalorder %s34, %s36
      %p40 = scmp.eq.s32.totalorder %s14, 0
      %p41 = por %p39, %p40
      %p42 = scmp.ne.s32.totalorder %s34, %s36
      %p43 = scmp.eq.s32.totalorder %s19, 1
      %p44 = por %p42, %p43
      %p45 = scmp.ne.s32.totalorder %s36, %s37
      %p46 = scmp.eq.s32.totalorder %s19, 0
      %p47 = por %p45, %p46
      %p48 = scmp.ne.s32.totalorder %s36, %s37
      %p49 = scmp.eq.s32.totalorder %s20, 1
      %p50 = por %p48, %p49
      %p52 = scmp.ne.s32.totalorder %s37, %s51
      %p53 = scmp.eq.s32.totalorder %s20, 0
      %p54 = por %p52, %p53
      %s56 = sadd.s32 %s55, 1
      %p59 = scmp.eq.s32.totalorder %s14, 1
      %p60 = scmp.ne.s32.totalorder %s55, %s57
      %p61 = scmp.eq.s32.totalorder %s14, 0
      %p62 = por %p60, %p61
      %p63 = scmp.ne.s32.totalorder %s55, %s57
      %p64 = scmp.eq.s32.totalorder %s19, 1
      %p65 = por %p63, %p64
      %p66 = scmp.ne.s32.totalorder %s57, %s58
      %p67 = scmp.eq.s32.totalorder %s19, 0
      %p68 = por %p66, %p67
      %p69 = scmp.ne.s32.totalorder %s57, %s58
      %p70 = scmp.eq.s32.totalorder %s20, 1
      %p71 = por %p69, %p70
      %p73 = scmp.ne.s32.totalorder %s58, %s72
      %p74 = scmp.eq.s32.totalorder %s20, 0
      %p75 = por %p73, %p74
      %s77 = sadd.s32 %s76, 1
      %p80 = scmp.eq.s32.totalorder %s14, 1
      %p81 = scmp.ne.s32.totalorder %s76, %s78
      %p82 = scmp.eq.s32.totalorder %s14, 0
      %p83 = por %p81, %p82
      %p84 = scmp.ne.s32.totalorder %s76, %s78
      %p85 = scmp.eq.s32.totalorder %s19, 1
      %p86 = por %p84, %p85
      %p87 = scmp.ne.s32.totalorder %s78, %s79
      %p88 = scmp.eq.s32.totalorder %s19, 0
      %p89 = por %p87, %p88
      %p90 = scmp.ne.s32.totalorder %s78, %s79
      %p91 = scmp.eq.s32.totalorder %s20, 1
      %p92 = por %p90, %p91
      %p94 = scmp.ne.s32.totalorder %s79, %s93
      %p95 = scmp.eq.s32.totalorder %s20, 0
      %p96 = por %p94, %p95
      %s98 = sadd.s32 %s97, 1
      %p101 = scmp.eq.s32.totalorder %s14, 1
      %p102 = scmp.ne.s32.totalorder %s97, %s99
      %p103 = scmp.eq.s32.totalorder %s14, 0
      %p104 = por %p102, %p103
      %p105 = scmp.ne.s32.totalorder %s97, %s99
      %p106 = scmp.eq.s32.totalorder %s19, 1
      %p107 = por %p105, %p106
      %p108 = scmp.ne.s32.totalorder %s99, %s100
      %p109 = scmp.eq.s32.totalorder %s19, 0
      %p110 = por %p108, %p109
      %p111 = scmp.ne.s32.totalorder %s99, %s100
      %p112 = scmp.eq.s32.totalorder %s20, 1
      %p113 = por %p111, %p112
      %p115 = scmp.ne.s32.totalorder %s100, %s114
      %p116 = scmp.eq.s32.totalorder %s20, 0
      %p117 = por %p115, %p116
      %s119 = sadd.s32 %s118, 1
      %p122 = scmp.eq.s32.totalorder %s14, 1
      %p123 = scmp.ne.s32.totalorder %s118, %s120
      %p124 = scmp.eq.s32.totalorder %s14, 0
      %p125 = por %p123, %p124
      %p126 = scmp.ne.s32.totalorder %s118, %s120
      %p127 = scmp.eq.s32.totalorder %s19, 1
      %p128 = por %p126, %p127
      %p129 = scmp.ne.s32.totalorder %s120, %s121
      %p130 = scmp.eq.s32.totalorder %s19, 0
      %p131 = por %p129, %p130
      %p132 = scmp.ne.s32.totalorder %s120, %s121
      %p133 = scmp.eq.s32.totalorder %s20, 1
      %p134 = por %p132, %p133
      %p136 = scmp.ne.s32.totalorder %s121, %s135
      %p137 = scmp.eq.s32.totalorder %s20, 0
      %p138 = por %p136, %p137
      %s139 = ssub.s32 %s22, %s29
      %p140 = scmp.eq.s32.totalorder %s139, 0
      %s142 = sadd.s32 %s141, 1
      %s143 = scalar_select %p140, %s141, %s142
      %p146 = pneg %p140
      %p147 = scmp.eq.s32.totalorder %s14, 1
      %p148 = por %p146, %p147
      %p149 = scmp.ne.s32.totalorder %s141, %s144
      %p150 = scmp.eq.s32.totalorder %s14, 0
      %p151 = por %p149, %p150
      %p152 = scmp.ne.s32.totalorder %s141, %s144
      %p153 = scmp.eq.s32.totalorder %s19, 1
      %p154 = por %p152, %p153
      %p155 = scmp.ne.s32.totalorder %s144, %s145
      %p156 = scmp.eq.s32.totalorder %s19, 0
      %p157 = por %p155, %p156
      %p158 = scmp.ne.s32.totalorder %s144, %s145
      %p159 = scmp.eq.s32.totalorder %s20, 1
      %p160 = por %p158, %p159
      %p162 = scmp.ne.s32.totalorder %s145, %s161
      %p163 = scmp.eq.s32.totalorder %s20, 0
      %p164 = por %p162, %p163
      %p165 = scmp.le.s32.totalorder 1, %s14
      %p166 = scmp.lt.s32.totalorder %s14, 3
      %p167 = pnand %p165, %p166
      %p168 = pneg %p167
      // Predicated region
      $region9: #{tpu_custom_call.1} parent=5 // pred_check
        _
      $region10: #{tpu_custom_call.1} parent=5 // pred_check_branch
        %170 = sbr.rel (%p167) target = $region12
      $region11: #{tpu_custom_call.1} parent=5 // pred_region
        %s171 = ssub.s32 %s14, 1
        // Predicated region
        $region13: #{tpu_custom_call.1} parent=11 // pred_check
          %p172 = pneg %p47
        $region14: #{tpu_custom_call.1} parent=11 // pred_check_branch
          %174 = sbr.rel (%p172) target = $region16
        $region15: #{tpu_custom_call.1} parent=11 // pred_region
          %176 = vsyncadd [#allocation4], 0
          %s177 = sshll.u32 %s0, 4
          %s178 = int_to_ptr.hbm [resolvable:$true] %s177
          %s179 = sshll.u32 [#allocation3], 4
          %s180 = int_to_ptr.vmem [resolvable:$true] %s179
          %185 = dma.hbm_to_vmem [thread:$0]  %s178, 16384, %s180, [#allocation4], 256, 256, 16
        $region16: #{tpu_custom_call.1} parent=11 // pred_fallthru
          _
        // Predicated region
        $region17: #{tpu_custom_call.1} parent=11 // pred_check
          %p186 = pneg %p68
        $region18: #{tpu_custom_call.1} parent=11 // pred_check_branch
          %188 = sbr.rel (%p186) target = $region20
        $region19: #{tpu_custom_call.1} parent=11 // pred_region
          %190 = vsyncadd [#allocation7], 0
          %s191 = sshll.u32 %s1, 4
          %s192 = int_to_ptr.hbm [resolvable:$true] %s191
          %s193 = sshll.u32 [#allocation6], 4
          %s194 = int_to_ptr.vmem [resolvable:$true] %s193
          %199 = dma.hbm_to_vmem [thread:$0]  %s192, 4096, %s194, [#allocation7], 64, 64, 4
        $region20: #{tpu_custom_call.1} parent=11 // pred_fallthru
          _
        // Predicated region
        $region21: #{tpu_custom_call.1} parent=11 // pred_check
          %p200 = pneg %p89
        $region22: #{tpu_custom_call.1} parent=11 // pred_check_branch
          %202 = sbr.rel (%p200) target = $region24
        $region23: #{tpu_custom_call.1} parent=11 // pred_region
          _
        $region24: #{tpu_custom_call.1} parent=11 // pred_fallthru
          _
        // Predicated region
        $region25: #{tpu_custom_call.1} parent=11 // pred_check
          %p203 = pneg %p110
        $region26: #{tpu_custom_call.1} parent=11 // pred_check_branch
          %205 = sbr.rel (%p203) target = $region28
        $region27: #{tpu_custom_call.1} parent=11 // pred_region
          %207 = vsyncadd [#allocation7], 0
          %s208 = sshll.u32 %s3, 4
          %s209 = int_to_ptr.hbm [resolvable:$true] %s208
          %s210 = sshll.u32 [#allocation8], 4
          %s211 = int_to_ptr.vmem [resolvable:$true] %s210
          %216 = dma.hbm_to_vmem [thread:$0]  %s209, 1024, %s211, [#allocation7], 64, 64, 4
        $region28: #{tpu_custom_call.1} parent=11 // pred_fallthru
          _
        // Predicated region
        $region29: #{tpu_custom_call.1} parent=11 // pred_check
          %p217 = pneg %p131
        $region30: #{tpu_custom_call.1} parent=11 // pred_check_branch
          %219 = sbr.rel (%p217) target = $region32
        $region31: #{tpu_custom_call.1} parent=11 // pred_region
          _
        $region32: #{tpu_custom_call.1} parent=11 // pred_fallthru
          _
      $region12: #{tpu_custom_call.1} parent=5 // pred_fallthru
        _
      %p220 = scmp.lt.s32.totalorder %s14, 2
      // Predicated region
      $region33: #{tpu_custom_call.1} parent=5 // pred_check
        %p221 = pneg %p220
      $region34: #{tpu_custom_call.1} parent=5 // pred_check_branch
        %223 = sbr.rel (%p221) target = $region36
      $region35: #{tpu_custom_call.1} parent=5 // pred_region
        _
      $region36: #{tpu_custom_call.1} parent=5 // pred_fallthru
        _
      %p224 = scmp.le.s32.totalorder 1, %s14
      %p225 = scmp.lt.s32.totalorder %s14, 3
      %p226 = pnand %p224, %p225
      %p227 = pneg %p226
      // Predicated region
      $region37: #{tpu_custom_call.1} parent=5 // pred_check
        _
      $region38: #{tpu_custom_call.1} parent=5 // pred_check_branch
        %229 = sbr.rel (%p226) target = $region40
      $region39: #{tpu_custom_call.1} parent=5 // pred_region
        %s230 = ssub.s32 %s14, 1
        // Predicated region
        $region41: #{tpu_custom_call.1} parent=39 // pred_check
          %p231 = pneg %p47
        $region42: #{tpu_custom_call.1} parent=39 // pred_check_branch
          %233 = sbr.rel (%p231) target = $region44
        $region43: #{tpu_custom_call.1} parent=39 // pred_region
          %235 = dma.done [#allocation4], 16384
        $region44: #{tpu_custom_call.1} parent=39 // pred_fallthru
          _
        // Predicated region
        $region45: #{tpu_custom_call.1} parent=39 // pred_check
          %p236 = pneg %p68
        $region46: #{tpu_custom_call.1} parent=39 // pred_check_branch
          %238 = sbr.rel (%p236) target = $region48
        $region47: #{tpu_custom_call.1} parent=39 // pred_region
          %240 = dma.done [#allocation7], 4096
        $region48: #{tpu_custom_call.1} parent=39 // pred_fallthru
          _
        // Predicated region
        $region49: #{tpu_custom_call.1} parent=39 // pred_check
          %p241 = pneg %p110
        $region50: #{tpu_custom_call.1} parent=39 // pred_check_branch
          %243 = sbr.rel (%p241) target = $region52
        $region51: #{tpu_custom_call.1} parent=39 // pred_region
          %245 = dma.done [#allocation7], 1024
        $region52: #{tpu_custom_call.1} parent=39 // pred_fallthru
          _
        %p246 = pneg %p47
        %p247 = pneg %p44
        %p248 = pneg %p68
        %p249 = pneg %p65
        %p250 = pneg %p89
        %p251 = pneg %p86
        %p252 = pneg %p110
        %p253 = pneg %p107
        %p254 = pneg %p131
        %p255 = pneg %p128
        %p256 = pneg %p157
        %p257 = pneg %p154
        %s258 = smul.u32 64, %s24
        %s259 = smul.u32 %s24, 512
        %s260 = sshra.s32 %s259, 3
        %s261 = sand.u32 %s259, 7
        %s262 = smul.u32 %s260, 4
        %s263 = smul.addr %s262, 4
        %s264 = scalar_lea.vmem [#allocation3], %s263
        %v265 = vld [vmem:[%s264] sm:$0xff]
        %v266 = vld [vmem:[%s264 + $0x8] sm:$0xff]
        %v267 = vld [vmem:[%s264 + $0x10] sm:$0xff]
        %v268 = vld [vmem:[%s264 + $0x18] sm:$0xff]
        %v269 = vld [vmem:[%s264 + $0x20] sm:$0xff]
        %v270 = vld [vmem:[%s264 + $0x28] sm:$0xff]
        %v271 = vld [vmem:[%s264 + $0x30] sm:$0xff]
        %v272 = vld [vmem:[%s264 + $0x38] sm:$0xff]
        %v273 = vld [vmem:[%s264 + $0x40] sm:$0xff]
        %v274 = vld [vmem:[%s264 + $0x48] sm:$0xff]
        %v275 = vld [vmem:[%s264 + $0x50] sm:$0xff]
        %v276 = vld [vmem:[%s264 + $0x58] sm:$0xff]
        %v277 = vld [vmem:[%s264 + $0x60] sm:$0xff]
        %v278 = vld [vmem:[%s264 + $0x68] sm:$0xff]
        %v279 = vld [vmem:[%s264 + $0x70] sm:$0xff]
        %v280 = vld [vmem:[%s264 + $0x78] sm:$0xff]
        %v281 = vld [vmem:[%s264 + $0x80] sm:$0xff]
        %v282 = vld [vmem:[%s264 + $0x88] sm:$0xff]
        %v283 = vld [vmem:[%s264 + $0x90] sm:$0xff]
        %v284 = vld [vmem:[%s264 + $0x98] sm:$0xff]
        %v285 = vld [vmem:[%s264 + $0xa0] sm:$0xff]
        %v286 = vld [vmem:[%s264 + $0xa8] sm:$0xff]
        %v287 = vld [vmem:[%s264 + $0xb0] sm:$0xff]
        %v288 = vld [vmem:[%s264 + $0xb8] sm:$0xff]
        %v289 = vld [vmem:[%s264 + $0xc0] sm:$0xff]
        %v290 = vld [vmem:[%s264 + $0xc8] sm:$0xff]
        %v291 = vld [vmem:[%s264 + $0xd0] sm:$0xff]
        %v292 = vld [vmem:[%s264 + $0xd8] sm:$0xff]
        %v293 = vld [vmem:[%s264 + $0xe0] sm:$0xff]
        %v294 = vld [vmem:[%s264 + $0xe8] sm:$0xff]
        %v295 = vld [vmem:[%s264 + $0xf0] sm:$0xff]
        %v296 = vld [vmem:[%s264 + $0xf8] sm:$0xff]
        %v297 = vld [vmem:[%s264 + $0x100] sm:$0xff]
        %v298 = vld [vmem:[%s264 + $0x108] sm:$0xff]
        %v299 = vld [vmem:[%s264 + $0x110] sm:$0xff]
        %v300 = vld [vmem:[%s264 + $0x118] sm:$0xff]
        %v301 = vld [vmem:[%s264 + $0x120] sm:$0xff]
        %v302 = vld [vmem:[%s264 + $0x128] sm:$0xff]
        %v303 = vld [vmem:[%s264 + $0x130] sm:$0xff]
        %v304 = vld [vmem:[%s264 + $0x138] sm:$0xff]
        %v305 = vld [vmem:[%s264 + $0x140] sm:$0xff]
        %v306 = vld [vmem:[%s264 + $0x148] sm:$0xff]
        %v307 = vld [vmem:[%s264 + $0x150] sm:$0xff]
        %v308 = vld [vmem:[%s264 + $0x158] sm:$0xff]
        %v309 = vld [vmem:[%s264 + $0x160] sm:$0xff]
        %v310 = vld [vmem:[%s264 + $0x168] sm:$0xff]
        %v311 = vld [vmem:[%s264 + $0x170] sm:$0xff]
        %v312 = vld [vmem:[%s264 + $0x178] sm:$0xff]
        %v313 = vld [vmem:[%s264 + $0x180] sm:$0xff]
        %v314 = vld [vmem:[%s264 + $0x188] sm:$0xff]
        %v315 = vld [vmem:[%s264 + $0x190] sm:$0xff]
        %v316 = vld [vmem:[%s264 + $0x198] sm:$0xff]
        %v317 = vld [vmem:[%s264 + $0x1a0] sm:$0xff]
        %v318 = vld [vmem:[%s264 + $0x1a8] sm:$0xff]
        %v319 = vld [vmem:[%s264 + $0x1b0] sm:$0xff]
        %v320 = vld [vmem:[%s264 + $0x1b8] sm:$0xff]
        %v321 = vld [vmem:[%s264 + $0x1c0] sm:$0xff]
        %v322 = vld [vmem:[%s264 + $0x1c8] sm:$0xff]
        %v323 = vld [vmem:[%s264 + $0x1d0] sm:$0xff]
        %v324 = vld [vmem:[%s264 + $0x1d8] sm:$0xff]
        %v325 = vld [vmem:[%s264 + $0x1e0] sm:$0xff]
        %v326 = vld [vmem:[%s264 + $0x1e8] sm:$0xff]
        %v327 = vld [vmem:[%s264 + $0x1f0] sm:$0xff]
        %v328 = vld [vmem:[%s264 + $0x1f8] sm:$0xff]
        %v329 = vld [vmem:[%s264 + $0x200] sm:$0xff]
        %v330 = vld [vmem:[%s264 + $0x208] sm:$0xff]
        %v331 = vld [vmem:[%s264 + $0x210] sm:$0xff]
        %v332 = vld [vmem:[%s264 + $0x218] sm:$0xff]
        %v333 = vld [vmem:[%s264 + $0x220] sm:$0xff]
        %v334 = vld [vmem:[%s264 + $0x228] sm:$0xff]
        %v335 = vld [vmem:[%s264 + $0x230] sm:$0xff]
        %v336 = vld [vmem:[%s264 + $0x238] sm:$0xff]
        %v337 = vld [vmem:[%s264 + $0x240] sm:$0xff]
        %v338 = vld [vmem:[%s264 + $0x248] sm:$0xff]
        %v339 = vld [vmem:[%s264 + $0x250] sm:$0xff]
        %v340 = vld [vmem:[%s264 + $0x258] sm:$0xff]
        %v341 = vld [vmem:[%s264 + $0x260] sm:$0xff]
        %v342 = vld [vmem:[%s264 + $0x268] sm:$0xff]
        %v343 = vld [vmem:[%s264 + $0x270] sm:$0xff]
        %v344 = vld [vmem:[%s264 + $0x278] sm:$0xff]
        %v345 = vld [vmem:[%s264 + $0x280] sm:$0xff]
        %v346 = vld [vmem:[%s264 + $0x288] sm:$0xff]
        %v347 = vld [vmem:[%s264 + $0x290] sm:$0xff]
        %v348 = vld [vmem:[%s264 + $0x298] sm:$0xff]
        %v349 = vld [vmem:[%s264 + $0x2a0] sm:$0xff]
        %v350 = vld [vmem:[%s264 + $0x2a8] sm:$0xff]
        %v351 = vld [vmem:[%s264 + $0x2b0] sm:$0xff]
        %v352 = vld [vmem:[%s264 + $0x2b8] sm:$0xff]
        %v353 = vld [vmem:[%s264 + $0x2c0] sm:$0xff]
        %v354 = vld [vmem:[%s264 + $0x2c8] sm:$0xff]
        %v355 = vld [vmem:[%s264 + $0x2d0] sm:$0xff]
        %v356 = vld [vmem:[%s264 + $0x2d8] sm:$0xff]
        %v357 = vld [vmem:[%s264 + $0x2e0] sm:$0xff]
        %v358 = vld [vmem:[%s264 + $0x2e8] sm:$0xff]
        %v359 = vld [vmem:[%s264 + $0x2f0] sm:$0xff]
        %v360 = vld [vmem:[%s264 + $0x2f8] sm:$0xff]
        %v361 = vld [vmem:[%s264 + $0x300] sm:$0xff]
        %v362 = vld [vmem:[%s264 + $0x308] sm:$0xff]
        %v363 = vld [vmem:[%s264 + $0x310] sm:$0xff]
        %v364 = vld [vmem:[%s264 + $0x318] sm:$0xff]
        %v365 = vld [vmem:[%s264 + $0x320] sm:$0xff]
        %v366 = vld [vmem:[%s264 + $0x328] sm:$0xff]
        %v367 = vld [vmem:[%s264 + $0x330] sm:$0xff]
        %v368 = vld [vmem:[%s264 + $0x338] sm:$0xff]
        %v369 = vld [vmem:[%s264 + $0x340] sm:$0xff]
        %v370 = vld [vmem:[%s264 + $0x348] sm:$0xff]
        %v371 = vld [vmem:[%s264 + $0x350] sm:$0xff]
        %v372 = vld [vmem:[%s264 + $0x358] sm:$0xff]
        %v373 = vld [vmem:[%s264 + $0x360] sm:$0xff]
        %v374 = vld [vmem:[%s264 + $0x368] sm:$0xff]
        %v375 = vld [vmem:[%s264 + $0x370] sm:$0xff]
        %v376 = vld [vmem:[%s264 + $0x378] sm:$0xff]
        %v377 = vld [vmem:[%s264 + $0x380] sm:$0xff]
        %v378 = vld [vmem:[%s264 + $0x388] sm:$0xff]
        %v379 = vld [vmem:[%s264 + $0x390] sm:$0xff]
        %v380 = vld [vmem:[%s264 + $0x398] sm:$0xff]
        %v381 = vld [vmem:[%s264 + $0x3a0] sm:$0xff]
        %v382 = vld [vmem:[%s264 + $0x3a8] sm:$0xff]
        %v383 = vld [vmem:[%s264 + $0x3b0] sm:$0xff]
        %v384 = vld [vmem:[%s264 + $0x3b8] sm:$0xff]
        %v385 = vld [vmem:[%s264 + $0x3c0] sm:$0xff]
        %v386 = vld [vmem:[%s264 + $0x3c8] sm:$0xff]
        %v387 = vld [vmem:[%s264 + $0x3d0] sm:$0xff]
        %v388 = vld [vmem:[%s264 + $0x3d8] sm:$0xff]
        %v389 = vld [vmem:[%s264 + $0x3e0] sm:$0xff]
        %v390 = vld [vmem:[%s264 + $0x3e8] sm:$0xff]
        %v391 = vld [vmem:[%s264 + $0x3f0] sm:$0xff]
        %v392 = vld [vmem:[%s264 + $0x3f8] sm:$0xff]
        %p393 = scmp.eq.s32.totalorder %s23, 0
        // Predicated region
        $region53: #{tpu_custom_call.1} parent=39 // pred_check
          %p394 = pneg %p393
        $region54: #{tpu_custom_call.1} parent=39 // pred_check_branch
          %396 = sbr.rel (%p394) target = $region56
        $region55: #{tpu_custom_call.1} parent=39 // pred_region
          %v397 = vld [vmem:[#allocation6] sm:$0xf]
          %v398 = vld [vmem:[#allocation6 + $0x4] sm:$0xf]
          %v399 = vld [vmem:[#allocation6 + $0x8] sm:$0xf]
          %v400 = vld [vmem:[#allocation6 + $0xc] sm:$0xf]
          %v401 = vld [vmem:[#allocation6 + $0x10] sm:$0xf]
          %v402 = vld [vmem:[#allocation6 + $0x14] sm:$0xf]
          %v403 = vld [vmem:[#allocation6 + $0x18] sm:$0xf]
          %v404 = vld [vmem:[#allocation6 + $0x1c] sm:$0xf]
          %v405 = vld [vmem:[#allocation6 + $0x20] sm:$0xf]
          %v406 = vld [vmem:[#allocation6 + $0x24] sm:$0xf]
          %v407 = vld [vmem:[#allocation6 + $0x28] sm:$0xf]
          %v408 = vld [vmem:[#allocation6 + $0x2c] sm:$0xf]
          %v409 = vld [vmem:[#allocation6 + $0x30] sm:$0xf]
          %v410 = vld [vmem:[#allocation6 + $0x34] sm:$0xf]
          %v411 = vld [vmem:[#allocation6 + $0x38] sm:$0xf]
          %v412 = vld [vmem:[#allocation6 + $0x3c] sm:$0xf]
          %v413 = vld [vmem:[#allocation6 + $0x40] sm:$0xf]
          %v414 = vld [vmem:[#allocation6 + $0x44] sm:$0xf]
          %v415 = vld [vmem:[#allocation6 + $0x48] sm:$0xf]
          %v416 = vld [vmem:[#allocation6 + $0x4c] sm:$0xf]
          %v417 = vld [vmem:[#allocation6 + $0x50] sm:$0xf]
          %v418 = vld [vmem:[#allocation6 + $0x54] sm:$0xf]
          %v419 = vld [vmem:[#allocation6 + $0x58] sm:$0xf]
          %v420 = vld [vmem:[#allocation6 + $0x5c] sm:$0xf]
          %v421 = vld [vmem:[#allocation6 + $0x60] sm:$0xf]
          %v422 = vld [vmem:[#allocation6 + $0x64] sm:$0xf]
          %v423 = vld [vmem:[#allocation6 + $0x68] sm:$0xf]
          %v424 = vld [vmem:[#allocation6 + $0x6c] sm:$0xf]
          %v425 = vld [vmem:[#allocation6 + $0x70] sm:$0xf]
          %v426 = vld [vmem:[#allocation6 + $0x74] sm:$0xf]
          %v427 = vld [vmem:[#allocation6 + $0x78] sm:$0xf]
          %v428 = vld [vmem:[#allocation6 + $0x7c] sm:$0xf]
          %v429 = vld [vmem:[#allocation6 + $0x80] sm:$0xf]
          %v430 = vld [vmem:[#allocation6 + $0x84] sm:$0xf]
          %v431 = vld [vmem:[#allocation6 + $0x88] sm:$0xf]
          %v432 = vld [vmem:[#allocation6 + $0x8c] sm:$0xf]
          %v433 = vld [vmem:[#allocation6 + $0x90] sm:$0xf]
          %v434 = vld [vmem:[#allocation6 + $0x94] sm:$0xf]
          %v435 = vld [vmem:[#allocation6 + $0x98] sm:$0xf]
          %v436 = vld [vmem:[#allocation6 + $0x9c] sm:$0xf]
          %v437 = vld [vmem:[#allocation6 + $0xa0] sm:$0xf]
          %v438 = vld [vmem:[#allocation6 + $0xa4] sm:$0xf]
          %v439 = vld [vmem:[#allocation6 + $0xa8] sm:$0xf]
          %v440 = vld [vmem:[#allocation6 + $0xac] sm:$0xf]
          %v441 = vld [vmem:[#allocation6 + $0xb0] sm:$0xf]
          %v442 = vld [vmem:[#allocation6 + $0xb4] sm:$0xf]
          %v443 = vld [vmem:[#allocation6 + $0xb8] sm:$0xf]
          %v444 = vld [vmem:[#allocation6 + $0xbc] sm:$0xf]
          %v445 = vld [vmem:[#allocation6 + $0xc0] sm:$0xf]
          %v446 = vld [vmem:[#allocation6 + $0xc4] sm:$0xf]
          %v447 = vld [vmem:[#allocation6 + $0xc8] sm:$0xf]
          %v448 = vld [vmem:[#allocation6 + $0xcc] sm:$0xf]
          %v449 = vld [vmem:[#allocation6 + $0xd0] sm:$0xf]
          %v450 = vld [vmem:[#allocation6 + $0xd4] sm:$0xf]
          %v451 = vld [vmem:[#allocation6 + $0xd8] sm:$0xf]
          %v452 = vld [vmem:[#allocation6 + $0xdc] sm:$0xf]
          %v453 = vld [vmem:[#allocation6 + $0xe0] sm:$0xf]
          %v454 = vld [vmem:[#allocation6 + $0xe4] sm:$0xf]
          %v455 = vld [vmem:[#allocation6 + $0xe8] sm:$0xf]
          %v456 = vld [vmem:[#allocation6 + $0xec] sm:$0xf]
          %v457 = vld [vmem:[#allocation6 + $0xf0] sm:$0xf]
          %v458 = vld [vmem:[#allocation6 + $0xf4] sm:$0xf]
          %v459 = vld [vmem:[#allocation6 + $0xf8] sm:$0xf]
          %v460 = vld [vmem:[#allocation6 + $0xfc] sm:$0xf]
          %v461 = vld [vmem:[%s2] sm:$0x1]
          %v463 = vperm.slane %v461, 0
          %v593 = vunpack.c.l.b16 %v265
          %v594 = vunpack.c.h.b16 %v265
          %v595 = vunpack.c.l.b16 %v266
          %v596 = vunpack.c.h.b16 %v266
          %v597 = vunpack.c.l.b16 %v267
          %v598 = vunpack.c.h.b16 %v267
          %v599 = vunpack.c.l.b16 %v268
          %v600 = vunpack.c.h.b16 %v268
          %v601 = vunpack.c.l.b16 %v269
          %v602 = vunpack.c.h.b16 %v269
          %v603 = vunpack.c.l.b16 %v270
          %v604 = vunpack.c.h.b16 %v270
          %v605 = vunpack.c.l.b16 %v271
          %v606 = vunpack.c.h.b16 %v271
          %v607 = vunpack.c.l.b16 %v272
          %v608 = vunpack.c.h.b16 %v272
          %v609 = vunpack.c.l.b16 %v273
          %v610 = vunpack.c.h.b16 %v273
          %v611 = vunpack.c.l.b16 %v274
          %v612 = vunpack.c.h.b16 %v274
          %v613 = vunpack.c.l.b16 %v275
          %v614 = vunpack.c.h.b16 %v275
          %v615 = vunpack.c.l.b16 %v276
          %v616 = vunpack.c.h.b16 %v276
          %v617 = vunpack.c.l.b16 %v277
          %v618 = vunpack.c.h.b16 %v277
          %v619 = vunpack.c.l.b16 %v278
          %v620 = vunpack.c.h.b16 %v278
          %v621 = vunpack.c.l.b16 %v279
          %v622 = vunpack.c.h.b16 %v279
          %v623 = vunpack.c.l.b16 %v280
          %v624 = vunpack.c.h.b16 %v280
          %v625 = vunpack.c.l.b16 %v281
          %v626 = vunpack.c.h.b16 %v281
          %v627 = vunpack.c.l.b16 %v282
          %v628 = vunpack.c.h.b16 %v282
          %v629 = vunpack.c.l.b16 %v283
          %v630 = vunpack.c.h.b16 %v283
          %v631 = vunpack.c.l.b16 %v284
          %v632 = vunpack.c.h.b16 %v284
          %v633 = vunpack.c.l.b16 %v285
          %v634 = vunpack.c.h.b16 %v285
          %v635 = vunpack.c.l.b16 %v286
          %v636 = vunpack.c.h.b16 %v286
          %v637 = vunpack.c.l.b16 %v287
          %v638 = vunpack.c.h.b16 %v287
          %v639 = vunpack.c.l.b16 %v288
          %v640 = vunpack.c.h.b16 %v288
          %v641 = vunpack.c.l.b16 %v289
          %v642 = vunpack.c.h.b16 %v289
          %v643 = vunpack.c.l.b16 %v290
          %v644 = vunpack.c.h.b16 %v290
          %v645 = vunpack.c.l.b16 %v291
          %v646 = vunpack.c.h.b16 %v291
          %v647 = vunpack.c.l.b16 %v292
          %v648 = vunpack.c.h.b16 %v292
          %v649 = vunpack.c.l.b16 %v293
          %v650 = vunpack.c.h.b16 %v293
          %v651 = vunpack.c.l.b16 %v294
          %v652 = vunpack.c.h.b16 %v294
          %v653 = vunpack.c.l.b16 %v295
          %v654 = vunpack.c.h.b16 %v295
          %v655 = vunpack.c.l.b16 %v296
          %v656 = vunpack.c.h.b16 %v296
          %v657 = vunpack.c.l.b16 %v297
          %v658 = vunpack.c.h.b16 %v297
          %v659 = vunpack.c.l.b16 %v298
          %v660 = vunpack.c.h.b16 %v298
          %v661 = vunpack.c.l.b16 %v299
          %v662 = vunpack.c.h.b16 %v299
          %v663 = vunpack.c.l.b16 %v300
          %v664 = vunpack.c.h.b16 %v300
          %v665 = vunpack.c.l.b16 %v301
          %v666 = vunpack.c.h.b16 %v301
          %v667 = vunpack.c.l.b16 %v302
          %v668 = vunpack.c.h.b16 %v302
          %v669 = vunpack.c.l.b16 %v303
          %v670 = vunpack.c.h.b16 %v303
          %v671 = vunpack.c.l.b16 %v304
          %v672 = vunpack.c.h.b16 %v304
          %v673 = vunpack.c.l.b16 %v305
          %v674 = vunpack.c.h.b16 %v305
          %v675 = vunpack.c.l.b16 %v306
          %v676 = vunpack.c.h.b16 %v306
          %v677 = vunpack.c.l.b16 %v307
          %v678 = vunpack.c.h.b16 %v307
          %v679 = vunpack.c.l.b16 %v308
          %v680 = vunpack.c.h.b16 %v308
          %v681 = vunpack.c.l.b16 %v309
          %v682 = vunpack.c.h.b16 %v309
          %v683 = vunpack.c.l.b16 %v310
          %v684 = vunpack.c.h.b16 %v310
          %v685 = vunpack.c.l.b16 %v311
          %v686 = vunpack.c.h.b16 %v311
          %v687 = vunpack.c.l.b16 %v312
          %v688 = vunpack.c.h.b16 %v312
          %v689 = vunpack.c.l.b16 %v313
          %v690 = vunpack.c.h.b16 %v313
          %v691 = vunpack.c.l.b16 %v314
          %v692 = vunpack.c.h.b16 %v314
          %v693 = vunpack.c.l.b16 %v315
          %v694 = vunpack.c.h.b16 %v315
          %v695 = vunpack.c.l.b16 %v316
          %v696 = vunpack.c.h.b16 %v316
          %v697 = vunpack.c.l.b16 %v317
          %v698 = vunpack.c.h.b16 %v317
          %v699 = vunpack.c.l.b16 %v318
          %v700 = vunpack.c.h.b16 %v318
          %v701 = vunpack.c.l.b16 %v319
          %v702 = vunpack.c.h.b16 %v319
          %v703 = vunpack.c.l.b16 %v320
          %v704 = vunpack.c.h.b16 %v320
          %v705 = vunpack.c.l.b16 %v321
          %v706 = vunpack.c.h.b16 %v321
          %v707 = vunpack.c.l.b16 %v322
          %v708 = vunpack.c.h.b16 %v322
          %v709 = vunpack.c.l.b16 %v323
          %v710 = vunpack.c.h.b16 %v323
          %v711 = vunpack.c.l.b16 %v324
          %v712 = vunpack.c.h.b16 %v324
          %v713 = vunpack.c.l.b16 %v325
          %v714 = vunpack.c.h.b16 %v325
          %v715 = vunpack.c.l.b16 %v326
          %v716 = vunpack.c.h.b16 %v326
          %v717 = vunpack.c.l.b16 %v327
          %v718 = vunpack.c.h.b16 %v327
          %v719 = vunpack.c.l.b16 %v328
          %v720 = vunpack.c.h.b16 %v328
          %v721 = vunpack.c.l.b16 %v329
          %v722 = vunpack.c.h.b16 %v329
          %v723 = vunpack.c.l.b16 %v330
          %v724 = vunpack.c.h.b16 %v330
          %v725 = vunpack.c.l.b16 %v331
          %v726 = vunpack.c.h.b16 %v331
          %v727 = vunpack.c.l.b16 %v332
          %v728 = vunpack.c.h.b16 %v332
          %v729 = vunpack.c.l.b16 %v333
          %v730 = vunpack.c.h.b16 %v333
          %v731 = vunpack.c.l.b16 %v334
          %v732 = vunpack.c.h.b16 %v334
          %v733 = vunpack.c.l.b16 %v335
          %v734 = vunpack.c.h.b16 %v335
          %v735 = vunpack.c.l.b16 %v336
          %v736 = vunpack.c.h.b16 %v336
          %v737 = vunpack.c.l.b16 %v337
          %v738 = vunpack.c.h.b16 %v337
          %v739 = vunpack.c.l.b16 %v338
          %v740 = vunpack.c.h.b16 %v338
          %v741 = vunpack.c.l.b16 %v339
          %v742 = vunpack.c.h.b16 %v339
          %v743 = vunpack.c.l.b16 %v340
          %v744 = vunpack.c.h.b16 %v340
          %v745 = vunpack.c.l.b16 %v341
          %v746 = vunpack.c.h.b16 %v341
          %v747 = vunpack.c.l.b16 %v342
          %v748 = vunpack.c.h.b16 %v342
          %v749 = vunpack.c.l.b16 %v343
          %v750 = vunpack.c.h.b16 %v343
          %v751 = vunpack.c.l.b16 %v344
          %v752 = vunpack.c.h.b16 %v344
          %v753 = vunpack.c.l.b16 %v345
          %v754 = vunpack.c.h.b16 %v345
          %v755 = vunpack.c.l.b16 %v346
          %v756 = vunpack.c.h.b16 %v346
          %v757 = vunpack.c.l.b16 %v347
          %v758 = vunpack.c.h.b16 %v347
          %v759 = vunpack.c.l.b16 %v348
          %v760 = vunpack.c.h.b16 %v348
          %v761 = vunpack.c.l.b16 %v349
          %v762 = vunpack.c.h.b16 %v349
          %v763 = vunpack.c.l.b16 %v350
          %v764 = vunpack.c.h.b16 %v350
          %v765 = vunpack.c.l.b16 %v351
          %v766 = vunpack.c.h.b16 %v351
          %v767 = vunpack.c.l.b16 %v352
          %v768 = vunpack.c.h.b16 %v352
          %v769 = vunpack.c.l.b16 %v353
          %v770 = vunpack.c.h.b16 %v353
          %v771 = vunpack.c.l.b16 %v354
          %v772 = vunpack.c.h.b16 %v354
          %v773 = vunpack.c.l.b16 %v355
          %v774 = vunpack.c.h.b16 %v355
          %v775 = vunpack.c.l.b16 %v356
          %v776 = vunpack.c.h.b16 %v356
          %v777 = vunpack.c.l.b16 %v357
          %v778 = vunpack.c.h.b16 %v357
          %v779 = vunpack.c.l.b16 %v358
          %v780 = vunpack.c.h.b16 %v358
          %v781 = vunpack.c.l.b16 %v359
          %v782 = vunpack.c.h.b16 %v359
          %v783 = vunpack.c.l.b16 %v360
          %v784 = vunpack.c.h.b16 %v360
          %v785 = vunpack.c.l.b16 %v361
          %v786 = vunpack.c.h.b16 %v361
          %v787 = vunpack.c.l.b16 %v362
          %v788 = vunpack.c.h.b16 %v362
          %v789 = vunpack.c.l.b16 %v363
          %v790 = vunpack.c.h.b16 %v363
          %v791 = vunpack.c.l.b16 %v364
          %v792 = vunpack.c.h.b16 %v364
          %v793 = vunpack.c.l.b16 %v365
          %v794 = vunpack.c.h.b16 %v365
          %v795 = vunpack.c.l.b16 %v366
          %v796 = vunpack.c.h.b16 %v366
          %v797 = vunpack.c.l.b16 %v367
          %v798 = vunpack.c.h.b16 %v367
          %v799 = vunpack.c.l.b16 %v368
          %v800 = vunpack.c.h.b16 %v368
          %v801 = vunpack.c.l.b16 %v369
          %v802 = vunpack.c.h.b16 %v369
          %v803 = vunpack.c.l.b16 %v370
          %v804 = vunpack.c.h.b16 %v370
          %v805 = vunpack.c.l.b16 %v371
          %v806 = vunpack.c.h.b16 %v371
          %v807 = vunpack.c.l.b16 %v372
          %v808 = vunpack.c.h.b16 %v372
          %v809 = vunpack.c.l.b16 %v373
          %v810 = vunpack.c.h.b16 %v373
          %v811 = vunpack.c.l.b16 %v374
          %v812 = vunpack.c.h.b16 %v374
          %v813 = vunpack.c.l.b16 %v375
          %v814 = vunpack.c.h.b16 %v375
          %v815 = vunpack.c.l.b16 %v376
          %v816 = vunpack.c.h.b16 %v376
          %v817 = vunpack.c.l.b16 %v377
          %v818 = vunpack.c.h.b16 %v377
          %v819 = vunpack.c.l.b16 %v378
          %v820 = vunpack.c.h.b16 %v378
          %v821 = vunpack.c.l.b16 %v379
          %v822 = vunpack.c.h.b16 %v379
          %v823 = vunpack.c.l.b16 %v380
          %v824 = vunpack.c.h.b16 %v380
          %v825 = vunpack.c.l.b16 %v381
          %v826 = vunpack.c.h.b16 %v381
          %v827 = vunpack.c.l.b16 %v382
          %v828 = vunpack.c.h.b16 %v382
          %v829 = vunpack.c.l.b16 %v383
          %v830 = vunpack.c.h.b16 %v383
          %v831 = vunpack.c.l.b16 %v384
          %v832 = vunpack.c.h.b16 %v384
          %v833 = vunpack.c.l.b16 %v385
          %v834 = vunpack.c.h.b16 %v385
          %v835 = vunpack.c.l.b16 %v386
          %v836 = vunpack.c.h.b16 %v386
          %v837 = vunpack.c.l.b16 %v387
          %v838 = vunpack.c.h.b16 %v387
          %v839 = vunpack.c.l.b16 %v388
          %v840 = vunpack.c.h.b16 %v388
          %v841 = vunpack.c.l.b16 %v389
          %v842 = vunpack.c.h.b16 %v389
          %v843 = vunpack.c.l.b16 %v390
          %v844 = vunpack.c.h.b16 %v390
          %v845 = vunpack.c.l.b16 %v391
          %v846 = vunpack.c.h.b16 %v391
          %v847 = vunpack.c.l.b16 %v392
          %v848 = vunpack.c.h.b16 %v392
          %v849 = vpack.c.b16 %v597, %v593
          %v850 = vpack.c.b16 %v598, %v594
          %v851 = vpack.c.b16 %v599, %v595
          %v852 = vpack.c.b16 %v600, %v596
          %v853 = vpack.c.b16 %v605, %v601
          %v854 = vpack.c.b16 %v606, %v602
          %v855 = vpack.c.b16 %v607, %v603
          %v856 = vpack.c.b16 %v608, %v604
          %v857 = vpack.c.b16 %v613, %v609
          %v858 = vpack.c.b16 %v614, %v610
          %v859 = vpack.c.b16 %v615, %v611
          %v860 = vpack.c.b16 %v616, %v612
          %v861 = vpack.c.b16 %v621, %v617
          %v862 = vpack.c.b16 %v622, %v618
          %v863 = vpack.c.b16 %v623, %v619
          %v864 = vpack.c.b16 %v624, %v620
          %v865 = vpack.c.b16 %v629, %v625
          %v866 = vpack.c.b16 %v630, %v626
          %v867 = vpack.c.b16 %v631, %v627
          %v868 = vpack.c.b16 %v632, %v628
          %v869 = vpack.c.b16 %v637, %v633
          %v870 = vpack.c.b16 %v638, %v634
          %v871 = vpack.c.b16 %v639, %v635
          %v872 = vpack.c.b16 %v640, %v636
          %v873 = vpack.c.b16 %v645, %v641
          %v874 = vpack.c.b16 %v646, %v642
          %v875 = vpack.c.b16 %v647, %v643
          %v876 = vpack.c.b16 %v648, %v644
          %v877 = vpack.c.b16 %v653, %v649
          %v878 = vpack.c.b16 %v654, %v650
          %v879 = vpack.c.b16 %v655, %v651
          %v880 = vpack.c.b16 %v656, %v652
          %v881 = vpack.c.b16 %v661, %v657
          %v882 = vpack.c.b16 %v662, %v658
          %v883 = vpack.c.b16 %v663, %v659
          %v884 = vpack.c.b16 %v664, %v660
          %v885 = vpack.c.b16 %v669, %v665
          %v886 = vpack.c.b16 %v670, %v666
          %v887 = vpack.c.b16 %v671, %v667
          %v888 = vpack.c.b16 %v672, %v668
          %v889 = vpack.c.b16 %v677, %v673
          %v890 = vpack.c.b16 %v678, %v674
          %v891 = vpack.c.b16 %v679, %v675
          %v892 = vpack.c.b16 %v680, %v676
          %v893 = vpack.c.b16 %v685, %v681
          %v894 = vpack.c.b16 %v686, %v682
          %v895 = vpack.c.b16 %v687, %v683
          %v896 = vpack.c.b16 %v688, %v684
          %v897 = vpack.c.b16 %v693, %v689
          %v898 = vpack.c.b16 %v694, %v690
          %v899 = vpack.c.b16 %v695, %v691
          %v900 = vpack.c.b16 %v696, %v692
          %v901 = vpack.c.b16 %v701, %v697
          %v902 = vpack.c.b16 %v702, %v698
          %v903 = vpack.c.b16 %v703, %v699
          %v904 = vpack.c.b16 %v704, %v700
          %v905 = vpack.c.b16 %v709, %v705
          %v906 = vpack.c.b16 %v710, %v706
          %v907 = vpack.c.b16 %v711, %v707
          %v908 = vpack.c.b16 %v712, %v708
          %v909 = vpack.c.b16 %v717, %v713
          %v910 = vpack.c.b16 %v718, %v714
          %v911 = vpack.c.b16 %v719, %v715
          %v912 = vpack.c.b16 %v720, %v716
          %v913 = vpack.c.b16 %v725, %v721
          %v914 = vpack.c.b16 %v726, %v722
          %v915 = vpack.c.b16 %v727, %v723
          %v916 = vpack.c.b16 %v728, %v724
          %v917 = vpack.c.b16 %v733, %v729
          %v918 = vpack.c.b16 %v734, %v730
          %v919 = vpack.c.b16 %v735, %v731
          %v920 = vpack.c.b16 %v736, %v732
          %v921 = vpack.c.b16 %v741, %v737
          %v922 = vpack.c.b16 %v742, %v738
          %v923 = vpack.c.b16 %v743, %v739
          %v924 = vpack.c.b16 %v744, %v740
          %v925 = vpack.c.b16 %v749, %v745
          %v926 = vpack.c.b16 %v750, %v746
          %v927 = vpack.c.b16 %v751, %v747
          %v928 = vpack.c.b16 %v752, %v748
          %v929 = vpack.c.b16 %v757, %v753
          %v930 = vpack.c.b16 %v758, %v754
          %v931 = vpack.c.b16 %v759, %v755
          %v932 = vpack.c.b16 %v760, %v756
          %v933 = vpack.c.b16 %v765, %v761
          %v934 = vpack.c.b16 %v766, %v762
          %v935 = vpack.c.b16 %v767, %v763
          %v936 = vpack.c.b16 %v768, %v764
          %v937 = vpack.c.b16 %v773, %v769
          %v938 = vpack.c.b16 %v774, %v770
          %v939 = vpack.c.b16 %v775, %v771
          %v940 = vpack.c.b16 %v776, %v772
          %v941 = vpack.c.b16 %v781, %v777
          %v942 = vpack.c.b16 %v782, %v778
          %v943 = vpack.c.b16 %v783, %v779
          %v944 = vpack.c.b16 %v784, %v780
          %v945 = vpack.c.b16 %v789, %v785
          %v946 = vpack.c.b16 %v790, %v786
          %v947 = vpack.c.b16 %v791, %v787
          %v948 = vpack.c.b16 %v792, %v788
          %v949 = vpack.c.b16 %v797, %v793
          %v950 = vpack.c.b16 %v798, %v794
          %v951 = vpack.c.b16 %v799, %v795
          %v952 = vpack.c.b16 %v800, %v796
          %v953 = vpack.c.b16 %v805, %v801
          %v954 = vpack.c.b16 %v806, %v802
          %v955 = vpack.c.b16 %v807, %v803
          %v956 = vpack.c.b16 %v808, %v804
          %v957 = vpack.c.b16 %v813, %v809
          %v958 = vpack.c.b16 %v814, %v810
          %v959 = vpack.c.b16 %v815, %v811
          %v960 = vpack.c.b16 %v816, %v812
          %v961 = vpack.c.b16 %v821, %v817
          %v962 = vpack.c.b16 %v822, %v818
          %v963 = vpack.c.b16 %v823, %v819
          %v964 = vpack.c.b16 %v824, %v820
          %v965 = vpack.c.b16 %v829, %v825
          %v966 = vpack.c.b16 %v830, %v826
          %v967 = vpack.c.b16 %v831, %v827
          %v968 = vpack.c.b16 %v832, %v828
          %v969 = vpack.c.b16 %v837, %v833
          %v970 = vpack.c.b16 %v838, %v834
          %v971 = vpack.c.b16 %v839, %v835
          %v972 = vpack.c.b16 %v840, %v836
          %v973 = vpack.c.b16 %v845, %v841
          %v974 = vpack.c.b16 %v846, %v842
          %v975 = vpack.c.b16 %v847, %v843
          %v976 = vpack.c.b16 %v848, %v844
          %v1169 = vunpack.c.l.b16 %v397
          %v1170 = vunpack.c.l.b16 %v398
          %v1171 = vunpack.c.l.b16 %v399
          %v1172 = vunpack.c.l.b16 %v400
          %v1173 = vunpack.c.l.b16 %v401
          %v1174 = vunpack.c.l.b16 %v402
          %v1175 = vunpack.c.l.b16 %v403
          %v1176 = vunpack.c.l.b16 %v404
          %v1177 = vunpack.c.l.b16 %v405
          %v1178 = vunpack.c.l.b16 %v406
          %v1179 = vunpack.c.l.b16 %v407
          %v1180 = vunpack.c.l.b16 %v408
          %v1181 = vunpack.c.l.b16 %v409
          %v1182 = vunpack.c.l.b16 %v410
          %v1183 = vunpack.c.l.b16 %v411
          %v1184 = vunpack.c.l.b16 %v412
          %v1185 = vunpack.c.l.b16 %v413
          %v1186 = vunpack.c.l.b16 %v414
          %v1187 = vunpack.c.l.b16 %v415
          %v1188 = vunpack.c.l.b16 %v416
          %v1189 = vunpack.c.l.b16 %v417
          %v1190 = vunpack.c.l.b16 %v418
          %v1191 = vunpack.c.l.b16 %v419
          %v1192 = vunpack.c.l.b16 %v420
          %v1193 = vunpack.c.l.b16 %v421
          %v1194 = vunpack.c.l.b16 %v422
          %v1195 = vunpack.c.l.b16 %v423
          %v1196 = vunpack.c.l.b16 %v424
          %v1197 = vunpack.c.l.b16 %v425
          %v1198 = vunpack.c.l.b16 %v426
          %v1199 = vunpack.c.l.b16 %v427
          %v1200 = vunpack.c.l.b16 %v428
          %v1201 = vunpack.c.l.b16 %v429
          %v1202 = vunpack.c.l.b16 %v430
          %v1203 = vunpack.c.l.b16 %v431
          %v1204 = vunpack.c.l.b16 %v432
          %v1205 = vunpack.c.l.b16 %v433
          %v1206 = vunpack.c.l.b16 %v434
          %v1207 = vunpack.c.l.b16 %v435
          %v1208 = vunpack.c.l.b16 %v436
          %v1209 = vunpack.c.l.b16 %v437
          %v1210 = vunpack.c.l.b16 %v438
          %v1211 = vunpack.c.l.b16 %v439
          %v1212 = vunpack.c.l.b16 %v440
          %v1213 = vunpack.c.l.b16 %v441
          %v1214 = vunpack.c.l.b16 %v442
          %v1215 = vunpack.c.l.b16 %v443
          %v1216 = vunpack.c.l.b16 %v444
          %v1217 = vunpack.c.l.b16 %v445
          %v1218 = vunpack.c.l.b16 %v446
          %v1219 = vunpack.c.l.b16 %v447
          %v1220 = vunpack.c.l.b16 %v448
          %v1221 = vunpack.c.l.b16 %v449
          %v1222 = vunpack.c.l.b16 %v450
          %v1223 = vunpack.c.l.b16 %v451
          %v1224 = vunpack.c.l.b16 %v452
          %v1225 = vunpack.c.l.b16 %v453
          %v1226 = vunpack.c.l.b16 %v454
          %v1227 = vunpack.c.l.b16 %v455
          %v1228 = vunpack.c.l.b16 %v456
          %v1229 = vunpack.c.l.b16 %v457
          %v1230 = vunpack.c.l.b16 %v458
          %v1231 = vunpack.c.l.b16 %v459
          %v1232 = vunpack.c.l.b16 %v460
          %v1233 = vpack.c.b16 %v1170, %v1169
          %v1234 = vpack.c.b16 %v1172, %v1171
          %v1235 = vpack.c.b16 %v1174, %v1173
          %v1236 = vpack.c.b16 %v1176, %v1175
          %v1237 = vpack.c.b16 %v1178, %v1177
          %v1238 = vpack.c.b16 %v1180, %v1179
          %v1239 = vpack.c.b16 %v1182, %v1181
          %v1240 = vpack.c.b16 %v1184, %v1183
          %v1241 = vpack.c.b16 %v1186, %v1185
          %v1242 = vpack.c.b16 %v1188, %v1187
          %v1243 = vpack.c.b16 %v1190, %v1189
          %v1244 = vpack.c.b16 %v1192, %v1191
          %v1245 = vpack.c.b16 %v1194, %v1193
          %v1246 = vpack.c.b16 %v1196, %v1195
          %v1247 = vpack.c.b16 %v1198, %v1197
          %v1248 = vpack.c.b16 %v1200, %v1199
          %v1249 = vpack.c.b16 %v1202, %v1201
          %v1250 = vpack.c.b16 %v1204, %v1203
          %v1251 = vpack.c.b16 %v1206, %v1205
          %v1252 = vpack.c.b16 %v1208, %v1207
          %v1253 = vpack.c.b16 %v1210, %v1209
          %v1254 = vpack.c.b16 %v1212, %v1211
          %v1255 = vpack.c.b16 %v1214, %v1213
          %v1256 = vpack.c.b16 %v1216, %v1215
          %v1257 = vpack.c.b16 %v1218, %v1217
          %v1258 = vpack.c.b16 %v1220, %v1219
          %v1259 = vpack.c.b16 %v1222, %v1221
          %v1260 = vpack.c.b16 %v1224, %v1223
          %v1261 = vpack.c.b16 %v1226, %v1225
          %v1262 = vpack.c.b16 %v1228, %v1227
          %v1263 = vpack.c.b16 %v1230, %v1229
          %v1264 = vpack.c.b16 %v1232, %v1231
          %1297 = vmatpush.bf16.msra.mxu0 %v1240
          %1298 = vmatpush.bf16.msra.mxu0 %v1239
          %1299 = vmatpush.bf16.msra.mxu0 %v1238
          %1300 = vmatpush.bf16.msra.mxu0 %v1237
          %1301 = vmatpush.bf16.msra.mxu0 %v1236
          %1302 = vmatpush.bf16.msra.mxu0 %v1235
          %1303 = vmatpush.bf16.msra.mxu0 %v1234
          %1304 = vmatpush.bf16.msra.mxu0 %v1233
          %1305 = vmatmul.bf16.gmra.mxu0 %v849
          %v1306 = vpop.f32.mrf.mxu0
          %v1307 = vadd.f32 %v463, %v1306
          %v1308 = vpop.f32.mrf.mxu0
          %v1309 = vadd.f32 %v463, %v1308
          %1310 = vmatmul.bf16.gmra.mxu0 %v853
          %v1311 = vpop.f32.mrf.mxu0
          %v1312 = vadd.f32 %v463, %v1311
          %v1313 = vpop.f32.mrf.mxu0
          %v1314 = vadd.f32 %v463, %v1313
          %1315 = vmatmul.bf16.gmra.mxu0 %v857
          %v1316 = vpop.f32.mrf.mxu0
          %v1317 = vadd.f32 %v463, %v1316
          %v1318 = vpop.f32.mrf.mxu0
          %v1319 = vadd.f32 %v463, %v1318
          %1320 = vmatmul.bf16.gmra.mxu0 %v861
          %v1321 = vpop.f32.mrf.mxu0
          %v1322 = vadd.f32 %v463, %v1321
          %v1323 = vpop.f32.mrf.mxu0
          %v1324 = vadd.f32 %v463, %v1323
          %1325 = vmatmul.bf16.gmra.mxu0 %v865
          %v1326 = vpop.f32.mrf.mxu0
          %v1327 = vadd.f32 %v463, %v1326
          %v1328 = vpop.f32.mrf.mxu0
          %v1329 = vadd.f32 %v463, %v1328
          %1330 = vmatmul.bf16.gmra.mxu0 %v869
          %v1331 = vpop.f32.mrf.mxu0
          %v1332 = vadd.f32 %v463, %v1331
          %v1333 = vpop.f32.mrf.mxu0
          %v1334 = vadd.f32 %v463, %v1333
          %1335 = vmatmul.bf16.gmra.mxu0 %v873
          %v1336 = vpop.f32.mrf.mxu0
          %v1337 = vadd.f32 %v463, %v1336
          %v1338 = vpop.f32.mrf.mxu0
          %v1339 = vadd.f32 %v463, %v1338
          %1340 = vmatmul.bf16.gmra.mxu0 %v877
          %v1341 = vpop.f32.mrf.mxu0
          %v1342 = vadd.f32 %v463, %v1341
          %v1343 = vpop.f32.mrf.mxu0
          %v1344 = vadd.f32 %v463, %v1343
          %1345 = vmatmul.bf16.gmra.mxu0 %v881
          %v1346 = vpop.f32.mrf.mxu0
          %v1347 = vadd.f32 %v463, %v1346
          %v1348 = vpop.f32.mrf.mxu0
          %v1349 = vadd.f32 %v463, %v1348
          %1350 = vmatmul.bf16.gmra.mxu0 %v885
          %v1351 = vpop.f32.mrf.mxu0
          %v1352 = vadd.f32 %v463, %v1351
          %v1353 = vpop.f32.mrf.mxu0
          %v1354 = vadd.f32 %v463, %v1353
          %1355 = vmatmul.bf16.gmra.mxu0 %v889
          %v1356 = vpop.f32.mrf.mxu0
          %v1357 = vadd.f32 %v463, %v1356
          %v1358 = vpop.f32.mrf.mxu0
          %v1359 = vadd.f32 %v463, %v1358
          %1360 = vmatmul.bf16.gmra.mxu0 %v893
          %v1361 = vpop.f32.mrf.mxu0
          %v1362 = vadd.f32 %v463, %v1361
          %v1363 = vpop.f32.mrf.mxu0
          %v1364 = vadd.f32 %v463, %v1363
          %1365 = vmatmul.bf16.gmra.mxu0 %v897
          %v1366 = vpop.f32.mrf.mxu0
          %v1367 = vadd.f32 %v463, %v1366
          %v1368 = vpop.f32.mrf.mxu0
          %v1369 = vadd.f32 %v463, %v1368
          %1370 = vmatmul.bf16.gmra.mxu0 %v901
          %v1371 = vpop.f32.mrf.mxu0
          %v1372 = vadd.f32 %v463, %v1371
          %v1373 = vpop.f32.mrf.mxu0
          %v1374 = vadd.f32 %v463, %v1373
          %1375 = vmatmul.bf16.gmra.mxu0 %v905
          %v1376 = vpop.f32.mrf.mxu0
          %v1377 = vadd.f32 %v463, %v1376
          %v1378 = vpop.f32.mrf.mxu0
          %v1379 = vadd.f32 %v463, %v1378
          %1380 = vmatmul.bf16.gmra.mxu0 %v909
          %v1381 = vpop.f32.mrf.mxu0
          %v1382 = vadd.f32 %v463, %v1381
          %v1383 = vpop.f32.mrf.mxu0
          %v1384 = vadd.f32 %v463, %v1383
          %1385 = vmatmul.bf16.gmra.mxu0 %v913
          %v1386 = vpop.f32.mrf.mxu0
          %v1387 = vadd.f32 %v463, %v1386
          %v1388 = vpop.f32.mrf.mxu0
          %v1389 = vadd.f32 %v463, %v1388
          %1390 = vmatmul.bf16.gmra.mxu0 %v917
          %v1391 = vpop.f32.mrf.mxu0
          %v1392 = vadd.f32 %v463, %v1391
          %v1393 = vpop.f32.mrf.mxu0
          %v1394 = vadd.f32 %v463, %v1393
          %1395 = vmatmul.bf16.gmra.mxu0 %v921
          %v1396 = vpop.f32.mrf.mxu0
          %v1397 = vadd.f32 %v463, %v1396
          %v1398 = vpop.f32.mrf.mxu0
          %v1399 = vadd.f32 %v463, %v1398
          %1400 = vmatmul.bf16.gmra.mxu0 %v925
          %v1401 = vpop.f32.mrf.mxu0
          %v1402 = vadd.f32 %v463, %v1401
          %v1403 = vpop.f32.mrf.mxu0
          %v1404 = vadd.f32 %v463, %v1403
          %1405 = vmatmul.bf16.gmra.mxu0 %v929
          %v1406 = vpop.f32.mrf.mxu0
          %v1407 = vadd.f32 %v463, %v1406
          %v1408 = vpop.f32.mrf.mxu0
          %v1409 = vadd.f32 %v463, %v1408
          %1410 = vmatmul.bf16.gmra.mxu0 %v933
          %v1411 = vpop.f32.mrf.mxu0
          %v1412 = vadd.f32 %v463, %v1411
          %v1413 = vpop.f32.mrf.mxu0
          %v1414 = vadd.f32 %v463, %v1413
          %1415 = vmatmul.bf16.gmra.mxu0 %v937
          %v1416 = vpop.f32.mrf.mxu0
          %v1417 = vadd.f32 %v463, %v1416
          %v1418 = vpop.f32.mrf.mxu0
          %v1419 = vadd.f32 %v463, %v1418
          %1420 = vmatmul.bf16.gmra.mxu0 %v941
          %v1421 = vpop.f32.mrf.mxu0
          %v1422 = vadd.f32 %v463, %v1421
          %v1423 = vpop.f32.mrf.mxu0
          %v1424 = vadd.f32 %v463, %v1423
          %1425 = vmatmul.bf16.gmra.mxu0 %v945
          %v1426 = vpop.f32.mrf.mxu0
          %v1427 = vadd.f32 %v463, %v1426
          %v1428 = vpop.f32.mrf.mxu0
          %v1429 = vadd.f32 %v463, %v1428
          %1430 = vmatmul.bf16.gmra.mxu0 %v949
          %v1431 = vpop.f32.mrf.mxu0
          %v1432 = vadd.f32 %v463, %v1431
          %v1433 = vpop.f32.mrf.mxu0
          %v1434 = vadd.f32 %v463, %v1433
          %1435 = vmatmul.bf16.gmra.mxu0 %v953
          %v1436 = vpop.f32.mrf.mxu0
          %v1437 = vadd.f32 %v463, %v1436
          %v1438 = vpop.f32.mrf.mxu0
          %v1439 = vadd.f32 %v463, %v1438
          %1440 = vmatmul.bf16.gmra.mxu0 %v957
          %v1441 = vpop.f32.mrf.mxu0
          %v1442 = vadd.f32 %v463, %v1441
          %v1443 = vpop.f32.mrf.mxu0
          %v1444 = vadd.f32 %v463, %v1443
          %1445 = vmatmul.bf16.gmra.mxu0 %v961
          %v1446 = vpop.f32.mrf.mxu0
          %v1447 = vadd.f32 %v463, %v1446
          %v1448 = vpop.f32.mrf.mxu0
          %v1449 = vadd.f32 %v463, %v1448
          %1450 = vmatmul.bf16.gmra.mxu0 %v965
          %v1451 = vpop.f32.mrf.mxu0
          %v1452 = vadd.f32 %v463, %v1451
          %v1453 = vpop.f32.mrf.mxu0
          %v1454 = vadd.f32 %v463, %v1453
          %1455 = vmatmul.bf16.gmra.mxu0 %v969
          %v1456 = vpop.f32.mrf.mxu0
          %v1457 = vadd.f32 %v463, %v1456
          %v1458 = vpop.f32.mrf.mxu0
          %v1459 = vadd.f32 %v463, %v1458
          %1460 = vmatmul.bf16.gmra.mxu0 %v973
          %v1461 = vpop.f32.mrf.mxu0
          %v1462 = vadd.f32 %v463, %v1461
          %v1463 = vpop.f32.mrf.mxu0
          %v1464 = vadd.f32 %v463, %v1463
          %1465 = vdwg.mxu0
          %1466 = vmatpush.bf16.msra.mxu0 %v1248
          %1467 = vmatpush.bf16.msra.mxu0 %v1247
          %1468 = vmatpush.bf16.msra.mxu0 %v1246
          %1469 = vmatpush.bf16.msra.mxu0 %v1245
          %1470 = vmatpush.bf16.msra.mxu0 %v1244
          %1471 = vmatpush.bf16.msra.mxu0 %v1243
          %1472 = vmatpush.bf16.msra.mxu0 %v1242
          %1473 = vmatpush.bf16.msra.mxu0 %v1241
          %1474 = vmatmul.bf16.gmra.mxu0 %v850
          %v1475 = vpop.f32.mrf.mxu0
          %v1476 = vadd.f32 %v1307, %v1475
          %v1477 = vpop.f32.mrf.mxu0
          %v1478 = vadd.f32 %v1309, %v1477
          %1479 = vmatmul.bf16.gmra.mxu0 %v854
          %v1480 = vpop.f32.mrf.mxu0
          %v1481 = vadd.f32 %v1312, %v1480
          %v1482 = vpop.f32.mrf.mxu0
          %v1483 = vadd.f32 %v1314, %v1482
          %1484 = vmatmul.bf16.gmra.mxu0 %v858
          %v1485 = vpop.f32.mrf.mxu0
          %v1486 = vadd.f32 %v1317, %v1485
          %v1487 = vpop.f32.mrf.mxu0
          %v1488 = vadd.f32 %v1319, %v1487
          %1489 = vmatmul.bf16.gmra.mxu0 %v862
          %v1490 = vpop.f32.mrf.mxu0
          %v1491 = vadd.f32 %v1322, %v1490
          %v1492 = vpop.f32.mrf.mxu0
          %v1493 = vadd.f32 %v1324, %v1492
          %1494 = vmatmul.bf16.gmra.mxu0 %v866
          %v1495 = vpop.f32.mrf.mxu0
          %v1496 = vadd.f32 %v1327, %v1495
          %v1497 = vpop.f32.mrf.mxu0
          %v1498 = vadd.f32 %v1329, %v1497
          %1499 = vmatmul.bf16.gmra.mxu0 %v870
          %v1500 = vpop.f32.mrf.mxu0
          %v1501 = vadd.f32 %v1332, %v1500
          %v1502 = vpop.f32.mrf.mxu0
          %v1503 = vadd.f32 %v1334, %v1502
          %1504 = vmatmul.bf16.gmra.mxu0 %v874
          %v1505 = vpop.f32.mrf.mxu0
          %v1506 = vadd.f32 %v1337, %v1505
          %v1507 = vpop.f32.mrf.mxu0
          %v1508 = vadd.f32 %v1339, %v1507
          %1509 = vmatmul.bf16.gmra.mxu0 %v878
          %v1510 = vpop.f32.mrf.mxu0
          %v1511 = vadd.f32 %v1342, %v1510
          %v1512 = vpop.f32.mrf.mxu0
          %v1513 = vadd.f32 %v1344, %v1512
          %1514 = vmatmul.bf16.gmra.mxu0 %v882
          %v1515 = vpop.f32.mrf.mxu0
          %v1516 = vadd.f32 %v1347, %v1515
          %v1517 = vpop.f32.mrf.mxu0
          %v1518 = vadd.f32 %v1349, %v1517
          %1519 = vmatmul.bf16.gmra.mxu0 %v886
          %v1520 = vpop.f32.mrf.mxu0
          %v1521 = vadd.f32 %v1352, %v1520
          %v1522 = vpop.f32.mrf.mxu0
          %v1523 = vadd.f32 %v1354, %v1522
          %1524 = vmatmul.bf16.gmra.mxu0 %v890
          %v1525 = vpop.f32.mrf.mxu0
          %v1526 = vadd.f32 %v1357, %v1525
          %v1527 = vpop.f32.mrf.mxu0
          %v1528 = vadd.f32 %v1359, %v1527
          %1529 = vmatmul.bf16.gmra.mxu0 %v894
          %v1530 = vpop.f32.mrf.mxu0
          %v1531 = vadd.f32 %v1362, %v1530
          %v1532 = vpop.f32.mrf.mxu0
          %v1533 = vadd.f32 %v1364, %v1532
          %1534 = vmatmul.bf16.gmra.mxu0 %v898
          %v1535 = vpop.f32.mrf.mxu0
          %v1536 = vadd.f32 %v1367, %v1535
          %v1537 = vpop.f32.mrf.mxu0
          %v1538 = vadd.f32 %v1369, %v1537
          %1539 = vmatmul.bf16.gmra.mxu0 %v902
          %v1540 = vpop.f32.mrf.mxu0
          %v1541 = vadd.f32 %v1372, %v1540
          %v1542 = vpop.f32.mrf.mxu0
          %v1543 = vadd.f32 %v1374, %v1542
          %1544 = vmatmul.bf16.gmra.mxu0 %v906
          %v1545 = vpop.f32.mrf.mxu0
          %v1546 = vadd.f32 %v1377, %v1545
          %v1547 = vpop.f32.mrf.mxu0
          %v1548 = vadd.f32 %v1379, %v1547
          %1549 = vmatmul.bf16.gmra.mxu0 %v910
          %v1550 = vpop.f32.mrf.mxu0
          %v1551 = vadd.f32 %v1382, %v1550
          %v1552 = vpop.f32.mrf.mxu0
          %v1553 = vadd.f32 %v1384, %v1552
          %1554 = vmatmul.bf16.gmra.mxu0 %v914
          %v1555 = vpop.f32.mrf.mxu0
          %v1556 = vadd.f32 %v1387, %v1555
          %v1557 = vpop.f32.mrf.mxu0
          %v1558 = vadd.f32 %v1389, %v1557
          %1559 = vmatmul.bf16.gmra.mxu0 %v918
          %v1560 = vpop.f32.mrf.mxu0
          %v1561 = vadd.f32 %v1392, %v1560
          %v1562 = vpop.f32.mrf.mxu0
          %v1563 = vadd.f32 %v1394, %v1562
          %1564 = vmatmul.bf16.gmra.mxu0 %v922
          %v1565 = vpop.f32.mrf.mxu0
          %v1566 = vadd.f32 %v1397, %v1565
          %v1567 = vpop.f32.mrf.mxu0
          %v1568 = vadd.f32 %v1399, %v1567
          %1569 = vmatmul.bf16.gmra.mxu0 %v926
          %v1570 = vpop.f32.mrf.mxu0
          %v1571 = vadd.f32 %v1402, %v1570
          %v1572 = vpop.f32.mrf.mxu0
          %v1573 = vadd.f32 %v1404, %v1572
          %1574 = vmatmul.bf16.gmra.mxu0 %v930
          %v1575 = vpop.f32.mrf.mxu0
          %v1576 = vadd.f32 %v1407, %v1575
          %v1577 = vpop.f32.mrf.mxu0
          %v1578 = vadd.f32 %v1409, %v1577
          %1579 = vmatmul.bf16.gmra.mxu0 %v934
          %v1580 = vpop.f32.mrf.mxu0
          %v1581 = vadd.f32 %v1412, %v1580
          %v1582 = vpop.f32.mrf.mxu0
          %v1583 = vadd.f32 %v1414, %v1582
          %1584 = vmatmul.bf16.gmra.mxu0 %v938
          %v1585 = vpop.f32.mrf.mxu0
          %v1586 = vadd.f32 %v1417, %v1585
          %v1587 = vpop.f32.mrf.mxu0
          %v1588 = vadd.f32 %v1419, %v1587
          %1589 = vmatmul.bf16.gmra.mxu0 %v942
          %v1590 = vpop.f32.mrf.mxu0
          %v1591 = vadd.f32 %v1422, %v1590
          %v1592 = vpop.f32.mrf.mxu0
          %v1593 = vadd.f32 %v1424, %v1592
          %1594 = vmatmul.bf16.gmra.mxu0 %v946
          %v1595 = vpop.f32.mrf.mxu0
          %v1596 = vadd.f32 %v1427, %v1595
          %v1597 = vpop.f32.mrf.mxu0
          %v1598 = vadd.f32 %v1429, %v1597
          %1599 = vmatmul.bf16.gmra.mxu0 %v950
          %v1600 = vpop.f32.mrf.mxu0
          %v1601 = vadd.f32 %v1432, %v1600
          %v1602 = vpop.f32.mrf.mxu0
          %v1603 = vadd.f32 %v1434, %v1602
          %1604 = vmatmul.bf16.gmra.mxu0 %v954
          %v1605 = vpop.f32.mrf.mxu0
          %v1606 = vadd.f32 %v1437, %v1605
          %v1607 = vpop.f32.mrf.mxu0
          %v1608 = vadd.f32 %v1439, %v1607
          %1609 = vmatmul.bf16.gmra.mxu0 %v958
          %v1610 = vpop.f32.mrf.mxu0
          %v1611 = vadd.f32 %v1442, %v1610
          %v1612 = vpop.f32.mrf.mxu0
          %v1613 = vadd.f32 %v1444, %v1612
          %1614 = vmatmul.bf16.gmra.mxu0 %v962
          %v1615 = vpop.f32.mrf.mxu0
          %v1616 = vadd.f32 %v1447, %v1615
          %v1617 = vpop.f32.mrf.mxu0
          %v1618 = vadd.f32 %v1449, %v1617
          %1619 = vmatmul.bf16.gmra.mxu0 %v966
          %v1620 = vpop.f32.mrf.mxu0
          %v1621 = vadd.f32 %v1452, %v1620
          %v1622 = vpop.f32.mrf.mxu0
          %v1623 = vadd.f32 %v1454, %v1622
          %1624 = vmatmul.bf16.gmra.mxu0 %v970
          %v1625 = vpop.f32.mrf.mxu0
          %v1626 = vadd.f32 %v1457, %v1625
          %v1627 = vpop.f32.mrf.mxu0
          %v1628 = vadd.f32 %v1459, %v1627
          %1629 = vmatmul.bf16.gmra.mxu0 %v974
          %v1630 = vpop.f32.mrf.mxu0
          %v1631 = vadd.f32 %v1462, %v1630
          %v1632 = vpop.f32.mrf.mxu0
          %v1633 = vadd.f32 %v1464, %v1632
          %1634 = vdwg.mxu0
          %1635 = vmatpush.bf16.msra.mxu0 %v1256
          %1636 = vmatpush.bf16.msra.mxu0 %v1255
          %1637 = vmatpush.bf16.msra.mxu0 %v1254
          %1638 = vmatpush.bf16.msra.mxu0 %v1253
          %1639 = vmatpush.bf16.msra.mxu0 %v1252
          %1640 = vmatpush.bf16.msra.mxu0 %v1251
          %1641 = vmatpush.bf16.msra.mxu0 %v1250
          %1642 = vmatpush.bf16.msra.mxu0 %v1249
          %1643 = vmatmul.bf16.gmra.mxu0 %v851
          %v1644 = vpop.f32.mrf.mxu0
          %v1645 = vadd.f32 %v1476, %v1644
          %v1646 = vpop.f32.mrf.mxu0
          %v1647 = vadd.f32 %v1478, %v1646
          %1648 = vmatmul.bf16.gmra.mxu0 %v855
          %v1649 = vpop.f32.mrf.mxu0
          %v1650 = vadd.f32 %v1481, %v1649
          %v1651 = vpop.f32.mrf.mxu0
          %v1652 = vadd.f32 %v1483, %v1651
          %1653 = vmatmul.bf16.gmra.mxu0 %v859
          %v1654 = vpop.f32.mrf.mxu0
          %v1655 = vadd.f32 %v1486, %v1654
          %v1656 = vpop.f32.mrf.mxu0
          %v1657 = vadd.f32 %v1488, %v1656
          %1658 = vmatmul.bf16.gmra.mxu0 %v863
          %v1659 = vpop.f32.mrf.mxu0
          %v1660 = vadd.f32 %v1491, %v1659
          %v1661 = vpop.f32.mrf.mxu0
          %v1662 = vadd.f32 %v1493, %v1661
          %1663 = vmatmul.bf16.gmra.mxu0 %v867
          %v1664 = vpop.f32.mrf.mxu0
          %v1665 = vadd.f32 %v1496, %v1664
          %v1666 = vpop.f32.mrf.mxu0
          %v1667 = vadd.f32 %v1498, %v1666
          %1668 = vmatmul.bf16.gmra.mxu0 %v871
          %v1669 = vpop.f32.mrf.mxu0
          %v1670 = vadd.f32 %v1501, %v1669
          %v1671 = vpop.f32.mrf.mxu0
          %v1672 = vadd.f32 %v1503, %v1671
          %1673 = vmatmul.bf16.gmra.mxu0 %v875
          %v1674 = vpop.f32.mrf.mxu0
          %v1675 = vadd.f32 %v1506, %v1674
          %v1676 = vpop.f32.mrf.mxu0
          %v1677 = vadd.f32 %v1508, %v1676
          %1678 = vmatmul.bf16.gmra.mxu0 %v879
          %v1679 = vpop.f32.mrf.mxu0
          %v1680 = vadd.f32 %v1511, %v1679
          %v1681 = vpop.f32.mrf.mxu0
          %v1682 = vadd.f32 %v1513, %v1681
          %1683 = vmatmul.bf16.gmra.mxu0 %v883
          %v1684 = vpop.f32.mrf.mxu0
          %v1685 = vadd.f32 %v1516, %v1684
          %v1686 = vpop.f32.mrf.mxu0
          %v1687 = vadd.f32 %v1518, %v1686
          %1688 = vmatmul.bf16.gmra.mxu0 %v887
          %v1689 = vpop.f32.mrf.mxu0
          %v1690 = vadd.f32 %v1521, %v1689
          %v1691 = vpop.f32.mrf.mxu0
          %v1692 = vadd.f32 %v1523, %v1691
          %1693 = vmatmul.bf16.gmra.mxu0 %v891
          %v1694 = vpop.f32.mrf.mxu0
          %v1695 = vadd.f32 %v1526, %v1694
          %v1696 = vpop.f32.mrf.mxu0
          %v1697 = vadd.f32 %v1528, %v1696
          %1698 = vmatmul.bf16.gmra.mxu0 %v895
          %v1699 = vpop.f32.mrf.mxu0
          %v1700 = vadd.f32 %v1531, %v1699
          %v1701 = vpop.f32.mrf.mxu0
          %v1702 = vadd.f32 %v1533, %v1701
          %1703 = vmatmul.bf16.gmra.mxu0 %v899
          %v1704 = vpop.f32.mrf.mxu0
          %v1705 = vadd.f32 %v1536, %v1704
          %v1706 = vpop.f32.mrf.mxu0
          %v1707 = vadd.f32 %v1538, %v1706
          %1708 = vmatmul.bf16.gmra.mxu0 %v903
          %v1709 = vpop.f32.mrf.mxu0
          %v1710 = vadd.f32 %v1541, %v1709
          %v1711 = vpop.f32.mrf.mxu0
          %v1712 = vadd.f32 %v1543, %v1711
          %1713 = vmatmul.bf16.gmra.mxu0 %v907
          %v1714 = vpop.f32.mrf.mxu0
          %v1715 = vadd.f32 %v1546, %v1714
          %v1716 = vpop.f32.mrf.mxu0
          %v1717 = vadd.f32 %v1548, %v1716
          %1718 = vmatmul.bf16.gmra.mxu0 %v911
          %v1719 = vpop.f32.mrf.mxu0
          %v1720 = vadd.f32 %v1551, %v1719
          %v1721 = vpop.f32.mrf.mxu0
          %v1722 = vadd.f32 %v1553, %v1721
          %1723 = vmatmul.bf16.gmra.mxu0 %v915
          %v1724 = vpop.f32.mrf.mxu0
          %v1725 = vadd.f32 %v1556, %v1724
          %v1726 = vpop.f32.mrf.mxu0
          %v1727 = vadd.f32 %v1558, %v1726
          %1728 = vmatmul.bf16.gmra.mxu0 %v919
          %v1729 = vpop.f32.mrf.mxu0
          %v1730 = vadd.f32 %v1561, %v1729
          %v1731 = vpop.f32.mrf.mxu0
          %v1732 = vadd.f32 %v1563, %v1731
          %1733 = vmatmul.bf16.gmra.mxu0 %v923
          %v1734 = vpop.f32.mrf.mxu0
          %v1735 = vadd.f32 %v1566, %v1734
          %v1736 = vpop.f32.mrf.mxu0
          %v1737 = vadd.f32 %v1568, %v1736
          %1738 = vmatmul.bf16.gmra.mxu0 %v927
          %v1739 = vpop.f32.mrf.mxu0
          %v1740 = vadd.f32 %v1571, %v1739
          %v1741 = vpop.f32.mrf.mxu0
          %v1742 = vadd.f32 %v1573, %v1741
          %1743 = vmatmul.bf16.gmra.mxu0 %v931
          %v1744 = vpop.f32.mrf.mxu0
          %v1745 = vadd.f32 %v1576, %v1744
          %v1746 = vpop.f32.mrf.mxu0
          %v1747 = vadd.f32 %v1578, %v1746
          %1748 = vmatmul.bf16.gmra.mxu0 %v935
          %v1749 = vpop.f32.mrf.mxu0
          %v1750 = vadd.f32 %v1581, %v1749
          %v1751 = vpop.f32.mrf.mxu0
          %v1752 = vadd.f32 %v1583, %v1751
          %1753 = vmatmul.bf16.gmra.mxu0 %v939
          %v1754 = vpop.f32.mrf.mxu0
          %v1755 = vadd.f32 %v1586, %v1754
          %v1756 = vpop.f32.mrf.mxu0
          %v1757 = vadd.f32 %v1588, %v1756
          %1758 = vmatmul.bf16.gmra.mxu0 %v943
          %v1759 = vpop.f32.mrf.mxu0
          %v1760 = vadd.f32 %v1591, %v1759
          %v1761 = vpop.f32.mrf.mxu0
          %v1762 = vadd.f32 %v1593, %v1761
          %1763 = vmatmul.bf16.gmra.mxu0 %v947
          %v1764 = vpop.f32.mrf.mxu0
          %v1765 = vadd.f32 %v1596, %v1764
          %v1766 = vpop.f32.mrf.mxu0
          %v1767 = vadd.f32 %v1598, %v1766
          %1768 = vmatmul.bf16.gmra.mxu0 %v951
          %v1769 = vpop.f32.mrf.mxu0
          %v1770 = vadd.f32 %v1601, %v1769
          %v1771 = vpop.f32.mrf.mxu0
          %v1772 = vadd.f32 %v1603, %v1771
          %1773 = vmatmul.bf16.gmra.mxu0 %v955
          %v1774 = vpop.f32.mrf.mxu0
          %v1775 = vadd.f32 %v1606, %v1774
          %v1776 = vpop.f32.mrf.mxu0
          %v1777 = vadd.f32 %v1608, %v1776
          %1778 = vmatmul.bf16.gmra.mxu0 %v959
          %v1779 = vpop.f32.mrf.mxu0
          %v1780 = vadd.f32 %v1611, %v1779
          %v1781 = vpop.f32.mrf.mxu0
          %v1782 = vadd.f32 %v1613, %v1781
          %1783 = vmatmul.bf16.gmra.mxu0 %v963
          %v1784 = vpop.f32.mrf.mxu0
          %v1785 = vadd.f32 %v1616, %v1784
          %v1786 = vpop.f32.mrf.mxu0
          %v1787 = vadd.f32 %v1618, %v1786
          %1788 = vmatmul.bf16.gmra.mxu0 %v967
          %v1789 = vpop.f32.mrf.mxu0
          %v1790 = vadd.f32 %v1621, %v1789
          %v1791 = vpop.f32.mrf.mxu0
          %v1792 = vadd.f32 %v1623, %v1791
          %1793 = vmatmul.bf16.gmra.mxu0 %v971
          %v1794 = vpop.f32.mrf.mxu0
          %v1795 = vadd.f32 %v1626, %v1794
          %v1796 = vpop.f32.mrf.mxu0
          %v1797 = vadd.f32 %v1628, %v1796
          %1798 = vmatmul.bf16.gmra.mxu0 %v975
          %v1799 = vpop.f32.mrf.mxu0
          %v1800 = vadd.f32 %v1631, %v1799
          %v1801 = vpop.f32.mrf.mxu0
          %v1802 = vadd.f32 %v1633, %v1801
          %1803 = vdwg.mxu0
          %1804 = vmatpush.bf16.msra.mxu0 %v1264
          %1805 = vmatpush.bf16.msra.mxu0 %v1263
          %1806 = vmatpush.bf16.msra.mxu0 %v1262
          %1807 = vmatpush.bf16.msra.mxu0 %v1261
          %1808 = vmatpush.bf16.msra.mxu0 %v1260
          %1809 = vmatpush.bf16.msra.mxu0 %v1259
          %1810 = vmatpush.bf16.msra.mxu0 %v1258
          %1811 = vmatpush.bf16.msra.mxu0 %v1257
          %1812 = vmatmul.bf16.gmra.mxu0 %v852
          %v1813 = vpop.f32.mrf.mxu0
          %v1814 = vadd.f32 %v1645, %v1813
          %v1815 = vpop.f32.mrf.mxu0
          %v1816 = vadd.f32 %v1647, %v1815
          %1817 = vmatmul.bf16.gmra.mxu0 %v856
          %v1818 = vpop.f32.mrf.mxu0
          %v1819 = vadd.f32 %v1650, %v1818
          %v1820 = vpop.f32.mrf.mxu0
          %v1821 = vadd.f32 %v1652, %v1820
          %1822 = vmatmul.bf16.gmra.mxu0 %v860
          %v1823 = vpop.f32.mrf.mxu0
          %v1824 = vadd.f32 %v1655, %v1823
          %v1825 = vpop.f32.mrf.mxu0
          %v1826 = vadd.f32 %v1657, %v1825
          %1827 = vmatmul.bf16.gmra.mxu0 %v864
          %v1828 = vpop.f32.mrf.mxu0
          %v1829 = vadd.f32 %v1660, %v1828
          %v1830 = vpop.f32.mrf.mxu0
          %v1831 = vadd.f32 %v1662, %v1830
          %1832 = vmatmul.bf16.gmra.mxu0 %v868
          %v1833 = vpop.f32.mrf.mxu0
          %v1834 = vadd.f32 %v1665, %v1833
          %v1835 = vpop.f32.mrf.mxu0
          %v1836 = vadd.f32 %v1667, %v1835
          %1837 = vmatmul.bf16.gmra.mxu0 %v872
          %v1838 = vpop.f32.mrf.mxu0
          %v1839 = vadd.f32 %v1670, %v1838
          %v1840 = vpop.f32.mrf.mxu0
          %v1841 = vadd.f32 %v1672, %v1840
          %1842 = vmatmul.bf16.gmra.mxu0 %v876
          %v1843 = vpop.f32.mrf.mxu0
          %v1844 = vadd.f32 %v1675, %v1843
          %v1845 = vpop.f32.mrf.mxu0
          %v1846 = vadd.f32 %v1677, %v1845
          %1847 = vmatmul.bf16.gmra.mxu0 %v880
          %v1848 = vpop.f32.mrf.mxu0
          %v1849 = vadd.f32 %v1680, %v1848
          %v1850 = vpop.f32.mrf.mxu0
          %v1851 = vadd.f32 %v1682, %v1850
          %1852 = vmatmul.bf16.gmra.mxu0 %v884
          %v1853 = vpop.f32.mrf.mxu0
          %v1854 = vadd.f32 %v1685, %v1853
          %v1855 = vpop.f32.mrf.mxu0
          %v1856 = vadd.f32 %v1687, %v1855
          %1857 = vmatmul.bf16.gmra.mxu0 %v888
          %v1858 = vpop.f32.mrf.mxu0
          %v1859 = vadd.f32 %v1690, %v1858
          %v1860 = vpop.f32.mrf.mxu0
          %v1861 = vadd.f32 %v1692, %v1860
          %1862 = vmatmul.bf16.gmra.mxu0 %v892
          %v1863 = vpop.f32.mrf.mxu0
          %v1864 = vadd.f32 %v1695, %v1863
          %v1865 = vpop.f32.mrf.mxu0
          %v1866 = vadd.f32 %v1697, %v1865
          %1867 = vmatmul.bf16.gmra.mxu0 %v896
          %v1868 = vpop.f32.mrf.mxu0
          %v1869 = vadd.f32 %v1700, %v1868
          %v1870 = vpop.f32.mrf.mxu0
          %v1871 = vadd.f32 %v1702, %v1870
          %1872 = vmatmul.bf16.gmra.mxu0 %v900
          %v1873 = vpop.f32.mrf.mxu0
          %v1874 = vadd.f32 %v1705, %v1873
          %v1875 = vpop.f32.mrf.mxu0
          %v1876 = vadd.f32 %v1707, %v1875
          %1877 = vmatmul.bf16.gmra.mxu0 %v904
          %v1878 = vpop.f32.mrf.mxu0
          %v1879 = vadd.f32 %v1710, %v1878
          %v1880 = vpop.f32.mrf.mxu0
          %v1881 = vadd.f32 %v1712, %v1880
          %1882 = vmatmul.bf16.gmra.mxu0 %v908
          %v1883 = vpop.f32.mrf.mxu0
          %v1884 = vadd.f32 %v1715, %v1883
          %v1885 = vpop.f32.mrf.mxu0
          %v1886 = vadd.f32 %v1717, %v1885
          %1887 = vmatmul.bf16.gmra.mxu0 %v912
          %v1888 = vpop.f32.mrf.mxu0
          %v1889 = vadd.f32 %v1720, %v1888
          %v1890 = vpop.f32.mrf.mxu0
          %v1891 = vadd.f32 %v1722, %v1890
          %1892 = vmatmul.bf16.gmra.mxu0 %v916
          %v1893 = vpop.f32.mrf.mxu0
          %v1894 = vadd.f32 %v1725, %v1893
          %v1895 = vpop.f32.mrf.mxu0
          %v1896 = vadd.f32 %v1727, %v1895
          %1897 = vmatmul.bf16.gmra.mxu0 %v920
          %v1898 = vpop.f32.mrf.mxu0
          %v1899 = vadd.f32 %v1730, %v1898
          %v1900 = vpop.f32.mrf.mxu0
          %v1901 = vadd.f32 %v1732, %v1900
          %1902 = vmatmul.bf16.gmra.mxu0 %v924
          %v1903 = vpop.f32.mrf.mxu0
          %v1904 = vadd.f32 %v1735, %v1903
          %v1905 = vpop.f32.mrf.mxu0
          %v1906 = vadd.f32 %v1737, %v1905
          %1907 = vmatmul.bf16.gmra.mxu0 %v928
          %v1908 = vpop.f32.mrf.mxu0
          %v1909 = vadd.f32 %v1740, %v1908
          %v1910 = vpop.f32.mrf.mxu0
          %v1911 = vadd.f32 %v1742, %v1910
          %1912 = vmatmul.bf16.gmra.mxu0 %v932
          %v1913 = vpop.f32.mrf.mxu0
          %v1914 = vadd.f32 %v1745, %v1913
          %v1915 = vpop.f32.mrf.mxu0
          %v1916 = vadd.f32 %v1747, %v1915
          %1917 = vmatmul.bf16.gmra.mxu0 %v936
          %v1918 = vpop.f32.mrf.mxu0
          %v1919 = vadd.f32 %v1750, %v1918
          %v1920 = vpop.f32.mrf.mxu0
          %v1921 = vadd.f32 %v1752, %v1920
          %1922 = vmatmul.bf16.gmra.mxu0 %v940
          %v1923 = vpop.f32.mrf.mxu0
          %v1924 = vadd.f32 %v1755, %v1923
          %v1925 = vpop.f32.mrf.mxu0
          %v1926 = vadd.f32 %v1757, %v1925
          %1927 = vmatmul.bf16.gmra.mxu0 %v944
          %v1928 = vpop.f32.mrf.mxu0
          %v1929 = vadd.f32 %v1760, %v1928
          %v1930 = vpop.f32.mrf.mxu0
          %v1931 = vadd.f32 %v1762, %v1930
          %1932 = vmatmul.bf16.gmra.mxu0 %v948
          %v1933 = vpop.f32.mrf.mxu0
          %v1934 = vadd.f32 %v1765, %v1933
          %v1935 = vpop.f32.mrf.mxu0
          %v1936 = vadd.f32 %v1767, %v1935
          %1937 = vmatmul.bf16.gmra.mxu0 %v952
          %v1938 = vpop.f32.mrf.mxu0
          %v1939 = vadd.f32 %v1770, %v1938
          %v1940 = vpop.f32.mrf.mxu0
          %v1941 = vadd.f32 %v1772, %v1940
          %1942 = vmatmul.bf16.gmra.mxu0 %v956
          %v1943 = vpop.f32.mrf.mxu0
          %v1944 = vadd.f32 %v1775, %v1943
          %v1945 = vpop.f32.mrf.mxu0
          %v1946 = vadd.f32 %v1777, %v1945
          %1947 = vmatmul.bf16.gmra.mxu0 %v960
          %v1948 = vpop.f32.mrf.mxu0
          %v1949 = vadd.f32 %v1780, %v1948
          %v1950 = vpop.f32.mrf.mxu0
          %v1951 = vadd.f32 %v1782, %v1950
          %1952 = vmatmul.bf16.gmra.mxu0 %v964
          %v1953 = vpop.f32.mrf.mxu0
          %v1954 = vadd.f32 %v1785, %v1953
          %v1955 = vpop.f32.mrf.mxu0
          %v1956 = vadd.f32 %v1787, %v1955
          %1957 = vmatmul.bf16.gmra.mxu0 %v968
          %v1958 = vpop.f32.mrf.mxu0
          %v1959 = vadd.f32 %v1790, %v1958
          %v1960 = vpop.f32.mrf.mxu0
          %v1961 = vadd.f32 %v1792, %v1960
          %1962 = vmatmul.bf16.gmra.mxu0 %v972
          %v1963 = vpop.f32.mrf.mxu0
          %v1964 = vadd.f32 %v1795, %v1963
          %v1965 = vpop.f32.mrf.mxu0
          %v1966 = vadd.f32 %v1797, %v1965
          %1967 = vmatmul.bf16.gmra.mxu0 %v976
          %v1968 = vpop.f32.mrf.mxu0
          %v1969 = vadd.f32 %v1800, %v1968
          %v1970 = vpop.f32.mrf.mxu0
          %v1971 = vadd.f32 %v1802, %v1970
          %1972 = vdwg.mxu0
          %v1973 = vmax.f32 %v1814, 0.0
          %v1974 = vmax.f32 %v1816, 0.0
          %v1975 = vmax.f32 %v1819, 0.0
          %v1976 = vmax.f32 %v1821, 0.0
          %v1977 = vmax.f32 %v1824, 0.0
          %v1978 = vmax.f32 %v1826, 0.0
          %v1979 = vmax.f32 %v1829, 0.0
          %v1980 = vmax.f32 %v1831, 0.0
          %v1981 = vmax.f32 %v1834, 0.0
          %v1982 = vmax.f32 %v1836, 0.0
          %v1983 = vmax.f32 %v1839, 0.0
          %v1984 = vmax.f32 %v1841, 0.0
          %v1985 = vmax.f32 %v1844, 0.0
          %v1986 = vmax.f32 %v1846, 0.0
          %v1987 = vmax.f32 %v1849, 0.0
          %v1988 = vmax.f32 %v1851, 0.0
          %v1989 = vmax.f32 %v1854, 0.0
          %v1990 = vmax.f32 %v1856, 0.0
          %v1991 = vmax.f32 %v1859, 0.0
          %v1992 = vmax.f32 %v1861, 0.0
          %v1993 = vmax.f32 %v1864, 0.0
          %v1994 = vmax.f32 %v1866, 0.0
          %v1995 = vmax.f32 %v1869, 0.0
          %v1996 = vmax.f32 %v1871, 0.0
          %v1997 = vmax.f32 %v1874, 0.0
          %v1998 = vmax.f32 %v1876, 0.0
          %v1999 = vmax.f32 %v1879, 0.0
          %v2000 = vmax.f32 %v1881, 0.0
          %v2001 = vmax.f32 %v1884, 0.0
          %v2002 = vmax.f32 %v1886, 0.0
          %v2003 = vmax.f32 %v1889, 0.0
          %v2004 = vmax.f32 %v1891, 0.0
          %v2005 = vmax.f32 %v1894, 0.0
          %v2006 = vmax.f32 %v1896, 0.0
          %v2007 = vmax.f32 %v1899, 0.0
          %v2008 = vmax.f32 %v1901, 0.0
          %v2009 = vmax.f32 %v1904, 0.0
          %v2010 = vmax.f32 %v1906, 0.0
          %v2011 = vmax.f32 %v1909, 0.0
          %v2012 = vmax.f32 %v1911, 0.0
          %v2013 = vmax.f32 %v1914, 0.0
          %v2014 = vmax.f32 %v1916, 0.0
          %v2015 = vmax.f32 %v1919, 0.0
          %v2016 = vmax.f32 %v1921, 0.0
          %v2017 = vmax.f32 %v1924, 0.0
          %v2018 = vmax.f32 %v1926, 0.0
          %v2019 = vmax.f32 %v1929, 0.0
          %v2020 = vmax.f32 %v1931, 0.0
          %v2021 = vmax.f32 %v1934, 0.0
          %v2022 = vmax.f32 %v1936, 0.0
          %v2023 = vmax.f32 %v1939, 0.0
          %v2024 = vmax.f32 %v1941, 0.0
          %v2025 = vmax.f32 %v1944, 0.0
          %v2026 = vmax.f32 %v1946, 0.0
          %v2027 = vmax.f32 %v1949, 0.0
          %v2028 = vmax.f32 %v1951, 0.0
          %v2029 = vmax.f32 %v1954, 0.0
          %v2030 = vmax.f32 %v1956, 0.0
          %v2031 = vmax.f32 %v1959, 0.0
          %v2032 = vmax.f32 %v1961, 0.0
          %v2033 = vmax.f32 %v1964, 0.0
          %v2034 = vmax.f32 %v1966, 0.0
          %v2035 = vmax.f32 %v1969, 0.0
          %v2036 = vmax.f32 %v1971, 0.0
          %v2037 = vpack.c.bf16 %v1974, %v1973
          %v2038 = vpack.c.bf16 %v1976, %v1975
          %v2039 = vpack.c.bf16 %v1978, %v1977
          %v2040 = vpack.c.bf16 %v1980, %v1979
          %v2041 = vpack.c.bf16 %v1982, %v1981
          %v2042 = vpack.c.bf16 %v1984, %v1983
          %v2043 = vpack.c.bf16 %v1986, %v1985
          %v2044 = vpack.c.bf16 %v1988, %v1987
          %v2045 = vpack.c.bf16 %v1990, %v1989
          %v2046 = vpack.c.bf16 %v1992, %v1991
          %v2047 = vpack.c.bf16 %v1994, %v1993
          %v2048 = vpack.c.bf16 %v1996, %v1995
          %v2049 = vpack.c.bf16 %v1998, %v1997
          %v2050 = vpack.c.bf16 %v2000, %v1999
          %v2051 = vpack.c.bf16 %v2002, %v2001
          %v2052 = vpack.c.bf16 %v2004, %v2003
          %v2053 = vpack.c.bf16 %v2006, %v2005
          %v2054 = vpack.c.bf16 %v2008, %v2007
          %v2055 = vpack.c.bf16 %v2010, %v2009
          %v2056 = vpack.c.bf16 %v2012, %v2011
          %v2057 = vpack.c.bf16 %v2014, %v2013
          %v2058 = vpack.c.bf16 %v2016, %v2015
          %v2059 = vpack.c.bf16 %v2018, %v2017
          %v2060 = vpack.c.bf16 %v2020, %v2019
          %v2061 = vpack.c.bf16 %v2022, %v2021
          %v2062 = vpack.c.bf16 %v2024, %v2023
          %v2063 = vpack.c.bf16 %v2026, %v2025
          %v2064 = vpack.c.bf16 %v2028, %v2027
          %v2065 = vpack.c.bf16 %v2030, %v2029
          %v2066 = vpack.c.bf16 %v2032, %v2031
          %v2067 = vpack.c.bf16 %v2034, %v2033
          %v2068 = vpack.c.bf16 %v2036, %v2035
          %v2069 = vld [vmem:[#allocation8] sm:$0xf]
          %v2070 = vld [vmem:[#allocation8 + $0x4] sm:$0xf]
          %v2071 = vld [vmem:[#allocation8 + $0x8] sm:$0xf]
          %v2072 = vld [vmem:[#allocation8 + $0xc] sm:$0xf]
          %v2073 = vld [vmem:[#allocation8 + $0x10] sm:$0xf]
          %v2074 = vld [vmem:[#allocation8 + $0x14] sm:$0xf]
          %v2075 = vld [vmem:[#allocation8 + $0x18] sm:$0xf]
          %v2076 = vld [vmem:[#allocation8 + $0x1c] sm:$0xf]
          %v2077 = vld [vmem:[#allocation8 + $0x20] sm:$0xf]
          %v2078 = vld [vmem:[#allocation8 + $0x24] sm:$0xf]
          %v2079 = vld [vmem:[#allocation8 + $0x28] sm:$0xf]
          %v2080 = vld [vmem:[#allocation8 + $0x2c] sm:$0xf]
          %v2081 = vld [vmem:[#allocation8 + $0x30] sm:$0xf]
          %v2082 = vld [vmem:[#allocation8 + $0x34] sm:$0xf]
          %v2083 = vld [vmem:[#allocation8 + $0x38] sm:$0xf]
          %v2084 = vld [vmem:[#allocation8 + $0x3c] sm:$0xf]
          %v2101 = vunpack.c.l.b16 %v2069
          %v2102 = vunpack.c.l.b16 %v2070
          %v2103 = vunpack.c.l.b16 %v2071
          %v2104 = vunpack.c.l.b16 %v2072
          %v2105 = vunpack.c.l.b16 %v2073
          %v2106 = vunpack.c.l.b16 %v2074
          %v2107 = vunpack.c.l.b16 %v2075
          %v2108 = vunpack.c.l.b16 %v2076
          %v2109 = vunpack.c.l.b16 %v2077
          %v2110 = vunpack.c.l.b16 %v2078
          %v2111 = vunpack.c.l.b16 %v2079
          %v2112 = vunpack.c.l.b16 %v2080
          %v2113 = vunpack.c.l.b16 %v2081
          %v2114 = vunpack.c.l.b16 %v2082
          %v2115 = vunpack.c.l.b16 %v2083
          %v2116 = vunpack.c.l.b16 %v2084
          %v2117 = vpack.c.b16 %v2102, %v2101
          %v2118 = vpack.c.b16 %v2104, %v2103
          %v2119 = vpack.c.b16 %v2106, %v2105
          %v2120 = vpack.c.b16 %v2108, %v2107
          %v2121 = vpack.c.b16 %v2110, %v2109
          %v2122 = vpack.c.b16 %v2112, %v2111
          %v2123 = vpack.c.b16 %v2114, %v2113
          %v2124 = vpack.c.b16 %v2116, %v2115
          %2133 = vmatpush.bf16.msra.mxu0 %v2124
          %2134 = vmatpush.bf16.msra.mxu0 %v2123
          %2135 = vmatpush.bf16.msra.mxu0 %v2122
          %2136 = vmatpush.bf16.msra.mxu0 %v2121
          %2137 = vmatpush.bf16.msra.mxu0 %v2120
          %2138 = vmatpush.bf16.msra.mxu0 %v2119
          %2139 = vmatpush.bf16.msra.mxu0 %v2118
          %2140 = vmatpush.bf16.msra.mxu0 %v2117
          %2141 = vmatmul.bf16.gmra.mxu0 %v2037
          %v2142 = vpop.f32.mrf.mxu0
          %v2143 = vadd.f32 0.0, %v2142
          %v2144 = vpop.f32.mrf.mxu0
          %v2145 = vadd.f32 0.0, %v2144
          %2146 = vmatmul.bf16.gmra.mxu0 %v2038
          %v2147 = vpop.f32.mrf.mxu0
          %v2148 = vadd.f32 0.0, %v2147
          %v2149 = vpop.f32.mrf.mxu0
          %v2150 = vadd.f32 0.0, %v2149
          %2151 = vmatmul.bf16.gmra.mxu0 %v2039
          %v2152 = vpop.f32.mrf.mxu0
          %v2153 = vadd.f32 0.0, %v2152
          %v2154 = vpop.f32.mrf.mxu0
          %v2155 = vadd.f32 0.0, %v2154
          %2156 = vmatmul.bf16.gmra.mxu0 %v2040
          %v2157 = vpop.f32.mrf.mxu0
          %v2158 = vadd.f32 0.0, %v2157
          %v2159 = vpop.f32.mrf.mxu0
          %v2160 = vadd.f32 0.0, %v2159
          %2161 = vmatmul.bf16.gmra.mxu0 %v2041
          %v2162 = vpop.f32.mrf.mxu0
          %v2163 = vadd.f32 0.0, %v2162
          %v2164 = vpop.f32.mrf.mxu0
          %v2165 = vadd.f32 0.0, %v2164
          %2166 = vmatmul.bf16.gmra.mxu0 %v2042
          %v2167 = vpop.f32.mrf.mxu0
          %v2168 = vadd.f32 0.0, %v2167
          %v2169 = vpop.f32.mrf.mxu0
          %v2170 = vadd.f32 0.0, %v2169
          %2171 = vmatmul.bf16.gmra.mxu0 %v2043
          %v2172 = vpop.f32.mrf.mxu0
          %v2173 = vadd.f32 0.0, %v2172
          %v2174 = vpop.f32.mrf.mxu0
          %v2175 = vadd.f32 0.0, %v2174
          %2176 = vmatmul.bf16.gmra.mxu0 %v2044
          %v2177 = vpop.f32.mrf.mxu0
          %v2178 = vadd.f32 0.0, %v2177
          %v2179 = vpop.f32.mrf.mxu0
          %v2180 = vadd.f32 0.0, %v2179
          %2181 = vmatmul.bf16.gmra.mxu0 %v2045
          %v2182 = vpop.f32.mrf.mxu0
          %v2183 = vadd.f32 0.0, %v2182
          %v2184 = vpop.f32.mrf.mxu0
          %v2185 = vadd.f32 0.0, %v2184
          %2186 = vmatmul.bf16.gmra.mxu0 %v2046
          %v2187 = vpop.f32.mrf.mxu0
          %v2188 = vadd.f32 0.0, %v2187
          %v2189 = vpop.f32.mrf.mxu0
          %v2190 = vadd.f32 0.0, %v2189
          %2191 = vmatmul.bf16.gmra.mxu0 %v2047
          %v2192 = vpop.f32.mrf.mxu0
          %v2193 = vadd.f32 0.0, %v2192
          %v2194 = vpop.f32.mrf.mxu0
          %v2195 = vadd.f32 0.0, %v2194
          %2196 = vmatmul.bf16.gmra.mxu0 %v2048
          %v2197 = vpop.f32.mrf.mxu0
          %v2198 = vadd.f32 0.0, %v2197
          %v2199 = vpop.f32.mrf.mxu0
          %v2200 = vadd.f32 0.0, %v2199
          %2201 = vmatmul.bf16.gmra.mxu0 %v2049
          %v2202 = vpop.f32.mrf.mxu0
          %v2203 = vadd.f32 0.0, %v2202
          %v2204 = vpop.f32.mrf.mxu0
          %v2205 = vadd.f32 0.0, %v2204
          %2206 = vmatmul.bf16.gmra.mxu0 %v2050
          %v2207 = vpop.f32.mrf.mxu0
          %v2208 = vadd.f32 0.0, %v2207
          %v2209 = vpop.f32.mrf.mxu0
          %v2210 = vadd.f32 0.0, %v2209
          %2211 = vmatmul.bf16.gmra.mxu0 %v2051
          %v2212 = vpop.f32.mrf.mxu0
          %v2213 = vadd.f32 0.0, %v2212
          %v2214 = vpop.f32.mrf.mxu0
          %v2215 = vadd.f32 0.0, %v2214
          %2216 = vmatmul.bf16.gmra.mxu0 %v2052
          %v2217 = vpop.f32.mrf.mxu0
          %v2218 = vadd.f32 0.0, %v2217
          %v2219 = vpop.f32.mrf.mxu0
          %v2220 = vadd.f32 0.0, %v2219
          %2221 = vmatmul.bf16.gmra.mxu0 %v2053
          %v2222 = vpop.f32.mrf.mxu0
          %v2223 = vadd.f32 0.0, %v2222
          %v2224 = vpop.f32.mrf.mxu0
          %v2225 = vadd.f32 0.0, %v2224
          %2226 = vmatmul.bf16.gmra.mxu0 %v2054
          %v2227 = vpop.f32.mrf.mxu0
          %v2228 = vadd.f32 0.0, %v2227
          %v2229 = vpop.f32.mrf.mxu0
          %v2230 = vadd.f32 0.0, %v2229
          %2231 = vmatmul.bf16.gmra.mxu0 %v2055
          %v2232 = vpop.f32.mrf.mxu0
          %v2233 = vadd.f32 0.0, %v2232
          %v2234 = vpop.f32.mrf.mxu0
          %v2235 = vadd.f32 0.0, %v2234
          %2236 = vmatmul.bf16.gmra.mxu0 %v2056
          %v2237 = vpop.f32.mrf.mxu0
          %v2238 = vadd.f32 0.0, %v2237
          %v2239 = vpop.f32.mrf.mxu0
          %v2240 = vadd.f32 0.0, %v2239
          %2241 = vmatmul.bf16.gmra.mxu0 %v2057
          %v2242 = vpop.f32.mrf.mxu0
          %v2243 = vadd.f32 0.0, %v2242
          %v2244 = vpop.f32.mrf.mxu0
          %v2245 = vadd.f32 0.0, %v2244
          %2246 = vmatmul.bf16.gmra.mxu0 %v2058
          %v2247 = vpop.f32.mrf.mxu0
          %v2248 = vadd.f32 0.0, %v2247
          %v2249 = vpop.f32.mrf.mxu0
          %v2250 = vadd.f32 0.0, %v2249
          %2251 = vmatmul.bf16.gmra.mxu0 %v2059
          %v2252 = vpop.f32.mrf.mxu0
          %v2253 = vadd.f32 0.0, %v2252
          %v2254 = vpop.f32.mrf.mxu0
          %v2255 = vadd.f32 0.0, %v2254
          %2256 = vmatmul.bf16.gmra.mxu0 %v2060
          %v2257 = vpop.f32.mrf.mxu0
          %v2258 = vadd.f32 0.0, %v2257
          %v2259 = vpop.f32.mrf.mxu0
          %v2260 = vadd.f32 0.0, %v2259
          %2261 = vmatmul.bf16.gmra.mxu0 %v2061
          %v2262 = vpop.f32.mrf.mxu0
          %v2263 = vadd.f32 0.0, %v2262
          %v2264 = vpop.f32.mrf.mxu0
          %v2265 = vadd.f32 0.0, %v2264
          %2266 = vmatmul.bf16.gmra.mxu0 %v2062
          %v2267 = vpop.f32.mrf.mxu0
          %v2268 = vadd.f32 0.0, %v2267
          %v2269 = vpop.f32.mrf.mxu0
          %v2270 = vadd.f32 0.0, %v2269
          %2271 = vmatmul.bf16.gmra.mxu0 %v2063
          %v2272 = vpop.f32.mrf.mxu0
          %v2273 = vadd.f32 0.0, %v2272
          %v2274 = vpop.f32.mrf.mxu0
          %v2275 = vadd.f32 0.0, %v2274
          %2276 = vmatmul.bf16.gmra.mxu0 %v2064
          %v2277 = vpop.f32.mrf.mxu0
          %v2278 = vadd.f32 0.0, %v2277
          %v2279 = vpop.f32.mrf.mxu0
          %v2280 = vadd.f32 0.0, %v2279
          %2281 = vmatmul.bf16.gmra.mxu0 %v2065
          %v2282 = vpop.f32.mrf.mxu0
          %v2283 = vadd.f32 0.0, %v2282
          %v2284 = vpop.f32.mrf.mxu0
          %v2285 = vadd.f32 0.0, %v2284
          %2286 = vmatmul.bf16.gmra.mxu0 %v2066
          %v2287 = vpop.f32.mrf.mxu0
          %v2288 = vadd.f32 0.0, %v2287
          %v2289 = vpop.f32.mrf.mxu0
          %v2290 = vadd.f32 0.0, %v2289
          %2291 = vmatmul.bf16.gmra.mxu0 %v2067
          %v2292 = vpop.f32.mrf.mxu0
          %v2293 = vadd.f32 0.0, %v2292
          %v2294 = vpop.f32.mrf.mxu0
          %v2295 = vadd.f32 0.0, %v2294
          %2296 = vmatmul.bf16.gmra.mxu0 %v2068
          %v2297 = vpop.f32.mrf.mxu0
          %v2298 = vadd.f32 0.0, %v2297
          %v2299 = vpop.f32.mrf.mxu0
          %v2300 = vadd.f32 0.0, %v2299
          %2301 = vdwg.mxu0
          %v2302 = vpack.c.bf16 %v2143, %v2143
          %v2303 = vpack.c.bf16 %v2145, %v2145
          %v2304 = vpack.c.bf16 %v2148, %v2148
          %v2305 = vpack.c.bf16 %v2150, %v2150
          %v2306 = vpack.c.bf16 %v2153, %v2153
          %v2307 = vpack.c.bf16 %v2155, %v2155
          %v2308 = vpack.c.bf16 %v2158, %v2158
          %v2309 = vpack.c.bf16 %v2160, %v2160
          %v2310 = vpack.c.bf16 %v2163, %v2163
          %v2311 = vpack.c.bf16 %v2165, %v2165
          %v2312 = vpack.c.bf16 %v2168, %v2168
          %v2313 = vpack.c.bf16 %v2170, %v2170
          %v2314 = vpack.c.bf16 %v2173, %v2173
          %v2315 = vpack.c.bf16 %v2175, %v2175
          %v2316 = vpack.c.bf16 %v2178, %v2178
          %v2317 = vpack.c.bf16 %v2180, %v2180
          %v2318 = vpack.c.bf16 %v2183, %v2183
          %v2319 = vpack.c.bf16 %v2185, %v2185
          %v2320 = vpack.c.bf16 %v2188, %v2188
          %v2321 = vpack.c.bf16 %v2190, %v2190
          %v2322 = vpack.c.bf16 %v2193, %v2193
          %v2323 = vpack.c.bf16 %v2195, %v2195
          %v2324 = vpack.c.bf16 %v2198, %v2198
          %v2325 = vpack.c.bf16 %v2200, %v2200
          %v2326 = vpack.c.bf16 %v2203, %v2203
          %v2327 = vpack.c.bf16 %v2205, %v2205
          %v2328 = vpack.c.bf16 %v2208, %v2208
          %v2329 = vpack.c.bf16 %v2210, %v2210
          %v2330 = vpack.c.bf16 %v2213, %v2213
          %v2331 = vpack.c.bf16 %v2215, %v2215
          %v2332 = vpack.c.bf16 %v2218, %v2218
          %v2333 = vpack.c.bf16 %v2220, %v2220
          %v2334 = vpack.c.bf16 %v2223, %v2223
          %v2335 = vpack.c.bf16 %v2225, %v2225
          %v2336 = vpack.c.bf16 %v2228, %v2228
          %v2337 = vpack.c.bf16 %v2230, %v2230
          %v2338 = vpack.c.bf16 %v2233, %v2233
          %v2339 = vpack.c.bf16 %v2235, %v2235
          %v2340 = vpack.c.bf16 %v2238, %v2238
          %v2341 = vpack.c.bf16 %v2240, %v2240
          %v2342 = vpack.c.bf16 %v2243, %v2243
          %v2343 = vpack.c.bf16 %v2245, %v2245
          %v2344 = vpack.c.bf16 %v2248, %v2248
          %v2345 = vpack.c.bf16 %v2250, %v2250
          %v2346 = vpack.c.bf16 %v2253, %v2253
          %v2347 = vpack.c.bf16 %v2255, %v2255
          %v2348 = vpack.c.bf16 %v2258, %v2258
          %v2349 = vpack.c.bf16 %v2260, %v2260
          %v2350 = vpack.c.bf16 %v2263, %v2263
          %v2351 = vpack.c.bf16 %v2265, %v2265
          %v2352 = vpack.c.bf16 %v2268, %v2268
          %v2353 = vpack.c.bf16 %v2270, %v2270
          %v2354 = vpack.c.bf16 %v2273, %v2273
          %v2355 = vpack.c.bf16 %v2275, %v2275
          %v2356 = vpack.c.bf16 %v2278, %v2278
          %v2357 = vpack.c.bf16 %v2280, %v2280
          %v2358 = vpack.c.bf16 %v2283, %v2283
          %v2359 = vpack.c.bf16 %v2285, %v2285
          %v2360 = vpack.c.bf16 %v2288, %v2288
          %v2361 = vpack.c.bf16 %v2290, %v2290
          %v2362 = vpack.c.bf16 %v2293, %v2293
          %v2363 = vpack.c.bf16 %v2295, %v2295
          %v2364 = vpack.c.bf16 %v2298, %v2298
          %v2365 = vpack.c.bf16 %v2300, %v2300
          %s2366 = smul.addr %s260, 4
          %s2367 = scalar_lea.vmem [#allocation2], %s2366
          %2368 = vst [vmem:[%s2367] sm:$0xf] %v2302
          %2369 = vst [vmem:[%s2367 + $0x4] sm:$0xf] %v2303
          %2370 = vst [vmem:[%s2367 + $0x8] sm:$0xf] %v2304
          %2371 = vst [vmem:[%s2367 + $0xc] sm:$0xf] %v2305
          %2372 = vst [vmem:[%s2367 + $0x10] sm:$0xf] %v2306
          %2373 = vst [vmem:[%s2367 + $0x14] sm:$0xf] %v2307
          %2374 = vst [vmem:[%s2367 + $0x18] sm:$0xf] %v2308
          %2375 = vst [vmem:[%s2367 + $0x1c] sm:$0xf] %v2309
          %2376 = vst [vmem:[%s2367 + $0x20] sm:$0xf] %v2310
          %2377 = vst [vmem:[%s2367 + $0x24] sm:$0xf] %v2311
          %2378 = vst [vmem:[%s2367 + $0x28] sm:$0xf] %v2312
          %2379 = vst [vmem:[%s2367 + $0x2c] sm:$0xf] %v2313
          %2380 = vst [vmem:[%s2367 + $0x30] sm:$0xf] %v2314
          %2381 = vst [vmem:[%s2367 + $0x34] sm:$0xf] %v2315
          %2382 = vst [vmem:[%s2367 + $0x38] sm:$0xf] %v2316
          %2383 = vst [vmem:[%s2367 + $0x3c] sm:$0xf] %v2317
          %2384 = vst [vmem:[%s2367 + $0x40] sm:$0xf] %v2318
          %2385 = vst [vmem:[%s2367 + $0x44] sm:$0xf] %v2319
          %2386 = vst [vmem:[%s2367 + $0x48] sm:$0xf] %v2320
          %2387 = vst [vmem:[%s2367 + $0x4c] sm:$0xf] %v2321
          %2388 = vst [vmem:[%s2367 + $0x50] sm:$0xf] %v2322
          %2389 = vst [vmem:[%s2367 + $0x54] sm:$0xf] %v2323
          %2390 = vst [vmem:[%s2367 + $0x58] sm:$0xf] %v2324
          %2391 = vst [vmem:[%s2367 + $0x5c] sm:$0xf] %v2325
          %2392 = vst [vmem:[%s2367 + $0x60] sm:$0xf] %v2326
          %2393 = vst [vmem:[%s2367 + $0x64] sm:$0xf] %v2327
          %2394 = vst [vmem:[%s2367 + $0x68] sm:$0xf] %v2328
          %2395 = vst [vmem:[%s2367 + $0x6c] sm:$0xf] %v2329
          %2396 = vst [vmem:[%s2367 + $0x70] sm:$0xf] %v2330
          %2397 = vst [vmem:[%s2367 + $0x74] sm:$0xf] %v2331
          %2398 = vst [vmem:[%s2367 + $0x78] sm:$0xf] %v2332
          %2399 = vst [vmem:[%s2367 + $0x7c] sm:$0xf] %v2333
          %2400 = vst [vmem:[%s2367 + $0x80] sm:$0xf] %v2334
          %2401 = vst [vmem:[%s2367 + $0x84] sm:$0xf] %v2335
          %2402 = vst [vmem:[%s2367 + $0x88] sm:$0xf] %v2336
          %2403 = vst [vmem:[%s2367 + $0x8c] sm:$0xf] %v2337
          %2404 = vst [vmem:[%s2367 + $0x90] sm:$0xf] %v2338
          %2405 = vst [vmem:[%s2367 + $0x94] sm:$0xf] %v2339
          %2406 = vst [vmem:[%s2367 + $0x98] sm:$0xf] %v2340
          %2407 = vst [vmem:[%s2367 + $0x9c] sm:$0xf] %v2341
          %2408 = vst [vmem:[%s2367 + $0xa0] sm:$0xf] %v2342
          %2409 = vst [vmem:[%s2367 + $0xa4] sm:$0xf] %v2343
          %2410 = vst [vmem:[%s2367 + $0xa8] sm:$0xf] %v2344
          %2411 = vst [vmem:[%s2367 + $0xac] sm:$0xf] %v2345
          %2412 = vst [vmem:[%s2367 + $0xb0] sm:$0xf] %v2346
          %2413 = vst [vmem:[%s2367 + $0xb4] sm:$0xf] %v2347
          %2414 = vst [vmem:[%s2367 + $0xb8] sm:$0xf] %v2348
          %2415 = vst [vmem:[%s2367 + $0xbc] sm:$0xf] %v2349
          %2416 = vst [vmem:[%s2367 + $0xc0] sm:$0xf] %v2350
          %2417 = vst [vmem:[%s2367 + $0xc4] sm:$0xf] %v2351
          %2418 = vst [vmem:[%s2367 + $0xc8] sm:$0xf] %v2352
          %2419 = vst [vmem:[%s2367 + $0xcc] sm:$0xf] %v2353
          %2420 = vst [vmem:[%s2367 + $0xd0] sm:$0xf] %v2354
          %2421 = vst [vmem:[%s2367 + $0xd4] sm:$0xf] %v2355
          %2422 = vst [vmem:[%s2367 + $0xd8] sm:$0xf] %v2356
          %2423 = vst [vmem:[%s2367 + $0xdc] sm:$0xf] %v2357
          %2424 = vst [vmem:[%s2367 + $0xe0] sm:$0xf] %v2358
          %2425 = vst [vmem:[%s2367 + $0xe4] sm:$0xf] %v2359
          %2426 = vst [vmem:[%s2367 + $0xe8] sm:$0xf] %v2360
          %2427 = vst [vmem:[%s2367 + $0xec] sm:$0xf] %v2361
          %2428 = vst [vmem:[%s2367 + $0xf0] sm:$0xf] %v2362
          %2429 = vst [vmem:[%s2367 + $0xf4] sm:$0xf] %v2363
          %2430 = vst [vmem:[%s2367 + $0xf8] sm:$0xf] %v2364
          %2431 = vst [vmem:[%s2367 + $0xfc] sm:$0xf] %v2365
        $region56: #{tpu_custom_call.1} parent=39 // pred_fallthru
          _
        %p2432 = scmp.eq.s32.totalorder %s23, 1
        // Predicated region
        $region57: #{tpu_custom_call.1} parent=39 // pred_check
          %p2433 = pneg %p2432
        $region58: #{tpu_custom_call.1} parent=39 // pred_check_branch
          %2435 = sbr.rel (%p2433) target = $region60
        $region59: #{tpu_custom_call.1} parent=39 // pred_region
          %v2436 = vld [vmem:[#allocation2] sm:$0xf]
          %v2437 = vld [vmem:[#allocation2 + $0x4] sm:$0xf]
          %v2438 = vld [vmem:[#allocation2 + $0x8] sm:$0xf]
          %v2439 = vld [vmem:[#allocation2 + $0xc] sm:$0xf]
          %v2440 = vld [vmem:[#allocation2 + $0x10] sm:$0xf]
          %v2441 = vld [vmem:[#allocation2 + $0x14] sm:$0xf]
          %v2442 = vld [vmem:[#allocation2 + $0x18] sm:$0xf]
          %v2443 = vld [vmem:[#allocation2 + $0x1c] sm:$0xf]
          %v2444 = vld [vmem:[#allocation2 + $0x20] sm:$0xf]
          %v2445 = vld [vmem:[#allocation2 + $0x24] sm:$0xf]
          %v2446 = vld [vmem:[#allocation2 + $0x28] sm:$0xf]
          %v2447 = vld [vmem:[#allocation2 + $0x2c] sm:$0xf]
          %v2448 = vld [vmem:[#allocation2 + $0x30] sm:$0xf]
          %v2449 = vld [vmem:[#allocation2 + $0x34] sm:$0xf]
          %v2450 = vld [vmem:[#allocation2 + $0x38] sm:$0xf]
          %v2451 = vld [vmem:[#allocation2 + $0x3c] sm:$0xf]
          %v2452 = vld [vmem:[#allocation2 + $0x40] sm:$0xf]
          %v2453 = vld [vmem:[#allocation2 + $0x44] sm:$0xf]
          %v2454 = vld [vmem:[#allocation2 + $0x48] sm:$0xf]
          %v2455 = vld [vmem:[#allocation2 + $0x4c] sm:$0xf]
          %v2456 = vld [vmem:[#allocation2 + $0x50] sm:$0xf]
          %v2457 = vld [vmem:[#allocation2 + $0x54] sm:$0xf]
          %v2458 = vld [vmem:[#allocation2 + $0x58] sm:$0xf]
          %v2459 = vld [vmem:[#allocation2 + $0x5c] sm:$0xf]
          %v2460 = vld [vmem:[#allocation2 + $0x60] sm:$0xf]
          %v2461 = vld [vmem:[#allocation2 + $0x64] sm:$0xf]
          %v2462 = vld [vmem:[#allocation2 + $0x68] sm:$0xf]
          %v2463 = vld [vmem:[#allocation2 + $0x6c] sm:$0xf]
          %v2464 = vld [vmem:[#allocation2 + $0x70] sm:$0xf]
          %v2465 = vld [vmem:[#allocation2 + $0x74] sm:$0xf]
          %v2466 = vld [vmem:[#allocation2 + $0x78] sm:$0xf]
          %v2467 = vld [vmem:[#allocation2 + $0x7c] sm:$0xf]
          %v2468 = vld [vmem:[#allocation2 + $0x80] sm:$0xf]
          %v2469 = vld [vmem:[#allocation2 + $0x84] sm:$0xf]
          %v2470 = vld [vmem:[#allocation2 + $0x88] sm:$0xf]
          %v2471 = vld [vmem:[#allocation2 + $0x8c] sm:$0xf]
          %v2472 = vld [vmem:[#allocation2 + $0x90] sm:$0xf]
          %v2473 = vld [vmem:[#allocation2 + $0x94] sm:$0xf]
          %v2474 = vld [vmem:[#allocation2 + $0x98] sm:$0xf]
          %v2475 = vld [vmem:[#allocation2 + $0x9c] sm:$0xf]
          %v2476 = vld [vmem:[#allocation2 + $0xa0] sm:$0xf]
          %v2477 = vld [vmem:[#allocation2 + $0xa4] sm:$0xf]
          %v2478 = vld [vmem:[#allocation2 + $0xa8] sm:$0xf]
          %v2479 = vld [vmem:[#allocation2 + $0xac] sm:$0xf]
          %v2480 = vld [vmem:[#allocation2 + $0xb0] sm:$0xf]
          %v2481 = vld [vmem:[#allocation2 + $0xb4] sm:$0xf]
          %v2482 = vld [vmem:[#allocation2 + $0xb8] sm:$0xf]
          %v2483 = vld [vmem:[#allocation2 + $0xbc] sm:$0xf]
          %v2484 = vld [vmem:[#allocation2 + $0xc0] sm:$0xf]
          %v2485 = vld [vmem:[#allocation2 + $0xc4] sm:$0xf]
          %v2486 = vld [vmem:[#allocation2 + $0xc8] sm:$0xf]
          %v2487 = vld [vmem:[#allocation2 + $0xcc] sm:$0xf]
          %v2488 = vld [vmem:[#allocation2 + $0xd0] sm:$0xf]
          %v2489 = vld [vmem:[#allocation2 + $0xd4] sm:$0xf]
          %v2490 = vld [vmem:[#allocation2 + $0xd8] sm:$0xf]
          %v2491 = vld [vmem:[#allocation2 + $0xdc] sm:$0xf]
          %v2492 = vld [vmem:[#allocation2 + $0xe0] sm:$0xf]
          %v2493 = vld [vmem:[#allocation2 + $0xe4] sm:$0xf]
          %v2494 = vld [vmem:[#allocation2 + $0xe8] sm:$0xf]
          %v2495 = vld [vmem:[#allocation2 + $0xec] sm:$0xf]
          %v2496 = vld [vmem:[#allocation2 + $0xf0] sm:$0xf]
          %v2497 = vld [vmem:[#allocation2 + $0xf4] sm:$0xf]
          %v2498 = vld [vmem:[#allocation2 + $0xf8] sm:$0xf]
          %v2499 = vld [vmem:[#allocation2 + $0xfc] sm:$0xf]
          %v2500 = vld [vmem:[%s4] sm:$0x1]
          %v2502 = vperm.slane %v2500, 0
          %v2632 = vunpack.c.l.b16 %v265
          %v2633 = vunpack.c.h.b16 %v265
          %v2634 = vunpack.c.l.b16 %v266
          %v2635 = vunpack.c.h.b16 %v266
          %v2636 = vunpack.c.l.b16 %v267
          %v2637 = vunpack.c.h.b16 %v267
          %v2638 = vunpack.c.l.b16 %v268
          %v2639 = vunpack.c.h.b16 %v268
          %v2640 = vunpack.c.l.b16 %v269
          %v2641 = vunpack.c.h.b16 %v269
          %v2642 = vunpack.c.l.b16 %v270
          %v2643 = vunpack.c.h.b16 %v270
          %v2644 = vunpack.c.l.b16 %v271
          %v2645 = vunpack.c.h.b16 %v271
          %v2646 = vunpack.c.l.b16 %v272
          %v2647 = vunpack.c.h.b16 %v272
          %v2648 = vunpack.c.l.b16 %v273
          %v2649 = vunpack.c.h.b16 %v273
          %v2650 = vunpack.c.l.b16 %v274
          %v2651 = vunpack.c.h.b16 %v274
          %v2652 = vunpack.c.l.b16 %v275
          %v2653 = vunpack.c.h.b16 %v275
          %v2654 = vunpack.c.l.b16 %v276
          %v2655 = vunpack.c.h.b16 %v276
          %v2656 = vunpack.c.l.b16 %v277
          %v2657 = vunpack.c.h.b16 %v277
          %v2658 = vunpack.c.l.b16 %v278
          %v2659 = vunpack.c.h.b16 %v278
          %v2660 = vunpack.c.l.b16 %v279
          %v2661 = vunpack.c.h.b16 %v279
          %v2662 = vunpack.c.l.b16 %v280
          %v2663 = vunpack.c.h.b16 %v280
          %v2664 = vunpack.c.l.b16 %v281
          %v2665 = vunpack.c.h.b16 %v281
          %v2666 = vunpack.c.l.b16 %v282
          %v2667 = vunpack.c.h.b16 %v282
          %v2668 = vunpack.c.l.b16 %v283
          %v2669 = vunpack.c.h.b16 %v283
          %v2670 = vunpack.c.l.b16 %v284
          %v2671 = vunpack.c.h.b16 %v284
          %v2672 = vunpack.c.l.b16 %v285
          %v2673 = vunpack.c.h.b16 %v285
          %v2674 = vunpack.c.l.b16 %v286
          %v2675 = vunpack.c.h.b16 %v286
          %v2676 = vunpack.c.l.b16 %v287
          %v2677 = vunpack.c.h.b16 %v287
          %v2678 = vunpack.c.l.b16 %v288
          %v2679 = vunpack.c.h.b16 %v288
          %v2680 = vunpack.c.l.b16 %v289
          %v2681 = vunpack.c.h.b16 %v289
          %v2682 = vunpack.c.l.b16 %v290
          %v2683 = vunpack.c.h.b16 %v290
          %v2684 = vunpack.c.l.b16 %v291
          %v2685 = vunpack.c.h.b16 %v291
          %v2686 = vunpack.c.l.b16 %v292
          %v2687 = vunpack.c.h.b16 %v292
          %v2688 = vunpack.c.l.b16 %v293
          %v2689 = vunpack.c.h.b16 %v293
          %v2690 = vunpack.c.l.b16 %v294
          %v2691 = vunpack.c.h.b16 %v294
          %v2692 = vunpack.c.l.b16 %v295
          %v2693 = vunpack.c.h.b16 %v295
          %v2694 = vunpack.c.l.b16 %v296
          %v2695 = vunpack.c.h.b16 %v296
          %v2696 = vunpack.c.l.b16 %v297
          %v2697 = vunpack.c.h.b16 %v297
          %v2698 = vunpack.c.l.b16 %v298
          %v2699 = vunpack.c.h.b16 %v298
          %v2700 = vunpack.c.l.b16 %v299
          %v2701 = vunpack.c.h.b16 %v299
          %v2702 = vunpack.c.l.b16 %v300
          %v2703 = vunpack.c.h.b16 %v300
          %v2704 = vunpack.c.l.b16 %v301
          %v2705 = vunpack.c.h.b16 %v301
          %v2706 = vunpack.c.l.b16 %v302
          %v2707 = vunpack.c.h.b16 %v302
          %v2708 = vunpack.c.l.b16 %v303
          %v2709 = vunpack.c.h.b16 %v303
          %v2710 = vunpack.c.l.b16 %v304
          %v2711 = vunpack.c.h.b16 %v304
          %v2712 = vunpack.c.l.b16 %v305
          %v2713 = vunpack.c.h.b16 %v305
          %v2714 = vunpack.c.l.b16 %v306
          %v2715 = vunpack.c.h.b16 %v306
          %v2716 = vunpack.c.l.b16 %v307
          %v2717 = vunpack.c.h.b16 %v307
          %v2718 = vunpack.c.l.b16 %v308
          %v2719 = vunpack.c.h.b16 %v308
          %v2720 = vunpack.c.l.b16 %v309
          %v2721 = vunpack.c.h.b16 %v309
          %v2722 = vunpack.c.l.b16 %v310
          %v2723 = vunpack.c.h.b16 %v310
          %v2724 = vunpack.c.l.b16 %v311
          %v2725 = vunpack.c.h.b16 %v311
          %v2726 = vunpack.c.l.b16 %v312
          %v2727 = vunpack.c.h.b16 %v312
          %v2728 = vunpack.c.l.b16 %v313
          %v2729 = vunpack.c.h.b16 %v313
          %v2730 = vunpack.c.l.b16 %v314
          %v2731 = vunpack.c.h.b16 %v314
          %v2732 = vunpack.c.l.b16 %v315
          %v2733 = vunpack.c.h.b16 %v315
          %v2734 = vunpack.c.l.b16 %v316
          %v2735 = vunpack.c.h.b16 %v316
          %v2736 = vunpack.c.l.b16 %v317
          %v2737 = vunpack.c.h.b16 %v317
          %v2738 = vunpack.c.l.b16 %v318
          %v2739 = vunpack.c.h.b16 %v318
          %v2740 = vunpack.c.l.b16 %v319
          %v2741 = vunpack.c.h.b16 %v319
          %v2742 = vunpack.c.l.b16 %v320
          %v2743 = vunpack.c.h.b16 %v320
          %v2744 = vunpack.c.l.b16 %v321
          %v2745 = vunpack.c.h.b16 %v321
          %v2746 = vunpack.c.l.b16 %v322
          %v2747 = vunpack.c.h.b16 %v322
          %v2748 = vunpack.c.l.b16 %v323
          %v2749 = vunpack.c.h.b16 %v323
          %v2750 = vunpack.c.l.b16 %v324
          %v2751 = vunpack.c.h.b16 %v324
          %v2752 = vunpack.c.l.b16 %v325
          %v2753 = vunpack.c.h.b16 %v325
          %v2754 = vunpack.c.l.b16 %v326
          %v2755 = vunpack.c.h.b16 %v326
          %v2756 = vunpack.c.l.b16 %v327
          %v2757 = vunpack.c.h.b16 %v327
          %v2758 = vunpack.c.l.b16 %v328
          %v2759 = vunpack.c.h.b16 %v328
          %v2760 = vunpack.c.l.b16 %v329
          %v2761 = vunpack.c.h.b16 %v329
          %v2762 = vunpack.c.l.b16 %v330
          %v2763 = vunpack.c.h.b16 %v330
          %v2764 = vunpack.c.l.b16 %v331
          %v2765 = vunpack.c.h.b16 %v331
          %v2766 = vunpack.c.l.b16 %v332
          %v2767 = vunpack.c.h.b16 %v332
          %v2768 = vunpack.c.l.b16 %v333
          %v2769 = vunpack.c.h.b16 %v333
          %v2770 = vunpack.c.l.b16 %v334
          %v2771 = vunpack.c.h.b16 %v334
          %v2772 = vunpack.c.l.b16 %v335
          %v2773 = vunpack.c.h.b16 %v335
          %v2774 = vunpack.c.l.b16 %v336
          %v2775 = vunpack.c.h.b16 %v336
          %v2776 = vunpack.c.l.b16 %v337
          %v2777 = vunpack.c.h.b16 %v337
          %v2778 = vunpack.c.l.b16 %v338
          %v2779 = vunpack.c.h.b16 %v338
          %v2780 = vunpack.c.l.b16 %v339
          %v2781 = vunpack.c.h.b16 %v339
          %v2782 = vunpack.c.l.b16 %v340
          %v2783 = vunpack.c.h.b16 %v340
          %v2784 = vunpack.c.l.b16 %v341
          %v2785 = vunpack.c.h.b16 %v341
          %v2786 = vunpack.c.l.b16 %v342
          %v2787 = vunpack.c.h.b16 %v342
          %v2788 = vunpack.c.l.b16 %v343
          %v2789 = vunpack.c.h.b16 %v343
          %v2790 = vunpack.c.l.b16 %v344
          %v2791 = vunpack.c.h.b16 %v344
          %v2792 = vunpack.c.l.b16 %v345
          %v2793 = vunpack.c.h.b16 %v345
          %v2794 = vunpack.c.l.b16 %v346
          %v2795 = vunpack.c.h.b16 %v346
          %v2796 = vunpack.c.l.b16 %v347
          %v2797 = vunpack.c.h.b16 %v347
          %v2798 = vunpack.c.l.b16 %v348
          %v2799 = vunpack.c.h.b16 %v348
          %v2800 = vunpack.c.l.b16 %v349
          %v2801 = vunpack.c.h.b16 %v349
          %v2802 = vunpack.c.l.b16 %v350
          %v2803 = vunpack.c.h.b16 %v350
          %v2804 = vunpack.c.l.b16 %v351
          %v2805 = vunpack.c.h.b16 %v351
          %v2806 = vunpack.c.l.b16 %v352
          %v2807 = vunpack.c.h.b16 %v352
          %v2808 = vunpack.c.l.b16 %v353
          %v2809 = vunpack.c.h.b16 %v353
          %v2810 = vunpack.c.l.b16 %v354
          %v2811 = vunpack.c.h.b16 %v354
          %v2812 = vunpack.c.l.b16 %v355
          %v2813 = vunpack.c.h.b16 %v355
          %v2814 = vunpack.c.l.b16 %v356
          %v2815 = vunpack.c.h.b16 %v356
          %v2816 = vunpack.c.l.b16 %v357
          %v2817 = vunpack.c.h.b16 %v357
          %v2818 = vunpack.c.l.b16 %v358
          %v2819 = vunpack.c.h.b16 %v358
          %v2820 = vunpack.c.l.b16 %v359
          %v2821 = vunpack.c.h.b16 %v359
          %v2822 = vunpack.c.l.b16 %v360
          %v2823 = vunpack.c.h.b16 %v360
          %v2824 = vunpack.c.l.b16 %v361
          %v2825 = vunpack.c.h.b16 %v361
          %v2826 = vunpack.c.l.b16 %v362
          %v2827 = vunpack.c.h.b16 %v362
          %v2828 = vunpack.c.l.b16 %v363
          %v2829 = vunpack.c.h.b16 %v363
          %v2830 = vunpack.c.l.b16 %v364
          %v2831 = vunpack.c.h.b16 %v364
          %v2832 = vunpack.c.l.b16 %v365
          %v2833 = vunpack.c.h.b16 %v365
          %v2834 = vunpack.c.l.b16 %v366
          %v2835 = vunpack.c.h.b16 %v366
          %v2836 = vunpack.c.l.b16 %v367
          %v2837 = vunpack.c.h.b16 %v367
          %v2838 = vunpack.c.l.b16 %v368
          %v2839 = vunpack.c.h.b16 %v368
          %v2840 = vunpack.c.l.b16 %v369
          %v2841 = vunpack.c.h.b16 %v369
          %v2842 = vunpack.c.l.b16 %v370
          %v2843 = vunpack.c.h.b16 %v370
          %v2844 = vunpack.c.l.b16 %v371
          %v2845 = vunpack.c.h.b16 %v371
          %v2846 = vunpack.c.l.b16 %v372
          %v2847 = vunpack.c.h.b16 %v372
          %v2848 = vunpack.c.l.b16 %v373
          %v2849 = vunpack.c.h.b16 %v373
          %v2850 = vunpack.c.l.b16 %v374
          %v2851 = vunpack.c.h.b16 %v374
          %v2852 = vunpack.c.l.b16 %v375
          %v2853 = vunpack.c.h.b16 %v375
          %v2854 = vunpack.c.l.b16 %v376
          %v2855 = vunpack.c.h.b16 %v376
          %v2856 = vunpack.c.l.b16 %v377
          %v2857 = vunpack.c.h.b16 %v377
          %v2858 = vunpack.c.l.b16 %v378
          %v2859 = vunpack.c.h.b16 %v378
          %v2860 = vunpack.c.l.b16 %v379
          %v2861 = vunpack.c.h.b16 %v379
          %v2862 = vunpack.c.l.b16 %v380
          %v2863 = vunpack.c.h.b16 %v380
          %v2864 = vunpack.c.l.b16 %v381
          %v2865 = vunpack.c.h.b16 %v381
          %v2866 = vunpack.c.l.b16 %v382
          %v2867 = vunpack.c.h.b16 %v382
          %v2868 = vunpack.c.l.b16 %v383
          %v2869 = vunpack.c.h.b16 %v383
          %v2870 = vunpack.c.l.b16 %v384
          %v2871 = vunpack.c.h.b16 %v384
          %v2872 = vunpack.c.l.b16 %v385
          %v2873 = vunpack.c.h.b16 %v385
          %v2874 = vunpack.c.l.b16 %v386
          %v2875 = vunpack.c.h.b16 %v386
          %v2876 = vunpack.c.l.b16 %v387
          %v2877 = vunpack.c.h.b16 %v387
          %v2878 = vunpack.c.l.b16 %v388
          %v2879 = vunpack.c.h.b16 %v388
          %v2880 = vunpack.c.l.b16 %v389
          %v2881 = vunpack.c.h.b16 %v389
          %v2882 = vunpack.c.l.b16 %v390
          %v2883 = vunpack.c.h.b16 %v390
          %v2884 = vunpack.c.l.b16 %v391
          %v2885 = vunpack.c.h.b16 %v391
          %v2886 = vunpack.c.l.b16 %v392
          %v2887 = vunpack.c.h.b16 %v392
          %v2888 = vpack.c.b16 %v2636, %v2632
          %v2889 = vpack.c.b16 %v2637, %v2633
          %v2890 = vpack.c.b16 %v2638, %v2634
          %v2891 = vpack.c.b16 %v2639, %v2635
          %v2892 = vpack.c.b16 %v2644, %v2640
          %v2893 = vpack.c.b16 %v2645, %v2641
          %v2894 = vpack.c.b16 %v2646, %v2642
          %v2895 = vpack.c.b16 %v2647, %v2643
          %v2896 = vpack.c.b16 %v2652, %v2648
          %v2897 = vpack.c.b16 %v2653, %v2649
          %v2898 = vpack.c.b16 %v2654, %v2650
          %v2899 = vpack.c.b16 %v2655, %v2651
          %v2900 = vpack.c.b16 %v2660, %v2656
          %v2901 = vpack.c.b16 %v2661, %v2657
          %v2902 = vpack.c.b16 %v2662, %v2658
          %v2903 = vpack.c.b16 %v2663, %v2659
          %v2904 = vpack.c.b16 %v2668, %v2664
          %v2905 = vpack.c.b16 %v2669, %v2665
          %v2906 = vpack.c.b16 %v2670, %v2666
          %v2907 = vpack.c.b16 %v2671, %v2667
          %v2908 = vpack.c.b16 %v2676, %v2672
          %v2909 = vpack.c.b16 %v2677, %v2673
          %v2910 = vpack.c.b16 %v2678, %v2674
          %v2911 = vpack.c.b16 %v2679, %v2675
          %v2912 = vpack.c.b16 %v2684, %v2680
          %v2913 = vpack.c.b16 %v2685, %v2681
          %v2914 = vpack.c.b16 %v2686, %v2682
          %v2915 = vpack.c.b16 %v2687, %v2683
          %v2916 = vpack.c.b16 %v2692, %v2688
          %v2917 = vpack.c.b16 %v2693, %v2689
          %v2918 = vpack.c.b16 %v2694, %v2690
          %v2919 = vpack.c.b16 %v2695, %v2691
          %v2920 = vpack.c.b16 %v2700, %v2696
          %v2921 = vpack.c.b16 %v2701, %v2697
          %v2922 = vpack.c.b16 %v2702, %v2698
          %v2923 = vpack.c.b16 %v2703, %v2699
          %v2924 = vpack.c.b16 %v2708, %v2704
          %v2925 = vpack.c.b16 %v2709, %v2705
          %v2926 = vpack.c.b16 %v2710, %v2706
          %v2927 = vpack.c.b16 %v2711, %v2707
          %v2928 = vpack.c.b16 %v2716, %v2712
          %v2929 = vpack.c.b16 %v2717, %v2713
          %v2930 = vpack.c.b16 %v2718, %v2714
          %v2931 = vpack.c.b16 %v2719, %v2715
          %v2932 = vpack.c.b16 %v2724, %v2720
          %v2933 = vpack.c.b16 %v2725, %v2721
          %v2934 = vpack.c.b16 %v2726, %v2722
          %v2935 = vpack.c.b16 %v2727, %v2723
          %v2936 = vpack.c.b16 %v2732, %v2728
          %v2937 = vpack.c.b16 %v2733, %v2729
          %v2938 = vpack.c.b16 %v2734, %v2730
          %v2939 = vpack.c.b16 %v2735, %v2731
          %v2940 = vpack.c.b16 %v2740, %v2736
          %v2941 = vpack.c.b16 %v2741, %v2737
          %v2942 = vpack.c.b16 %v2742, %v2738
          %v2943 = vpack.c.b16 %v2743, %v2739
          %v2944 = vpack.c.b16 %v2748, %v2744
          %v2945 = vpack.c.b16 %v2749, %v2745
          %v2946 = vpack.c.b16 %v2750, %v2746
          %v2947 = vpack.c.b16 %v2751, %v2747
          %v2948 = vpack.c.b16 %v2756, %v2752
          %v2949 = vpack.c.b16 %v2757, %v2753
          %v2950 = vpack.c.b16 %v2758, %v2754
          %v2951 = vpack.c.b16 %v2759, %v2755
          %v2952 = vpack.c.b16 %v2764, %v2760
          %v2953 = vpack.c.b16 %v2765, %v2761
          %v2954 = vpack.c.b16 %v2766, %v2762
          %v2955 = vpack.c.b16 %v2767, %v2763
          %v2956 = vpack.c.b16 %v2772, %v2768
          %v2957 = vpack.c.b16 %v2773, %v2769
          %v2958 = vpack.c.b16 %v2774, %v2770
          %v2959 = vpack.c.b16 %v2775, %v2771
          %v2960 = vpack.c.b16 %v2780, %v2776
          %v2961 = vpack.c.b16 %v2781, %v2777
          %v2962 = vpack.c.b16 %v2782, %v2778
          %v2963 = vpack.c.b16 %v2783, %v2779
          %v2964 = vpack.c.b16 %v2788, %v2784
          %v2965 = vpack.c.b16 %v2789, %v2785
          %v2966 = vpack.c.b16 %v2790, %v2786
          %v2967 = vpack.c.b16 %v2791, %v2787
          %v2968 = vpack.c.b16 %v2796, %v2792
          %v2969 = vpack.c.b16 %v2797, %v2793
          %v2970 = vpack.c.b16 %v2798, %v2794
          %v2971 = vpack.c.b16 %v2799, %v2795
          %v2972 = vpack.c.b16 %v2804, %v2800
          %v2973 = vpack.c.b16 %v2805, %v2801
          %v2974 = vpack.c.b16 %v2806, %v2802
          %v2975 = vpack.c.b16 %v2807, %v2803
          %v2976 = vpack.c.b16 %v2812, %v2808
          %v2977 = vpack.c.b16 %v2813, %v2809
          %v2978 = vpack.c.b16 %v2814, %v2810
          %v2979 = vpack.c.b16 %v2815, %v2811
          %v2980 = vpack.c.b16 %v2820, %v2816
          %v2981 = vpack.c.b16 %v2821, %v2817
          %v2982 = vpack.c.b16 %v2822, %v2818
          %v2983 = vpack.c.b16 %v2823, %v2819
          %v2984 = vpack.c.b16 %v2828, %v2824
          %v2985 = vpack.c.b16 %v2829, %v2825
          %v2986 = vpack.c.b16 %v2830, %v2826
          %v2987 = vpack.c.b16 %v2831, %v2827
          %v2988 = vpack.c.b16 %v2836, %v2832
          %v2989 = vpack.c.b16 %v2837, %v2833
          %v2990 = vpack.c.b16 %v2838, %v2834
          %v2991 = vpack.c.b16 %v2839, %v2835
          %v2992 = vpack.c.b16 %v2844, %v2840
          %v2993 = vpack.c.b16 %v2845, %v2841
          %v2994 = vpack.c.b16 %v2846, %v2842
          %v2995 = vpack.c.b16 %v2847, %v2843
          %v2996 = vpack.c.b16 %v2852, %v2848
          %v2997 = vpack.c.b16 %v2853, %v2849
          %v2998 = vpack.c.b16 %v2854, %v2850
          %v2999 = vpack.c.b16 %v2855, %v2851
          %v3000 = vpack.c.b16 %v2860, %v2856
          %v3001 = vpack.c.b16 %v2861, %v2857
          %v3002 = vpack.c.b16 %v2862, %v2858
          %v3003 = vpack.c.b16 %v2863, %v2859
          %v3004 = vpack.c.b16 %v2868, %v2864
          %v3005 = vpack.c.b16 %v2869, %v2865
          %v3006 = vpack.c.b16 %v2870, %v2866
          %v3007 = vpack.c.b16 %v2871, %v2867
          %v3008 = vpack.c.b16 %v2876, %v2872
          %v3009 = vpack.c.b16 %v2877, %v2873
          %v3010 = vpack.c.b16 %v2878, %v2874
          %v3011 = vpack.c.b16 %v2879, %v2875
          %v3012 = vpack.c.b16 %v2884, %v2880
          %v3013 = vpack.c.b16 %v2885, %v2881
          %v3014 = vpack.c.b16 %v2886, %v2882
          %v3015 = vpack.c.b16 %v2887, %v2883
          %v3208 = vunpack.c.l.b16 %v2436
          %v3209 = vunpack.c.l.b16 %v2437
          %v3210 = vunpack.c.l.b16 %v2438
          %v3211 = vunpack.c.l.b16 %v2439
          %v3212 = vunpack.c.l.b16 %v2440
          %v3213 = vunpack.c.l.b16 %v2441
          %v3214 = vunpack.c.l.b16 %v2442
          %v3215 = vunpack.c.l.b16 %v2443
          %v3216 = vunpack.c.l.b16 %v2444
          %v3217 = vunpack.c.l.b16 %v2445
          %v3218 = vunpack.c.l.b16 %v2446
          %v3219 = vunpack.c.l.b16 %v2447
          %v3220 = vunpack.c.l.b16 %v2448
          %v3221 = vunpack.c.l.b16 %v2449
          %v3222 = vunpack.c.l.b16 %v2450
          %v3223 = vunpack.c.l.b16 %v2451
          %v3224 = vunpack.c.l.b16 %v2452
          %v3225 = vunpack.c.l.b16 %v2453
          %v3226 = vunpack.c.l.b16 %v2454
          %v3227 = vunpack.c.l.b16 %v2455
          %v3228 = vunpack.c.l.b16 %v2456
          %v3229 = vunpack.c.l.b16 %v2457
          %v3230 = vunpack.c.l.b16 %v2458
          %v3231 = vunpack.c.l.b16 %v2459
          %v3232 = vunpack.c.l.b16 %v2460
          %v3233 = vunpack.c.l.b16 %v2461
          %v3234 = vunpack.c.l.b16 %v2462
          %v3235 = vunpack.c.l.b16 %v2463
          %v3236 = vunpack.c.l.b16 %v2464
          %v3237 = vunpack.c.l.b16 %v2465
          %v3238 = vunpack.c.l.b16 %v2466
          %v3239 = vunpack.c.l.b16 %v2467
          %v3240 = vunpack.c.l.b16 %v2468
          %v3241 = vunpack.c.l.b16 %v2469
          %v3242 = vunpack.c.l.b16 %v2470
          %v3243 = vunpack.c.l.b16 %v2471
          %v3244 = vunpack.c.l.b16 %v2472
          %v3245 = vunpack.c.l.b16 %v2473
          %v3246 = vunpack.c.l.b16 %v2474
          %v3247 = vunpack.c.l.b16 %v2475
          %v3248 = vunpack.c.l.b16 %v2476
          %v3249 = vunpack.c.l.b16 %v2477
          %v3250 = vunpack.c.l.b16 %v2478
          %v3251 = vunpack.c.l.b16 %v2479
          %v3252 = vunpack.c.l.b16 %v2480
          %v3253 = vunpack.c.l.b16 %v2481
          %v3254 = vunpack.c.l.b16 %v2482
          %v3255 = vunpack.c.l.b16 %v2483
          %v3256 = vunpack.c.l.b16 %v2484
          %v3257 = vunpack.c.l.b16 %v2485
          %v3258 = vunpack.c.l.b16 %v2486
          %v3259 = vunpack.c.l.b16 %v2487
          %v3260 = vunpack.c.l.b16 %v2488
          %v3261 = vunpack.c.l.b16 %v2489
          %v3262 = vunpack.c.l.b16 %v2490
          %v3263 = vunpack.c.l.b16 %v2491
          %v3264 = vunpack.c.l.b16 %v2492
          %v3265 = vunpack.c.l.b16 %v2493
          %v3266 = vunpack.c.l.b16 %v2494
          %v3267 = vunpack.c.l.b16 %v2495
          %v3268 = vunpack.c.l.b16 %v2496
          %v3269 = vunpack.c.l.b16 %v2497
          %v3270 = vunpack.c.l.b16 %v2498
          %v3271 = vunpack.c.l.b16 %v2499
          %v3272 = vpack.c.b16 %v3209, %v3208
          %v3273 = vpack.c.b16 %v3211, %v3210
          %v3274 = vpack.c.b16 %v3213, %v3212
          %v3275 = vpack.c.b16 %v3215, %v3214
          %v3276 = vpack.c.b16 %v3217, %v3216
          %v3277 = vpack.c.b16 %v3219, %v3218
          %v3278 = vpack.c.b16 %v3221, %v3220
          %v3279 = vpack.c.b16 %v3223, %v3222
          %v3280 = vpack.c.b16 %v3225, %v3224
          %v3281 = vpack.c.b16 %v3227, %v3226
          %v3282 = vpack.c.b16 %v3229, %v3228
          %v3283 = vpack.c.b16 %v3231, %v3230
          %v3284 = vpack.c.b16 %v3233, %v3232
          %v3285 = vpack.c.b16 %v3235, %v3234
          %v3286 = vpack.c.b16 %v3237, %v3236
          %v3287 = vpack.c.b16 %v3239, %v3238
          %v3288 = vpack.c.b16 %v3241, %v3240
          %v3289 = vpack.c.b16 %v3243, %v3242
          %v3290 = vpack.c.b16 %v3245, %v3244
          %v3291 = vpack.c.b16 %v3247, %v3246
          %v3292 = vpack.c.b16 %v3249, %v3248
          %v3293 = vpack.c.b16 %v3251, %v3250
          %v3294 = vpack.c.b16 %v3253, %v3252
          %v3295 = vpack.c.b16 %v3255, %v3254
          %v3296 = vpack.c.b16 %v3257, %v3256
          %v3297 = vpack.c.b16 %v3259, %v3258
          %v3298 = vpack.c.b16 %v3261, %v3260
          %v3299 = vpack.c.b16 %v3263, %v3262
          %v3300 = vpack.c.b16 %v3265, %v3264
          %v3301 = vpack.c.b16 %v3267, %v3266
          %v3302 = vpack.c.b16 %v3269, %v3268
          %v3303 = vpack.c.b16 %v3271, %v3270
          %3336 = vmatpush.bf16.msra.mxu0 %v3279
          %3337 = vmatpush.bf16.msra.mxu0 %v3278
          %3338 = vmatpush.bf16.msra.mxu0 %v3277
          %3339 = vmatpush.bf16.msra.mxu0 %v3276
          %3340 = vmatpush.bf16.msra.mxu0 %v3275
          %3341 = vmatpush.bf16.msra.mxu0 %v3274
          %3342 = vmatpush.bf16.msra.mxu0 %v3273
          %3343 = vmatpush.bf16.msra.mxu0 %v3272
          %3344 = vmatmul.bf16.gmra.mxu0 %v2888
          %v3345 = vpop.f32.mrf.mxu0
          %v3346 = vadd.f32 %v2502, %v3345
          %v3347 = vpop.f32.mrf.mxu0
          %v3348 = vadd.f32 %v2502, %v3347
          %3349 = vmatmul.bf16.gmra.mxu0 %v2892
          %v3350 = vpop.f32.mrf.mxu0
          %v3351 = vadd.f32 %v2502, %v3350
          %v3352 = vpop.f32.mrf.mxu0
          %v3353 = vadd.f32 %v2502, %v3352
          %3354 = vmatmul.bf16.gmra.mxu0 %v2896
          %v3355 = vpop.f32.mrf.mxu0
          %v3356 = vadd.f32 %v2502, %v3355
          %v3357 = vpop.f32.mrf.mxu0
          %v3358 = vadd.f32 %v2502, %v3357
          %3359 = vmatmul.bf16.gmra.mxu0 %v2900
          %v3360 = vpop.f32.mrf.mxu0
          %v3361 = vadd.f32 %v2502, %v3360
          %v3362 = vpop.f32.mrf.mxu0
          %v3363 = vadd.f32 %v2502, %v3362
          %3364 = vmatmul.bf16.gmra.mxu0 %v2904
          %v3365 = vpop.f32.mrf.mxu0
          %v3366 = vadd.f32 %v2502, %v3365
          %v3367 = vpop.f32.mrf.mxu0
          %v3368 = vadd.f32 %v2502, %v3367
          %3369 = vmatmul.bf16.gmra.mxu0 %v2908
          %v3370 = vpop.f32.mrf.mxu0
          %v3371 = vadd.f32 %v2502, %v3370
          %v3372 = vpop.f32.mrf.mxu0
          %v3373 = vadd.f32 %v2502, %v3372
          %3374 = vmatmul.bf16.gmra.mxu0 %v2912
          %v3375 = vpop.f32.mrf.mxu0
          %v3376 = vadd.f32 %v2502, %v3375
          %v3377 = vpop.f32.mrf.mxu0
          %v3378 = vadd.f32 %v2502, %v3377
          %3379 = vmatmul.bf16.gmra.mxu0 %v2916
          %v3380 = vpop.f32.mrf.mxu0
          %v3381 = vadd.f32 %v2502, %v3380
          %v3382 = vpop.f32.mrf.mxu0
          %v3383 = vadd.f32 %v2502, %v3382
          %3384 = vmatmul.bf16.gmra.mxu0 %v2920
          %v3385 = vpop.f32.mrf.mxu0
          %v3386 = vadd.f32 %v2502, %v3385
          %v3387 = vpop.f32.mrf.mxu0
          %v3388 = vadd.f32 %v2502, %v3387
          %3389 = vmatmul.bf16.gmra.mxu0 %v2924
          %v3390 = vpop.f32.mrf.mxu0
          %v3391 = vadd.f32 %v2502, %v3390
          %v3392 = vpop.f32.mrf.mxu0
          %v3393 = vadd.f32 %v2502, %v3392
          %3394 = vmatmul.bf16.gmra.mxu0 %v2928
          %v3395 = vpop.f32.mrf.mxu0
          %v3396 = vadd.f32 %v2502, %v3395
          %v3397 = vpop.f32.mrf.mxu0
          %v3398 = vadd.f32 %v2502, %v3397
          %3399 = vmatmul.bf16.gmra.mxu0 %v2932
          %v3400 = vpop.f32.mrf.mxu0
          %v3401 = vadd.f32 %v2502, %v3400
          %v3402 = vpop.f32.mrf.mxu0
          %v3403 = vadd.f32 %v2502, %v3402
          %3404 = vmatmul.bf16.gmra.mxu0 %v2936
          %v3405 = vpop.f32.mrf.mxu0
          %v3406 = vadd.f32 %v2502, %v3405
          %v3407 = vpop.f32.mrf.mxu0
          %v3408 = vadd.f32 %v2502, %v3407
          %3409 = vmatmul.bf16.gmra.mxu0 %v2940
          %v3410 = vpop.f32.mrf.mxu0
          %v3411 = vadd.f32 %v2502, %v3410
          %v3412 = vpop.f32.mrf.mxu0
          %v3413 = vadd.f32 %v2502, %v3412
          %3414 = vmatmul.bf16.gmra.mxu0 %v2944
          %v3415 = vpop.f32.mrf.mxu0
          %v3416 = vadd.f32 %v2502, %v3415
          %v3417 = vpop.f32.mrf.mxu0
          %v3418 = vadd.f32 %v2502, %v3417
          %3419 = vmatmul.bf16.gmra.mxu0 %v2948
          %v3420 = vpop.f32.mrf.mxu0
          %v3421 = vadd.f32 %v2502, %v3420
          %v3422 = vpop.f32.mrf.mxu0
          %v3423 = vadd.f32 %v2502, %v3422
          %3424 = vmatmul.bf16.gmra.mxu0 %v2952
          %v3425 = vpop.f32.mrf.mxu0
          %v3426 = vadd.f32 %v2502, %v3425
          %v3427 = vpop.f32.mrf.mxu0
          %v3428 = vadd.f32 %v2502, %v3427
          %3429 = vmatmul.bf16.gmra.mxu0 %v2956
          %v3430 = vpop.f32.mrf.mxu0
          %v3431 = vadd.f32 %v2502, %v3430
          %v3432 = vpop.f32.mrf.mxu0
          %v3433 = vadd.f32 %v2502, %v3432
          %3434 = vmatmul.bf16.gmra.mxu0 %v2960
          %v3435 = vpop.f32.mrf.mxu0
          %v3436 = vadd.f32 %v2502, %v3435
          %v3437 = vpop.f32.mrf.mxu0
          %v3438 = vadd.f32 %v2502, %v3437
          %3439 = vmatmul.bf16.gmra.mxu0 %v2964
          %v3440 = vpop.f32.mrf.mxu0
          %v3441 = vadd.f32 %v2502, %v3440
          %v3442 = vpop.f32.mrf.mxu0
          %v3443 = vadd.f32 %v2502, %v3442
          %3444 = vmatmul.bf16.gmra.mxu0 %v2968
          %v3445 = vpop.f32.mrf.mxu0
          %v3446 = vadd.f32 %v2502, %v3445
          %v3447 = vpop.f32.mrf.mxu0
          %v3448 = vadd.f32 %v2502, %v3447
          %3449 = vmatmul.bf16.gmra.mxu0 %v2972
          %v3450 = vpop.f32.mrf.mxu0
          %v3451 = vadd.f32 %v2502, %v3450
          %v3452 = vpop.f32.mrf.mxu0
          %v3453 = vadd.f32 %v2502, %v3452
          %3454 = vmatmul.bf16.gmra.mxu0 %v2976
          %v3455 = vpop.f32.mrf.mxu0
          %v3456 = vadd.f32 %v2502, %v3455
          %v3457 = vpop.f32.mrf.mxu0
          %v3458 = vadd.f32 %v2502, %v3457
          %3459 = vmatmul.bf16.gmra.mxu0 %v2980
          %v3460 = vpop.f32.mrf.mxu0
          %v3461 = vadd.f32 %v2502, %v3460
          %v3462 = vpop.f32.mrf.mxu0
          %v3463 = vadd.f32 %v2502, %v3462
          %3464 = vmatmul.bf16.gmra.mxu0 %v2984
          %v3465 = vpop.f32.mrf.mxu0
          %v3466 = vadd.f32 %v2502, %v3465
          %v3467 = vpop.f32.mrf.mxu0
          %v3468 = vadd.f32 %v2502, %v3467
          %3469 = vmatmul.bf16.gmra.mxu0 %v2988
          %v3470 = vpop.f32.mrf.mxu0
          %v3471 = vadd.f32 %v2502, %v3470
          %v3472 = vpop.f32.mrf.mxu0
          %v3473 = vadd.f32 %v2502, %v3472
          %3474 = vmatmul.bf16.gmra.mxu0 %v2992
          %v3475 = vpop.f32.mrf.mxu0
          %v3476 = vadd.f32 %v2502, %v3475
          %v3477 = vpop.f32.mrf.mxu0
          %v3478 = vadd.f32 %v2502, %v3477
          %3479 = vmatmul.bf16.gmra.mxu0 %v2996
          %v3480 = vpop.f32.mrf.mxu0
          %v3481 = vadd.f32 %v2502, %v3480
          %v3482 = vpop.f32.mrf.mxu0
          %v3483 = vadd.f32 %v2502, %v3482
          %3484 = vmatmul.bf16.gmra.mxu0 %v3000
          %v3485 = vpop.f32.mrf.mxu0
          %v3486 = vadd.f32 %v2502, %v3485
          %v3487 = vpop.f32.mrf.mxu0
          %v3488 = vadd.f32 %v2502, %v3487
          %3489 = vmatmul.bf16.gmra.mxu0 %v3004
          %v3490 = vpop.f32.mrf.mxu0
          %v3491 = vadd.f32 %v2502, %v3490
          %v3492 = vpop.f32.mrf.mxu0
          %v3493 = vadd.f32 %v2502, %v3492
          %3494 = vmatmul.bf16.gmra.mxu0 %v3008
          %v3495 = vpop.f32.mrf.mxu0
          %v3496 = vadd.f32 %v2502, %v3495
          %v3497 = vpop.f32.mrf.mxu0
          %v3498 = vadd.f32 %v2502, %v3497
          %3499 = vmatmul.bf16.gmra.mxu0 %v3012
          %v3500 = vpop.f32.mrf.mxu0
          %v3501 = vadd.f32 %v2502, %v3500
          %v3502 = vpop.f32.mrf.mxu0
          %v3503 = vadd.f32 %v2502, %v3502
          %3504 = vdwg.mxu0
          %3505 = vmatpush.bf16.msra.mxu0 %v3287
          %3506 = vmatpush.bf16.msra.mxu0 %v3286
          %3507 = vmatpush.bf16.msra.mxu0 %v3285
          %3508 = vmatpush.bf16.msra.mxu0 %v3284
          %3509 = vmatpush.bf16.msra.mxu0 %v3283
          %3510 = vmatpush.bf16.msra.mxu0 %v3282
          %3511 = vmatpush.bf16.msra.mxu0 %v3281
          %3512 = vmatpush.bf16.msra.mxu0 %v3280
          %3513 = vmatmul.bf16.gmra.mxu0 %v2889
          %v3514 = vpop.f32.mrf.mxu0
          %v3515 = vadd.f32 %v3346, %v3514
          %v3516 = vpop.f32.mrf.mxu0
          %v3517 = vadd.f32 %v3348, %v3516
          %3518 = vmatmul.bf16.gmra.mxu0 %v2893
          %v3519 = vpop.f32.mrf.mxu0
          %v3520 = vadd.f32 %v3351, %v3519
          %v3521 = vpop.f32.mrf.mxu0
          %v3522 = vadd.f32 %v3353, %v3521
          %3523 = vmatmul.bf16.gmra.mxu0 %v2897
          %v3524 = vpop.f32.mrf.mxu0
          %v3525 = vadd.f32 %v3356, %v3524
          %v3526 = vpop.f32.mrf.mxu0
          %v3527 = vadd.f32 %v3358, %v3526
          %3528 = vmatmul.bf16.gmra.mxu0 %v2901
          %v3529 = vpop.f32.mrf.mxu0
          %v3530 = vadd.f32 %v3361, %v3529
          %v3531 = vpop.f32.mrf.mxu0
          %v3532 = vadd.f32 %v3363, %v3531
          %3533 = vmatmul.bf16.gmra.mxu0 %v2905
          %v3534 = vpop.f32.mrf.mxu0
          %v3535 = vadd.f32 %v3366, %v3534
          %v3536 = vpop.f32.mrf.mxu0
          %v3537 = vadd.f32 %v3368, %v3536
          %3538 = vmatmul.bf16.gmra.mxu0 %v2909
          %v3539 = vpop.f32.mrf.mxu0
          %v3540 = vadd.f32 %v3371, %v3539
          %v3541 = vpop.f32.mrf.mxu0
          %v3542 = vadd.f32 %v3373, %v3541
          %3543 = vmatmul.bf16.gmra.mxu0 %v2913
          %v3544 = vpop.f32.mrf.mxu0
          %v3545 = vadd.f32 %v3376, %v3544
          %v3546 = vpop.f32.mrf.mxu0
          %v3547 = vadd.f32 %v3378, %v3546
          %3548 = vmatmul.bf16.gmra.mxu0 %v2917
          %v3549 = vpop.f32.mrf.mxu0
          %v3550 = vadd.f32 %v3381, %v3549
          %v3551 = vpop.f32.mrf.mxu0
          %v3552 = vadd.f32 %v3383, %v3551
          %3553 = vmatmul.bf16.gmra.mxu0 %v2921
          %v3554 = vpop.f32.mrf.mxu0
          %v3555 = vadd.f32 %v3386, %v3554
          %v3556 = vpop.f32.mrf.mxu0
          %v3557 = vadd.f32 %v3388, %v3556
          %3558 = vmatmul.bf16.gmra.mxu0 %v2925
          %v3559 = vpop.f32.mrf.mxu0
          %v3560 = vadd.f32 %v3391, %v3559
          %v3561 = vpop.f32.mrf.mxu0
          %v3562 = vadd.f32 %v3393, %v3561
          %3563 = vmatmul.bf16.gmra.mxu0 %v2929
          %v3564 = vpop.f32.mrf.mxu0
          %v3565 = vadd.f32 %v3396, %v3564
          %v3566 = vpop.f32.mrf.mxu0
          %v3567 = vadd.f32 %v3398, %v3566
          %3568 = vmatmul.bf16.gmra.mxu0 %v2933
          %v3569 = vpop.f32.mrf.mxu0
          %v3570 = vadd.f32 %v3401, %v3569
          %v3571 = vpop.f32.mrf.mxu0
          %v3572 = vadd.f32 %v3403, %v3571
          %3573 = vmatmul.bf16.gmra.mxu0 %v2937
          %v3574 = vpop.f32.mrf.mxu0
          %v3575 = vadd.f32 %v3406, %v3574
          %v3576 = vpop.f32.mrf.mxu0
          %v3577 = vadd.f32 %v3408, %v3576
          %3578 = vmatmul.bf16.gmra.mxu0 %v2941
          %v3579 = vpop.f32.mrf.mxu0
          %v3580 = vadd.f32 %v3411, %v3579
          %v3581 = vpop.f32.mrf.mxu0
          %v3582 = vadd.f32 %v3413, %v3581
          %3583 = vmatmul.bf16.gmra.mxu0 %v2945
          %v3584 = vpop.f32.mrf.mxu0
          %v3585 = vadd.f32 %v3416, %v3584
          %v3586 = vpop.f32.mrf.mxu0
          %v3587 = vadd.f32 %v3418, %v3586
          %3588 = vmatmul.bf16.gmra.mxu0 %v2949
          %v3589 = vpop.f32.mrf.mxu0
          %v3590 = vadd.f32 %v3421, %v3589
          %v3591 = vpop.f32.mrf.mxu0
          %v3592 = vadd.f32 %v3423, %v3591
          %3593 = vmatmul.bf16.gmra.mxu0 %v2953
          %v3594 = vpop.f32.mrf.mxu0
          %v3595 = vadd.f32 %v3426, %v3594
          %v3596 = vpop.f32.mrf.mxu0
          %v3597 = vadd.f32 %v3428, %v3596
          %3598 = vmatmul.bf16.gmra.mxu0 %v2957
          %v3599 = vpop.f32.mrf.mxu0
          %v3600 = vadd.f32 %v3431, %v3599
          %v3601 = vpop.f32.mrf.mxu0
          %v3602 = vadd.f32 %v3433, %v3601
          %3603 = vmatmul.bf16.gmra.mxu0 %v2961
          %v3604 = vpop.f32.mrf.mxu0
          %v3605 = vadd.f32 %v3436, %v3604
          %v3606 = vpop.f32.mrf.mxu0
          %v3607 = vadd.f32 %v3438, %v3606
          %3608 = vmatmul.bf16.gmra.mxu0 %v2965
          %v3609 = vpop.f32.mrf.mxu0
          %v3610 = vadd.f32 %v3441, %v3609
          %v3611 = vpop.f32.mrf.mxu0
          %v3612 = vadd.f32 %v3443, %v3611
          %3613 = vmatmul.bf16.gmra.mxu0 %v2969
          %v3614 = vpop.f32.mrf.mxu0
          %v3615 = vadd.f32 %v3446, %v3614
          %v3616 = vpop.f32.mrf.mxu0
          %v3617 = vadd.f32 %v3448, %v3616
          %3618 = vmatmul.bf16.gmra.mxu0 %v2973
          %v3619 = vpop.f32.mrf.mxu0
          %v3620 = vadd.f32 %v3451, %v3619
          %v3621 = vpop.f32.mrf.mxu0
          %v3622 = vadd.f32 %v3453, %v3621
          %3623 = vmatmul.bf16.gmra.mxu0 %v2977
          %v3624 = vpop.f32.mrf.mxu0
          %v3625 = vadd.f32 %v3456, %v3624
          %v3626 = vpop.f32.mrf.mxu0
          %v3627 = vadd.f32 %v3458, %v3626
          %3628 = vmatmul.bf16.gmra.mxu0 %v2981
          %v3629 = vpop.f32.mrf.mxu0
          %v3630 = vadd.f32 %v3461, %v3629
          %v3631 = vpop.f32.mrf.mxu0
          %v3632 = vadd.f32 %v3463, %v3631
          %3633 = vmatmul.bf16.gmra.mxu0 %v2985
          %v3634 = vpop.f32.mrf.mxu0
          %v3635 = vadd.f32 %v3466, %v3634
          %v3636 = vpop.f32.mrf.mxu0
          %v3637 = vadd.f32 %v3468, %v3636
          %3638 = vmatmul.bf16.gmra.mxu0 %v2989
          %v3639 = vpop.f32.mrf.mxu0
          %v3640 = vadd.f32 %v3471, %v3639
          %v3641 = vpop.f32.mrf.mxu0
          %v3642 = vadd.f32 %v3473, %v3641
          %3643 = vmatmul.bf16.gmra.mxu0 %v2993
          %v3644 = vpop.f32.mrf.mxu0
          %v3645 = vadd.f32 %v3476, %v3644
          %v3646 = vpop.f32.mrf.mxu0
          %v3647 = vadd.f32 %v3478, %v3646
          %3648 = vmatmul.bf16.gmra.mxu0 %v2997
          %v3649 = vpop.f32.mrf.mxu0
          %v3650 = vadd.f32 %v3481, %v3649
          %v3651 = vpop.f32.mrf.mxu0
          %v3652 = vadd.f32 %v3483, %v3651
          %3653 = vmatmul.bf16.gmra.mxu0 %v3001
          %v3654 = vpop.f32.mrf.mxu0
          %v3655 = vadd.f32 %v3486, %v3654
          %v3656 = vpop.f32.mrf.mxu0
          %v3657 = vadd.f32 %v3488, %v3656
          %3658 = vmatmul.bf16.gmra.mxu0 %v3005
          %v3659 = vpop.f32.mrf.mxu0
          %v3660 = vadd.f32 %v3491, %v3659
          %v3661 = vpop.f32.mrf.mxu0
          %v3662 = vadd.f32 %v3493, %v3661
          %3663 = vmatmul.bf16.gmra.mxu0 %v3009
          %v3664 = vpop.f32.mrf.mxu0
          %v3665 = vadd.f32 %v3496, %v3664
          %v3666 = vpop.f32.mrf.mxu0
          %v3667 = vadd.f32 %v3498, %v3666
          %3668 = vmatmul.bf16.gmra.mxu0 %v3013
          %v3669 = vpop.f32.mrf.mxu0
          %v3670 = vadd.f32 %v3501, %v3669
          %v3671 = vpop.f32.mrf.mxu0
          %v3672 = vadd.f32 %v3503, %v3671
          %3673 = vdwg.mxu0
          %3674 = vmatpush.bf16.msra.mxu0 %v3295
          %3675 = vmatpush.bf16.msra.mxu0 %v3294
          %3676 = vmatpush.bf16.msra.mxu0 %v3293
          %3677 = vmatpush.bf16.msra.mxu0 %v3292
          %3678 = vmatpush.bf16.msra.mxu0 %v3291
          %3679 = vmatpush.bf16.msra.mxu0 %v3290
          %3680 = vmatpush.bf16.msra.mxu0 %v3289
          %3681 = vmatpush.bf16.msra.mxu0 %v3288
          %3682 = vmatmul.bf16.gmra.mxu0 %v2890
          %v3683 = vpop.f32.mrf.mxu0
          %v3684 = vadd.f32 %v3515, %v3683
          %v3685 = vpop.f32.mrf.mxu0
          %v3686 = vadd.f32 %v3517, %v3685
          %3687 = vmatmul.bf16.gmra.mxu0 %v2894
          %v3688 = vpop.f32.mrf.mxu0
          %v3689 = vadd.f32 %v3520, %v3688
          %v3690 = vpop.f32.mrf.mxu0
          %v3691 = vadd.f32 %v3522, %v3690
          %3692 = vmatmul.bf16.gmra.mxu0 %v2898
          %v3693 = vpop.f32.mrf.mxu0
          %v3694 = vadd.f32 %v3525, %v3693
          %v3695 = vpop.f32.mrf.mxu0
          %v3696 = vadd.f32 %v3527, %v3695
          %3697 = vmatmul.bf16.gmra.mxu0 %v2902
          %v3698 = vpop.f32.mrf.mxu0
          %v3699 = vadd.f32 %v3530, %v3698
          %v3700 = vpop.f32.mrf.mxu0
          %v3701 = vadd.f32 %v3532, %v3700
          %3702 = vmatmul.bf16.gmra.mxu0 %v2906
          %v3703 = vpop.f32.mrf.mxu0
          %v3704 = vadd.f32 %v3535, %v3703
          %v3705 = vpop.f32.mrf.mxu0
          %v3706 = vadd.f32 %v3537, %v3705
          %3707 = vmatmul.bf16.gmra.mxu0 %v2910
          %v3708 = vpop.f32.mrf.mxu0
          %v3709 = vadd.f32 %v3540, %v3708
          %v3710 = vpop.f32.mrf.mxu0
          %v3711 = vadd.f32 %v3542, %v3710
          %3712 = vmatmul.bf16.gmra.mxu0 %v2914
          %v3713 = vpop.f32.mrf.mxu0
          %v3714 = vadd.f32 %v3545, %v3713
          %v3715 = vpop.f32.mrf.mxu0
          %v3716 = vadd.f32 %v3547, %v3715
          %3717 = vmatmul.bf16.gmra.mxu0 %v2918
          %v3718 = vpop.f32.mrf.mxu0
          %v3719 = vadd.f32 %v3550, %v3718
          %v3720 = vpop.f32.mrf.mxu0
          %v3721 = vadd.f32 %v3552, %v3720
          %3722 = vmatmul.bf16.gmra.mxu0 %v2922
          %v3723 = vpop.f32.mrf.mxu0
          %v3724 = vadd.f32 %v3555, %v3723
          %v3725 = vpop.f32.mrf.mxu0
          %v3726 = vadd.f32 %v3557, %v3725
          %3727 = vmatmul.bf16.gmra.mxu0 %v2926
          %v3728 = vpop.f32.mrf.mxu0
          %v3729 = vadd.f32 %v3560, %v3728
          %v3730 = vpop.f32.mrf.mxu0
          %v3731 = vadd.f32 %v3562, %v3730
          %3732 = vmatmul.bf16.gmra.mxu0 %v2930
          %v3733 = vpop.f32.mrf.mxu0
          %v3734 = vadd.f32 %v3565, %v3733
          %v3735 = vpop.f32.mrf.mxu0
          %v3736 = vadd.f32 %v3567, %v3735
          %3737 = vmatmul.bf16.gmra.mxu0 %v2934
          %v3738 = vpop.f32.mrf.mxu0
          %v3739 = vadd.f32 %v3570, %v3738
          %v3740 = vpop.f32.mrf.mxu0
          %v3741 = vadd.f32 %v3572, %v3740
          %3742 = vmatmul.bf16.gmra.mxu0 %v2938
          %v3743 = vpop.f32.mrf.mxu0
          %v3744 = vadd.f32 %v3575, %v3743
          %v3745 = vpop.f32.mrf.mxu0
          %v3746 = vadd.f32 %v3577, %v3745
          %3747 = vmatmul.bf16.gmra.mxu0 %v2942
          %v3748 = vpop.f32.mrf.mxu0
          %v3749 = vadd.f32 %v3580, %v3748
          %v3750 = vpop.f32.mrf.mxu0
          %v3751 = vadd.f32 %v3582, %v3750
          %3752 = vmatmul.bf16.gmra.mxu0 %v2946
          %v3753 = vpop.f32.mrf.mxu0
          %v3754 = vadd.f32 %v3585, %v3753
          %v3755 = vpop.f32.mrf.mxu0
          %v3756 = vadd.f32 %v3587, %v3755
          %3757 = vmatmul.bf16.gmra.mxu0 %v2950
          %v3758 = vpop.f32.mrf.mxu0
          %v3759 = vadd.f32 %v3590, %v3758
          %v3760 = vpop.f32.mrf.mxu0
          %v3761 = vadd.f32 %v3592, %v3760
          %3762 = vmatmul.bf16.gmra.mxu0 %v2954
          %v3763 = vpop.f32.mrf.mxu0
          %v3764 = vadd.f32 %v3595, %v3763
          %v3765 = vpop.f32.mrf.mxu0
          %v3766 = vadd.f32 %v3597, %v3765
          %3767 = vmatmul.bf16.gmra.mxu0 %v2958
          %v3768 = vpop.f32.mrf.mxu0
          %v3769 = vadd.f32 %v3600, %v3768
          %v3770 = vpop.f32.mrf.mxu0
          %v3771 = vadd.f32 %v3602, %v3770
          %3772 = vmatmul.bf16.gmra.mxu0 %v2962
          %v3773 = vpop.f32.mrf.mxu0
          %v3774 = vadd.f32 %v3605, %v3773
          %v3775 = vpop.f32.mrf.mxu0
          %v3776 = vadd.f32 %v3607, %v3775
          %3777 = vmatmul.bf16.gmra.mxu0 %v2966
          %v3778 = vpop.f32.mrf.mxu0
          %v3779 = vadd.f32 %v3610, %v3778
          %v3780 = vpop.f32.mrf.mxu0
          %v3781 = vadd.f32 %v3612, %v3780
          %3782 = vmatmul.bf16.gmra.mxu0 %v2970
          %v3783 = vpop.f32.mrf.mxu0
          %v3784 = vadd.f32 %v3615, %v3783
          %v3785 = vpop.f32.mrf.mxu0
          %v3786 = vadd.f32 %v3617, %v3785
          %3787 = vmatmul.bf16.gmra.mxu0 %v2974
          %v3788 = vpop.f32.mrf.mxu0
          %v3789 = vadd.f32 %v3620, %v3788
          %v3790 = vpop.f32.mrf.mxu0
          %v3791 = vadd.f32 %v3622, %v3790
          %3792 = vmatmul.bf16.gmra.mxu0 %v2978
          %v3793 = vpop.f32.mrf.mxu0
          %v3794 = vadd.f32 %v3625, %v3793
          %v3795 = vpop.f32.mrf.mxu0
          %v3796 = vadd.f32 %v3627, %v3795
          %3797 = vmatmul.bf16.gmra.mxu0 %v2982
          %v3798 = vpop.f32.mrf.mxu0
          %v3799 = vadd.f32 %v3630, %v3798
          %v3800 = vpop.f32.mrf.mxu0
          %v3801 = vadd.f32 %v3632, %v3800
          %3802 = vmatmul.bf16.gmra.mxu0 %v2986
          %v3803 = vpop.f32.mrf.mxu0
          %v3804 = vadd.f32 %v3635, %v3803
          %v3805 = vpop.f32.mrf.mxu0
          %v3806 = vadd.f32 %v3637, %v3805
          %3807 = vmatmul.bf16.gmra.mxu0 %v2990
          %v3808 = vpop.f32.mrf.mxu0
          %v3809 = vadd.f32 %v3640, %v3808
          %v3810 = vpop.f32.mrf.mxu0
          %v3811 = vadd.f32 %v3642, %v3810
          %3812 = vmatmul.bf16.gmra.mxu0 %v2994
          %v3813 = vpop.f32.mrf.mxu0
          %v3814 = vadd.f32 %v3645, %v3813
          %v3815 = vpop.f32.mrf.mxu0
          %v3816 = vadd.f32 %v3647, %v3815
          %3817 = vmatmul.bf16.gmra.mxu0 %v2998
          %v3818 = vpop.f32.mrf.mxu0
          %v3819 = vadd.f32 %v3650, %v3818
          %v3820 = vpop.f32.mrf.mxu0
          %v3821 = vadd.f32 %v3652, %v3820
          %3822 = vmatmul.bf16.gmra.mxu0 %v3002
          %v3823 = vpop.f32.mrf.mxu0
          %v3824 = vadd.f32 %v3655, %v3823
          %v3825 = vpop.f32.mrf.mxu0
          %v3826 = vadd.f32 %v3657, %v3825
          %3827 = vmatmul.bf16.gmra.mxu0 %v3006
          %v3828 = vpop.f32.mrf.mxu0
          %v3829 = vadd.f32 %v3660, %v3828
          %v3830 = vpop.f32.mrf.mxu0
          %v3831 = vadd.f32 %v3662, %v3830
          %3832 = vmatmul.bf16.gmra.mxu0 %v3010
          %v3833 = vpop.f32.mrf.mxu0
          %v3834 = vadd.f32 %v3665, %v3833
          %v3835 = vpop.f32.mrf.mxu0
          %v3836 = vadd.f32 %v3667, %v3835
          %3837 = vmatmul.bf16.gmra.mxu0 %v3014
          %v3838 = vpop.f32.mrf.mxu0
          %v3839 = vadd.f32 %v3670, %v3838
          %v3840 = vpop.f32.mrf.mxu0
          %v3841 = vadd.f32 %v3672, %v3840
          %3842 = vdwg.mxu0
          %3843 = vmatpush.bf16.msra.mxu0 %v3303
          %3844 = vmatpush.bf16.msra.mxu0 %v3302
          %3845 = vmatpush.bf16.msra.mxu0 %v3301
          %3846 = vmatpush.bf16.msra.mxu0 %v3300
          %3847 = vmatpush.bf16.msra.mxu0 %v3299
          %3848 = vmatpush.bf16.msra.mxu0 %v3298
          %3849 = vmatpush.bf16.msra.mxu0 %v3297
          %3850 = vmatpush.bf16.msra.mxu0 %v3296
          %3851 = vmatmul.bf16.gmra.mxu0 %v2891
          %v3852 = vpop.f32.mrf.mxu0
          %v3853 = vadd.f32 %v3684, %v3852
          %v3854 = vpop.f32.mrf.mxu0
          %v3855 = vadd.f32 %v3686, %v3854
          %3856 = vmatmul.bf16.gmra.mxu0 %v2895
          %v3857 = vpop.f32.mrf.mxu0
          %v3858 = vadd.f32 %v3689, %v3857
          %v3859 = vpop.f32.mrf.mxu0
          %v3860 = vadd.f32 %v3691, %v3859
          %3861 = vmatmul.bf16.gmra.mxu0 %v2899
          %v3862 = vpop.f32.mrf.mxu0
          %v3863 = vadd.f32 %v3694, %v3862
          %v3864 = vpop.f32.mrf.mxu0
          %v3865 = vadd.f32 %v3696, %v3864
          %3866 = vmatmul.bf16.gmra.mxu0 %v2903
          %v3867 = vpop.f32.mrf.mxu0
          %v3868 = vadd.f32 %v3699, %v3867
          %v3869 = vpop.f32.mrf.mxu0
          %v3870 = vadd.f32 %v3701, %v3869
          %3871 = vmatmul.bf16.gmra.mxu0 %v2907
          %v3872 = vpop.f32.mrf.mxu0
          %v3873 = vadd.f32 %v3704, %v3872
          %v3874 = vpop.f32.mrf.mxu0
          %v3875 = vadd.f32 %v3706, %v3874
          %3876 = vmatmul.bf16.gmra.mxu0 %v2911
          %v3877 = vpop.f32.mrf.mxu0
          %v3878 = vadd.f32 %v3709, %v3877
          %v3879 = vpop.f32.mrf.mxu0
          %v3880 = vadd.f32 %v3711, %v3879
          %3881 = vmatmul.bf16.gmra.mxu0 %v2915
          %v3882 = vpop.f32.mrf.mxu0
          %v3883 = vadd.f32 %v3714, %v3882
          %v3884 = vpop.f32.mrf.mxu0
          %v3885 = vadd.f32 %v3716, %v3884
          %3886 = vmatmul.bf16.gmra.mxu0 %v2919
          %v3887 = vpop.f32.mrf.mxu0
          %v3888 = vadd.f32 %v3719, %v3887
          %v3889 = vpop.f32.mrf.mxu0
          %v3890 = vadd.f32 %v3721, %v3889
          %3891 = vmatmul.bf16.gmra.mxu0 %v2923
          %v3892 = vpop.f32.mrf.mxu0
          %v3893 = vadd.f32 %v3724, %v3892
          %v3894 = vpop.f32.mrf.mxu0
          %v3895 = vadd.f32 %v3726, %v3894
          %3896 = vmatmul.bf16.gmra.mxu0 %v2927
          %v3897 = vpop.f32.mrf.mxu0
          %v3898 = vadd.f32 %v3729, %v3897
          %v3899 = vpop.f32.mrf.mxu0
          %v3900 = vadd.f32 %v3731, %v3899
          %3901 = vmatmul.bf16.gmra.mxu0 %v2931
          %v3902 = vpop.f32.mrf.mxu0
          %v3903 = vadd.f32 %v3734, %v3902
          %v3904 = vpop.f32.mrf.mxu0
          %v3905 = vadd.f32 %v3736, %v3904
          %3906 = vmatmul.bf16.gmra.mxu0 %v2935
          %v3907 = vpop.f32.mrf.mxu0
          %v3908 = vadd.f32 %v3739, %v3907
          %v3909 = vpop.f32.mrf.mxu0
          %v3910 = vadd.f32 %v3741, %v3909
          %3911 = vmatmul.bf16.gmra.mxu0 %v2939
          %v3912 = vpop.f32.mrf.mxu0
          %v3913 = vadd.f32 %v3744, %v3912
          %v3914 = vpop.f32.mrf.mxu0
          %v3915 = vadd.f32 %v3746, %v3914
          %3916 = vmatmul.bf16.gmra.mxu0 %v2943
          %v3917 = vpop.f32.mrf.mxu0
          %v3918 = vadd.f32 %v3749, %v3917
          %v3919 = vpop.f32.mrf.mxu0
          %v3920 = vadd.f32 %v3751, %v3919
          %3921 = vmatmul.bf16.gmra.mxu0 %v2947
          %v3922 = vpop.f32.mrf.mxu0
          %v3923 = vadd.f32 %v3754, %v3922
          %v3924 = vpop.f32.mrf.mxu0
          %v3925 = vadd.f32 %v3756, %v3924
          %3926 = vmatmul.bf16.gmra.mxu0 %v2951
          %v3927 = vpop.f32.mrf.mxu0
          %v3928 = vadd.f32 %v3759, %v3927
          %v3929 = vpop.f32.mrf.mxu0
          %v3930 = vadd.f32 %v3761, %v3929
          %3931 = vmatmul.bf16.gmra.mxu0 %v2955
          %v3932 = vpop.f32.mrf.mxu0
          %v3933 = vadd.f32 %v3764, %v3932
          %v3934 = vpop.f32.mrf.mxu0
          %v3935 = vadd.f32 %v3766, %v3934
          %3936 = vmatmul.bf16.gmra.mxu0 %v2959
          %v3937 = vpop.f32.mrf.mxu0
          %v3938 = vadd.f32 %v3769, %v3937
          %v3939 = vpop.f32.mrf.mxu0
          %v3940 = vadd.f32 %v3771, %v3939
          %3941 = vmatmul.bf16.gmra.mxu0 %v2963
          %v3942 = vpop.f32.mrf.mxu0
          %v3943 = vadd.f32 %v3774, %v3942
          %v3944 = vpop.f32.mrf.mxu0
          %v3945 = vadd.f32 %v3776, %v3944
          %3946 = vmatmul.bf16.gmra.mxu0 %v2967
          %v3947 = vpop.f32.mrf.mxu0
          %v3948 = vadd.f32 %v3779, %v3947
          %v3949 = vpop.f32.mrf.mxu0
          %v3950 = vadd.f32 %v3781, %v3949
          %3951 = vmatmul.bf16.gmra.mxu0 %v2971
          %v3952 = vpop.f32.mrf.mxu0
          %v3953 = vadd.f32 %v3784, %v3952
          %v3954 = vpop.f32.mrf.mxu0
          %v3955 = vadd.f32 %v3786, %v3954
          %3956 = vmatmul.bf16.gmra.mxu0 %v2975
          %v3957 = vpop.f32.mrf.mxu0
          %v3958 = vadd.f32 %v3789, %v3957
          %v3959 = vpop.f32.mrf.mxu0
          %v3960 = vadd.f32 %v3791, %v3959
          %3961 = vmatmul.bf16.gmra.mxu0 %v2979
          %v3962 = vpop.f32.mrf.mxu0
          %v3963 = vadd.f32 %v3794, %v3962
          %v3964 = vpop.f32.mrf.mxu0
          %v3965 = vadd.f32 %v3796, %v3964
          %3966 = vmatmul.bf16.gmra.mxu0 %v2983
          %v3967 = vpop.f32.mrf.mxu0
          %v3968 = vadd.f32 %v3799, %v3967
          %v3969 = vpop.f32.mrf.mxu0
          %v3970 = vadd.f32 %v3801, %v3969
          %3971 = vmatmul.bf16.gmra.mxu0 %v2987
          %v3972 = vpop.f32.mrf.mxu0
          %v3973 = vadd.f32 %v3804, %v3972
          %v3974 = vpop.f32.mrf.mxu0
          %v3975 = vadd.f32 %v3806, %v3974
          %3976 = vmatmul.bf16.gmra.mxu0 %v2991
          %v3977 = vpop.f32.mrf.mxu0
          %v3978 = vadd.f32 %v3809, %v3977
          %v3979 = vpop.f32.mrf.mxu0
          %v3980 = vadd.f32 %v3811, %v3979
          %3981 = vmatmul.bf16.gmra.mxu0 %v2995
          %v3982 = vpop.f32.mrf.mxu0
          %v3983 = vadd.f32 %v3814, %v3982
          %v3984 = vpop.f32.mrf.mxu0
          %v3985 = vadd.f32 %v3816, %v3984
          %3986 = vmatmul.bf16.gmra.mxu0 %v2999
          %v3987 = vpop.f32.mrf.mxu0
          %v3988 = vadd.f32 %v3819, %v3987
          %v3989 = vpop.f32.mrf.mxu0
          %v3990 = vadd.f32 %v3821, %v3989
          %3991 = vmatmul.bf16.gmra.mxu0 %v3003
          %v3992 = vpop.f32.mrf.mxu0
          %v3993 = vadd.f32 %v3824, %v3992
          %v3994 = vpop.f32.mrf.mxu0
          %v3995 = vadd.f32 %v3826, %v3994
          %3996 = vmatmul.bf16.gmra.mxu0 %v3007
          %v3997 = vpop.f32.mrf.mxu0
          %v3998 = vadd.f32 %v3829, %v3997
          %v3999 = vpop.f32.mrf.mxu0
          %v4000 = vadd.f32 %v3831, %v3999
          %4001 = vmatmul.bf16.gmra.mxu0 %v3011
          %v4002 = vpop.f32.mrf.mxu0
          %v4003 = vadd.f32 %v3834, %v4002
          %v4004 = vpop.f32.mrf.mxu0
          %v4005 = vadd.f32 %v3836, %v4004
          %4006 = vmatmul.bf16.gmra.mxu0 %v3015
          %v4007 = vpop.f32.mrf.mxu0
          %v4008 = vadd.f32 %v3839, %v4007
          %v4009 = vpop.f32.mrf.mxu0
          %v4010 = vadd.f32 %v3841, %v4009
          %4011 = vdwg.mxu0
          %4012 = vst [vmem:[#allocation9] sm:$0xff] %v3853
          %4013 = vst [vmem:[#allocation9 + $0x8] sm:$0xff] %v3855
          %4014 = vst [vmem:[#allocation9 + $0x10] sm:$0xff] %v3858
          %4015 = vst [vmem:[#allocation9 + $0x18] sm:$0xff] %v3860
          %4016 = vst [vmem:[#allocation9 + $0x20] sm:$0xff] %v3863
          %4017 = vst [vmem:[#allocation9 + $0x28] sm:$0xff] %v3865
          %4018 = vst [vmem:[#allocation9 + $0x30] sm:$0xff] %v3868
          %4019 = vst [vmem:[#allocation9 + $0x38] sm:$0xff] %v3870
          %4020 = vst [vmem:[#allocation9 + $0x40] sm:$0xff] %v3873
          %4021 = vst [vmem:[#allocation9 + $0x48] sm:$0xff] %v3875
          %4022 = vst [vmem:[#allocation9 + $0x50] sm:$0xff] %v3878
          %4023 = vst [vmem:[#allocation9 + $0x58] sm:$0xff] %v3880
          %4024 = vst [vmem:[#allocation9 + $0x60] sm:$0xff] %v3883
          %4025 = vst [vmem:[#allocation9 + $0x68] sm:$0xff] %v3885
          %4026 = vst [vmem:[#allocation9 + $0x70] sm:$0xff] %v3888
          %4027 = vst [vmem:[#allocation9 + $0x78] sm:$0xff] %v3890
          %4028 = vst [vmem:[#allocation9 + $0x80] sm:$0xff] %v3893
          %4029 = vst [vmem:[#allocation9 + $0x88] sm:$0xff] %v3895
          %4030 = vst [vmem:[#allocation9 + $0x90] sm:$0xff] %v3898
          %4031 = vst [vmem:[#allocation9 + $0x98] sm:$0xff] %v3900
          %4032 = vst [vmem:[#allocation9 + $0xa0] sm:$0xff] %v3903
          %4033 = vst [vmem:[#allocation9 + $0xa8] sm:$0xff] %v3905
          %4034 = vst [vmem:[#allocation9 + $0xb0] sm:$0xff] %v3908
          %4035 = vst [vmem:[#allocation9 + $0xb8] sm:$0xff] %v3910
          %4036 = vst [vmem:[#allocation9 + $0xc0] sm:$0xff] %v3913
          %4037 = vst [vmem:[#allocation9 + $0xc8] sm:$0xff] %v3915
          %4038 = vst [vmem:[#allocation9 + $0xd0] sm:$0xff] %v3918
          %4039 = vst [vmem:[#allocation9 + $0xd8] sm:$0xff] %v3920
          %4040 = vst [vmem:[#allocation9 + $0xe0] sm:$0xff] %v3923
          %4041 = vst [vmem:[#allocation9 + $0xe8] sm:$0xff] %v3925
          %4042 = vst [vmem:[#allocation9 + $0xf0] sm:$0xff] %v3928
          %4043 = vst [vmem:[#allocation9 + $0xf8] sm:$0xff] %v3930
          %4044 = vst [vmem:[#allocation9 + $0x100] sm:$0xff] %v3933
          %4045 = vst [vmem:[#allocation9 + $0x108] sm:$0xff] %v3935
          %4046 = vst [vmem:[#allocation9 + $0x110] sm:$0xff] %v3938
          %4047 = vst [vmem:[#allocation9 + $0x118] sm:$0xff] %v3940
          %4048 = vst [vmem:[#allocation9 + $0x120] sm:$0xff] %v3943
          %4049 = vst [vmem:[#allocation9 + $0x128] sm:$0xff] %v3945
          %4050 = vst [vmem:[#allocation9 + $0x130] sm:$0xff] %v3948
          %4051 = vst [vmem:[#allocation9 + $0x138] sm:$0xff] %v3950
          %4052 = vst [vmem:[#allocation9 + $0x140] sm:$0xff] %v3953
          %4053 = vst [vmem:[#allocation9 + $0x148] sm:$0xff] %v3955
          %4054 = vst [vmem:[#allocation9 + $0x150] sm:$0xff] %v3958
          %4055 = vst [vmem:[#allocation9 + $0x158] sm:$0xff] %v3960
          %4056 = vst [vmem:[#allocation9 + $0x160] sm:$0xff] %v3963
          %4057 = vst [vmem:[#allocation9 + $0x168] sm:$0xff] %v3965
          %4058 = vst [vmem:[#allocation9 + $0x170] sm:$0xff] %v3968
          %4059 = vst [vmem:[#allocation9 + $0x178] sm:$0xff] %v3970
          %4060 = vst [vmem:[#allocation9 + $0x180] sm:$0xff] %v3973
          %4061 = vst [vmem:[#allocation9 + $0x188] sm:$0xff] %v3975
          %4062 = vst [vmem:[#allocation9 + $0x190] sm:$0xff] %v3978
          %4063 = vst [vmem:[#allocation9 + $0x198] sm:$0xff] %v3980
          %4064 = vst [vmem:[#allocation9 + $0x1a0] sm:$0xff] %v3983
          %4065 = vst [vmem:[#allocation9 + $0x1a8] sm:$0xff] %v3985
          %4066 = vst [vmem:[#allocation9 + $0x1b0] sm:$0xff] %v3988
          %4067 = vst [vmem:[#allocation9 + $0x1b8] sm:$0xff] %v3990
          %4068 = vst [vmem:[#allocation9 + $0x1c0] sm:$0xff] %v3993
          %4069 = vst [vmem:[#allocation9 + $0x1c8] sm:$0xff] %v3995
          %4070 = vst [vmem:[#allocation9 + $0x1d0] sm:$0xff] %v3998
          %4071 = vst [vmem:[#allocation9 + $0x1d8] sm:$0xff] %v4000
          %4072 = vst [vmem:[#allocation9 + $0x1e0] sm:$0xff] %v4003
          %4073 = vst [vmem:[#allocation9 + $0x1e8] sm:$0xff] %v4005
          %4074 = vst [vmem:[#allocation9 + $0x1f0] sm:$0xff] %v4008
          %4075 = vst [vmem:[#allocation9 + $0x1f8] sm:$0xff] %v4010
        $region60: #{tpu_custom_call.1} parent=39 // pred_fallthru
          _
        // Predicated region
        $region61: #{tpu_custom_call.1} parent=39 // pred_check
          %p4076 = pneg %p154
        $region62: #{tpu_custom_call.1} parent=39 // pred_check_branch
          %4078 = sbr.rel (%p4076) target = $region64
        $region63: #{tpu_custom_call.1} parent=39 // pred_region
          %s4079 = smul.u32 64, %s24
          %4081 = vsyncadd [#allocation5], 0
          %s4082 = smul.addr %s4079, 8
          %s4083 = scalar_lea.hbm %s5, %s4082
          %s4084 = sshll.u32 [#allocation9], 4
          %s4085 = int_to_ptr.vmem [resolvable:$true] %s4084
          %s4086 = sshll.u32 %s4083, 4
          %s4087 = int_to_ptr.hbm [resolvable:$true] %s4086
          %4092 = dma.vmem_to_hbm [thread:$0]  %s4085, 8192, %s4087, [#allocation5], 128, 128, 8
        $region64: #{tpu_custom_call.1} parent=39 // pred_fallthru
          _
        // Predicated region
        $region65: #{tpu_custom_call.1} parent=39 // pred_check
          %p4093 = pneg %p154
        $region66: #{tpu_custom_call.1} parent=39 // pred_check_branch
          %4095 = sbr.rel (%p4093) target = $region68
        $region67: #{tpu_custom_call.1} parent=39 // pred_region
          %4097 = dma.done [#allocation5], 8192
        $region68: #{tpu_custom_call.1} parent=39 // pred_fallthru
          _
      $region40: #{tpu_custom_call.1} parent=5 // pred_fallthru
        _
      %p4098 = scmp.le.s32.totalorder 2, %s14
      // Predicated region
      $region69: #{tpu_custom_call.1} parent=5 // pred_check
        %p4099 = pneg %p4098
      $region70: #{tpu_custom_call.1} parent=5 // pred_check_branch
        %4101 = sbr.rel (%p4099) target = $region72
      $region71: #{tpu_custom_call.1} parent=5 // pred_region
        %s4102 = ssub.s32 %s14, 2
      $region72: #{tpu_custom_call.1} parent=5 // pred_fallthru
        _
    $region6: #{tpu_custom_call.1} parent=1 // loop_footer
      %s18 = sadd.s32 1, %s14
    $region7: #{tpu_custom_call.1} parent=1 // loop_footer_branch
      %13 = sbr.rel target = $region3
    $region8: #{tpu_custom_call.1} parent=1 // loop_exit
      _
    %4103 = vsyncpa [#allocation4], 1
    %s4104 = scalar_lea.sflag [#allocation4], 1
    %4105 = vsyncpa %s4104, 1
    %4106 = vsyncpa [#allocation7], 1
    %4107 = vsyncpa [#allocation5], 1
    %s4108 = scalar_lea.sflag [#allocation5], 1
    %4109 = vsyncpa %s4108, 1

</llo_original>
